<compile_context>
chip_gen: v7x
topology: tpu7x:2x2x1
jax: 0.10.0
libtpu: 0.0.40
codegen_flags: <defaults>
</compile_context>

<pallas_src>
import functools

import jax
import jax.numpy as jnp
from jax.experimental import pallas as pl
from jax.experimental.pallas import tpu as pltpu


def _round_up(x, m):
    return (x + m - 1) // m * m


# ------------------------------ fused model kernel -----------------------------
def fused_gru_kernel(x_ref, wih0_ref, wihr_ref, whh_ref, bih_ref, bhn_ref,
                     wfc_ref, bfc_ref, out_ref,
                     h_scratch, seq_buf, gi_buf, *, seq_len, num_layers):
    c = pl.program_id(1)                  # time-chunk index (serial axis)
    num_chunks = pl.num_programs(1)

    @pl.when(c == 0)
    def _init():
        h_scratch[...] = jnp.zeros_like(h_scratch)

    Tc, Bt, Ipad = x_ref.shape            # block shape (time chunk, batch tile, padded in)
    D = h_scratch.shape[-1]               # padded hidden width (multiple of 128)

    for l in range(num_layers):
        # ---- hoisted input projection for the whole chunk: bf16 MXU, f32 acc ----
        if l == 0:
            lin = x_ref[...].reshape(Tc * Bt, Ipad).astype(jnp.bfloat16)
            w_in = wih0_ref[...]                          # (Ipad, 3D) bf16
        else:
            lin = seq_buf[...].reshape(Tc * Bt, D).astype(jnp.bfloat16)
            w_in = wihr_ref[l - 1]                        # (D, 3D) bf16
        # Staged in VMEM scratch so the unrolled tt loop doesn't hold it in vregs.
        gi_buf[...] = (
            jnp.dot(lin, w_in, preferred_element_type=jnp.float32) + bih_ref[l]
        ).reshape(Tc, Bt, 3 * D)

        # b_hn stays on the recurrent side (multiplied by r); broadcast hoisted.
        b_hn = jnp.broadcast_to(bhn_ref[l], (Bt, D))

        # ---- serial recurrence over the chunk: only h @ W_hh per timestep ----
        h = h_scratch[l]                                  # (Bt, D) f32
        for tt in range(Tc):
            gh = jnp.dot(h.astype(jnp.bfloat16), whh_ref[l],
                         preferred_element_type=jnp.float32)     # (Bt, 3D) f32
            gi_t = gi_buf[tt]                                    # (Bt, 3D) f32
            # D multiple of 128 -> gate slices are lane-aligned (free views).
            r = jax.nn.sigmoid(gi_t[:, :D] + gh[:, :D])
            z = jax.nn.sigmoid(gi_t[:, D:2 * D] + gh[:, D:2 * D])
            n = jnp.tanh(gi_t[:, 2 * D:] + r * (gh[:, 2 * D:] + b_hn))
            h_new = (1.0 - z) * n + z * h
            if seq_len % Tc != 0:
                # Only needed when T was padded up to a multiple of the chunk.
                valid = (c * Tc + tt) < seq_len
                h_new = jnp.where(valid, h_new, h)
            h = h_new
            if l < num_layers - 1:
                seq_buf[tt] = h          # feeds layer l+1 (stays in VMEM)
        h_scratch[l] = h

    # ---- FC head fused at the last chunk: VPU mul + lane reduction ----
    @pl.when(c == num_chunks - 1)
    def _head():
        h_last = h_scratch[num_layers - 1]                # (Bt, D)
        out_ref[...] = (jnp.sum(h_last * wfc_ref[...], axis=-1, keepdims=True)
                        + bfc_ref[...])


# -------------------------- parameter packing (padded) -------------------------
def _pack_gate_w(w, hidden, in_dim, in_pad, D):
    """PyTorch (3H, in) -> transposed, per-gate zero-padded (in_pad, 3D), bf16."""
    H = hidden
    w = jnp.transpose(w.reshape(3, H, in_dim), (2, 0, 1))          # (in, 3, H)
    w = jnp.pad(w, ((0, in_pad - in_dim), (0, 0), (0, D - H)))
    return w.reshape(in_pad, 3 * D).astype(jnp.bfloat16)


def _pack_biases(b_ih, b_hh, hidden, D):
    """Fold b_hr/b_hz into the input-side bias; b_hn stays on the h side."""
    H = hidden
    bi = b_ih.reshape(3, H)
    bh = b_hh.reshape(3, H)
    bi_fold = jnp.stack([bi[0] + bh[0], bi[1] + bh[1], bi[2]])
    bi_fold = jnp.pad(bi_fold, ((0, 0), (0, D - H))).reshape(1, 3 * D)
    b_hn = jnp.pad(bh[2:3], ((0, 0), (0, D - H)))                  # (1, D)
    return bi_fold.astype(jnp.float32), b_hn.astype(jnp.float32)


def _const_spec(shape):
    """Constant-index input: never re-fetched -> single-buffer (halves VMEM)."""
    zeros = (0,) * len(shape)
    return pl.BlockSpec(shape, lambda b, c: zeros, pipeline_mode=pl.Buffered(1))


# ---------------------------------- forward ------------------------------------
@jax.jit
def gru_model_forward(x, gru_params, fc_params):
    """x: (B, T, input_size), batch_first like the PyTorch module. Returns (B,)."""
    B, T, I = x.shape
    H = fc_params["w"].shape[1]
    L = len(gru_params)

    D = _round_up(H, 128)                # hidden / gate-block width (lane-dense)
    I_pad = _round_up(I, 128)            # layer-0 input width, decoupled from D
    # Batch tile: bigger Bt fills the MXU better (raise toward 256 on v6e/v7x
    # when B and VMEM allow; keep nb>=2 on v7x to feed both TensorCores).
    Bt = min(_round_up(B, 8), 128)
    B_pad = _round_up(B, Bt)
    Tc = min(T, 32)                      # timesteps per grid step (gi lives in scratch)
    T_pad = _round_up(T, Tc)

    # time-major, padded input (kept f32; cast to bf16 at the MXU inside the kernel)
    xt = jnp.transpose(x, (1, 0, 2)).astype(jnp.float32)
    xt = jnp.pad(xt, ((0, T_pad - T), (0, B_pad - B), (0, I_pad - I)))

    wih0 = _pack_gate_w(gru_params[0]["w_ih"], H, I, I_pad, D)       # (I_pad, 3D)
    if L > 1:
        wihr = jnp.stack([_pack_gate_w(p["w_ih"], H, H, D, D)
                          for p in gru_params[1:]])                  # (L-1, D, 3D)
    else:
        wihr = jnp.zeros((1, D, 3 * D), jnp.bfloat16)                # unused placeholder
    whh = jnp.stack([_pack_gate_w(p["w_hh"], H, H, D, D)
                     for p in gru_params])                           # (L, D, 3D)
    packed_b = [_pack_biases(p["b_ih"], p["b_hh"], H, D) for p in gru_params]
    bih = jnp.stack([pb[0] for pb in packed_b])                      # (L, 1, 3D)
    bhn = jnp.stack([pb[1] for pb in packed_b])                      # (L, 1, D)

    wfc = jnp.pad(fc_params["w"].astype(jnp.float32), ((0, 0), (0, D - H)))  # (1, D)
    bfc = fc_params["b"].reshape(1, 1).astype(jnp.float32)                   # (1, 1)

    nb, nc = B_pad // Bt, T_pad // Tc
    Lr = max(L - 1, 1)

    out = pl.pallas_call(
        functools.partial(fused_gru_kernel, seq_len=T, num_layers=L),
        out_shape=jax.ShapeDtypeStruct((B_pad, 1), jnp.float32),
        grid_spec=pltpu.PrefetchScalarGridSpec(
            num_scalar_prefetch=0,
            grid=(nb, nc),
            in_specs=[
                pl.BlockSpec((Tc, Bt, I_pad), lambda b, c: (c, b, 0)),  # x chunk (pipelined)
                _const_spec((I_pad, 3 * D)),      # layer-0 W_ih (bf16, single-buffer)
                _const_spec((Lr, D, 3 * D)),      # W_ih layers 1..L-1
                _const_spec((L, D, 3 * D)),       # W_hh
                _const_spec((L, 1, 3 * D)),       # folded b_ih (+ b_hr, b_hz)
                _const_spec((L, 1, D)),           # b_hn (recurrent side)
                _const_spec((1, D)),              # fc weight
                _const_spec((1, 1)),              # fc bias
            ],
            out_specs=pl.BlockSpec((Bt, 1), lambda b, c: (b, 0)),
            scratch_shapes=[
                pltpu.VMEM((L, Bt, D), jnp.float32),       # per-layer hidden state
                pltpu.VMEM((Tc, Bt, D), jnp.float32),      # layer-l chunk outputs
                pltpu.VMEM((Tc, Bt, 3 * D), jnp.float32),  # staged chunk projection gi
            ],
        ),
        compiler_params=pltpu.CompilerParams(
            dimension_semantics=("parallel", "arbitrary")),
    )(xt, wih0, wihr, whh, bih, bhn, wfc, bfc)

    return out[:B, 0]                    # matches out.squeeze() for (B, 1)


# ------------------------------- init & reference -------------------------------
def init_params(key, input_size, hidden_size, num_layers):
    params = []
    k = 1.0 / jnp.sqrt(hidden_size)
    for layer in range(num_layers):
        in_sz = input_size if layer == 0 else hidden_size
        key, k1, k2, k3, k4 = jax.random.split(key, 5)
        params.append(dict(
            w_ih=jax.random.uniform(k1, (3 * hidden_size, in_sz), jnp.float32, -k, k),
            w_hh=jax.random.uniform(k2, (3 * hidden_size, hidden_size), jnp.float32, -k, k),
            b_ih=jax.random.uniform(k3, (3 * hidden_size,), jnp.float32, -k, k),
            b_hh=jax.random.uniform(k4, (3 * hidden_size,), jnp.float32, -k, k),
        ))
    key, k5, k6 = jax.random.split(key, 3)
    fc = dict(
        w=jax.random.uniform(k5, (1, hidden_size), jnp.float32, -k, k),
        b=jax.random.uniform(k6, (1,), jnp.float32, -k, k),
    )
    return params, fc


def gru_reference(x, gru_params, fc_params):
    """Pure-JAX reference with PyTorch GRU semantics (inference; no dropout)."""
    h_seq = x.astype(jnp.float32)
    B, T, _ = h_seq.shape
    for p in gru_params:
        H = p["w_hh"].shape[1]
        h = jnp.zeros((B, H), jnp.float32)
        outs = []
        for t in range(T):
            x_t = h_seq[:, t, :]
            gi = x_t @ p["w_ih"].T + p["b_ih"]
            gh = h @ p["w_hh"].T + p["b_hh"]
            i_r, i_z, i_n = jnp.split(gi, 3, axis=1)
            h_r, h_z, h_n = jnp.split(gh, 3, axis=1)
            r = jax.nn.sigmoid(i_r + h_r)
            z = jax.nn.sigmoid(i_z + h_z)
            n = jnp.tanh(i_n + r * h_n)
            h = (1.0 - z) * n + z * h
            outs.append(h)
        h_seq = jnp.stack(outs, axis=1)
    out = h_seq[:, -1, :] @ fc_params["w"].T + fc_params["b"]
    return jnp.squeeze(out, axis=-1)


if __name__ == "__main__":
    B, T, INPUT_SIZE, HIDDEN, NUM_LAYERS = 2, 8, 4, 32, 2

    key = jax.random.PRNGKey(0)
    key, kx = jax.random.split(key)
    x = jax.random.normal(kx, (B, T, INPUT_SIZE), jnp.float32)

    gru_params, fc_params = init_params(key, INPUT_SIZE, HIDDEN, NUM_LAYERS)

    # TODO(synk): nn.GRU inter-layer dropout is training-only; inference forward omits it.
    out = gru_model_forward(x, gru_params, fc_params)
    jax.block_until_ready(out)
    assert out.shape == (B,), out.shape

    ref = gru_reference(x, gru_params, fc_params)
    max_err = float(jnp.max(jnp.abs(out - ref)))
    # bf16 MXU operands (weights + LHS) widen the tolerance slightly vs pure f32.
    assert max_err < 3e-2, f"mismatch vs reference: {max_err}"

    print("KERNEL_OK")
</pallas_src>

<mosaic_0001>
module attributes {stable_mosaic.version = 11 : i64} {
  func.func @fused_gru_kernel(%arg0: i32, %arg1: i32, %arg2: memref<8x8x128xf32, #tpu.memory_space<vmem>>, %arg3: memref<128x384xbf16, #tpu.memory_space<vmem>>, %arg4: memref<1x128x384xbf16, #tpu.memory_space<vmem>>, %arg5: memref<2x128x384xbf16, #tpu.memory_space<vmem>>, %arg6: memref<2x1x384xf32, #tpu.memory_space<vmem>>, %arg7: memref<2x1x128xf32, #tpu.memory_space<vmem>>, %arg8: memref<1x128xf32, #tpu.memory_space<vmem>>, %arg9: memref<1x1xf32, #tpu.memory_space<vmem>>, %arg10: memref<8x1xf32, #tpu.memory_space<vmem>>, %arg11: memref<2x8x128xf32, #tpu.memory_space<vmem>>, %arg12: memref<8x8x128xf32, #tpu.memory_space<vmem>>, %arg13: memref<8x8x384xf32, #tpu.memory_space<vmem>>) attributes {dimension_semantics = [#tpu.dimension_semantics<parallel>, #tpu.dimension_semantics<arbitrary>], iteration_bounds = array<i64: 1, 1>, scalar_prefetch = 0 : i64, scratch_operands = 3 : i64, tpu.core_type = #tpu.core_type<tc>, window_params = [{transform_indices = @transform_0, window_bounds = array<i64: 8, 8, 128>}, {pipeline_mode = #tpu.pipeline_mode<synchronous>, transform_indices = @transform_1, window_bounds = array<i64: 128, 384>}, {pipeline_mode = #tpu.pipeline_mode<synchronous>, transform_indices = @transform_2, window_bounds = array<i64: 1, 128, 384>}, {pipeline_mode = #tpu.pipeline_mode<synchronous>, transform_indices = @transform_3, window_bounds = array<i64: 2, 128, 384>}, {pipeline_mode = #tpu.pipeline_mode<synchronous>, transform_indices = @transform_4, window_bounds = array<i64: 2, 1, 384>}, {pipeline_mode = #tpu.pipeline_mode<synchronous>, transform_indices = @transform_5, window_bounds = array<i64: 2, 1, 128>}, {pipeline_mode = #tpu.pipeline_mode<synchronous>, transform_indices = @transform_6, window_bounds = array<i64: 1, 128>}, {pipeline_mode = #tpu.pipeline_mode<synchronous>, transform_indices = @transform_7, window_bounds = array<i64: 1, 1>}, {transform_indices = @transform_8, window_bounds = array<i64: 8, 1>}]} {
    %c0_i32 = arith.constant 0 : i32
    %0 = arith.cmpi eq, %arg1, %c0_i32 : i32
    %1 = arith.extui %0 : i1 to i32
    %c0_i32_0 = arith.constant 0 : i32
    %2 = arith.cmpi ne, %1, %c0_i32_0 : i32
    scf.if %2 {
      %cst_221 = arith.constant 0.000000e+00 : f32
      %599 = vector.broadcast %cst_221 : f32 to vector<2x8x128xf32>
      %c0_222 = arith.constant 0 : index
      %c0_223 = arith.constant 0 : index
      %c0_224 = arith.constant 0 : index
      %600 = vector.load %arg11[%c0_222, %c0_223, %c0_224] : memref<2x8x128xf32, #tpu.memory_space<vmem>>, vector<2x8x128xf32>
      tpu.vector_store %arg11[%c0_222, %c0_223, %c0_224], %599 {strides = array<i32>} : memref<2x8x128xf32, #tpu.memory_space<vmem>>, vector<2x8x128xf32>,
    } else {
    }
    %c0 = arith.constant 0 : index
    %c0_1 = arith.constant 0 : index
    %c0_2 = arith.constant 0 : index
    %3 = vector.load %arg2[%c0, %c0_1, %c0_2] : memref<8x8x128xf32, #tpu.memory_space<vmem>>, vector<8x8x128xf32>
    %4 = vector.shape_cast %3 : vector<8x8x128xf32> to vector<64x128xf32>
    %5 = arith.truncf %4 : vector<64x128xf32> to vector<64x128xbf16>
    %c0_3 = arith.constant 0 : index
    %c0_4 = arith.constant 0 : index
    %6 = vector.load %arg3[%c0_3, %c0_4] : memref<128x384xbf16, #tpu.memory_space<vmem>>, vector<128x384xbf16>
    %cst = arith.constant dense<0.000000e+00> : vector<64x384xf32>
    %7 = tpu.matmul %5, %6, %cst {dimension_numbers = #tpu.dot_dimension_numbers<[1], [0], [0], [1], [0, 0, 1, 1], [], []>} : vector<64x128xbf16>, vector<128x384xbf16>, vector<64x384xf32> -> vector<64x384xf32>
    %c0_5 = arith.constant 0 : index
    %c0_6 = arith.constant 0 : index
    %c0_7 = arith.constant 0 : index
    %8 = vector.load %arg6[%c0_5, %c0_6, %c0_7] : memref<2x1x384xf32, #tpu.memory_space<vmem>>, vector<1x1x384xf32>
    %9 = vector.shape_cast %8 : vector<1x1x384xf32> to vector<1x384xf32>
    %10 = vector.broadcast %9 : vector<1x384xf32> to vector<64x384xf32>
    %11 = arith.addf %7, %10 : vector<64x384xf32>
    %12 = vector.shape_cast %11 : vector<64x384xf32> to vector<8x8x384xf32>
    %c0_8 = arith.constant 0 : index
    %c0_9 = arith.constant 0 : index
    %c0_10 = arith.constant 0 : index
    %13 = vector.load %arg13[%c0_8, %c0_9, %c0_10] : memref<8x8x384xf32, #tpu.memory_space<vmem>>, vector<8x8x384xf32>
    tpu.vector_store %arg13[%c0_8, %c0_9, %c0_10], %12 {strides = array<i32>} : memref<8x8x384xf32, #tpu.memory_space<vmem>>, vector<8x8x384xf32>,
    %c0_11 = arith.constant 0 : index
    %c0_12 = arith.constant 0 : index
    %c0_13 = arith.constant 0 : index
    %14 = vector.load %arg7[%c0_11, %c0_12, %c0_13] : memref<2x1x128xf32, #tpu.memory_space<vmem>>, vector<1x1x128xf32>
    %15 = vector.shape_cast %14 : vector<1x1x128xf32> to vector<1x128xf32>
    %16 = vector.shape_cast %15 : vector<1x128xf32> to vector<1x128xf32>
    %17 = vector.broadcast %16 : vector<1x128xf32> to vector<8x128xf32>
    %c0_14 = arith.constant 0 : index
    %c0_15 = arith.constant 0 : index
    %c0_16 = arith.constant 0 : index
    %18 = vector.load %arg11[%c0_14, %c0_15, %c0_16] : memref<2x8x128xf32, #tpu.memory_space<vmem>>, vector<1x8x128xf32>
    %19 = vector.shape_cast %18 : vector<1x8x128xf32> to vector<8x128xf32>
    %20 = arith.truncf %19 : vector<8x128xf32> to vector<8x128xbf16>
    %c0_17 = arith.constant 0 : index
    %c0_18 = arith.constant 0 : index
    %c0_19 = arith.constant 0 : index
    %21 = vector.load %arg5[%c0_17, %c0_18, %c0_19] : memref<2x128x384xbf16, #tpu.memory_space<vmem>>, vector<1x128x384xbf16>
    %22 = vector.shape_cast %21 : vector<1x128x384xbf16> to vector<128x384xbf16>
    %cst_20 = arith.constant dense<0.000000e+00> : vector<8x384xf32>
    %23 = tpu.matmul %20, %22, %cst_20 {dimension_numbers = #tpu.dot_dimension_numbers<[1], [0], [0], [1], [0, 0, 1, 1], [], []>} : vector<8x128xbf16>, vector<128x384xbf16>, vector<8x384xf32> -> vector<8x384xf32>
    %c0_21 = arith.constant 0 : index
    %c0_22 = arith.constant 0 : index
    %c0_23 = arith.constant 0 : index
    %24 = vector.load %arg13[%c0_21, %c0_22, %c0_23] : memref<8x8x384xf32, #tpu.memory_space<vmem>>, vector<1x8x384xf32>
    %25 = vector.shape_cast %24 : vector<1x8x384xf32> to vector<8x384xf32>
    %26 = vector.extract_strided_slice %25 {offsets = [0, 0], sizes = [8, 128], strides = [1, 1]} : vector<8x384xf32> to vector<8x128xf32>
    %27 = vector.extract_strided_slice %23 {offsets = [0, 0], sizes = [8, 128], strides = [1, 1]} : vector<8x384xf32> to vector<8x128xf32>
    %28 = arith.addf %26, %27 : vector<8x128xf32>
    %29 = arith.negf %28 : vector<8x128xf32>
    %30 = math.exp %29 : vector<8x128xf32>
    %cst_24 = arith.constant 1.000000e+00 : f32
    %31 = vector.broadcast %cst_24 : f32 to vector<8x128xf32>
    %32 = arith.addf %31, %30 : vector<8x128xf32>
    %33 = arith.divf %31, %32 : vector<8x128xf32>
    %34 = vector.extract_strided_slice %25 {offsets = [0, 128], sizes = [8, 128], strides = [1, 1]} : vector<8x384xf32> to vector<8x128xf32>
    %35 = vector.extract_strided_slice %23 {offsets = [0, 128], sizes = [8, 128], strides = [1, 1]} : vector<8x384xf32> to vector<8x128xf32>
    %36 = arith.addf %34, %35 : vector<8x128xf32>
    %37 = arith.negf %36 : vector<8x128xf32>
    %38 = math.exp %37 : vector<8x128xf32>
    %cst_25 = arith.constant 1.000000e+00 : f32
    %39 = vector.broadcast %cst_25 : f32 to vector<8x128xf32>
    %40 = arith.addf %39, %38 : vector<8x128xf32>
    %41 = arith.divf %39, %40 : vector<8x128xf32>
    %42 = vector.extract_strided_slice %25 {offsets = [0, 256], sizes = [8, 128], strides = [1, 1]} : vector<8x384xf32> to vector<8x128xf32>
    %43 = vector.extract_strided_slice %23 {offsets = [0, 256], sizes = [8, 128], strides = [1, 1]} : vector<8x384xf32> to vector<8x128xf32>
    %44 = arith.addf %43, %17 : vector<8x128xf32>
    %45 = arith.mulf %33, %44 : vector<8x128xf32>
    %46 = arith.addf %42, %45 : vector<8x128xf32>
    %47 = math.tanh %46 : vector<8x128xf32>
    %cst_26 = arith.constant 1.000000e+00 : f32
    %48 = vector.broadcast %cst_26 : f32 to vector<8x128xf32>
    %49 = arith.subf %48, %41 : vector<8x128xf32>
    %50 = arith.mulf %49, %47 : vector<8x128xf32>
    %51 = arith.mulf %41, %19 : vector<8x128xf32>
    %52 = arith.addf %50, %51 : vector<8x128xf32>
    %c0_27 = arith.constant 0 : index
    %c0_28 = arith.constant 0 : index
    %c0_29 = arith.constant 0 : index
    %53 = vector.load %arg12[%c0_27, %c0_28, %c0_29] : memref<8x8x128xf32, #tpu.memory_space<vmem>>, vector<1x8x128xf32>
    %54 = vector.shape_cast %53 : vector<1x8x128xf32> to vector<8x128xf32>
    %55 = vector.shape_cast %52 : vector<8x128xf32> to vector<1x8x128xf32>
    tpu.vector_store %arg12[%c0_27, %c0_28, %c0_29], %55 {strides = array<i32>} : memref<8x8x128xf32, #tpu.memory_space<vmem>>, vector<1x8x128xf32>,
    %56 = arith.truncf %52 : vector<8x128xf32> to vector<8x128xbf16>
    %c0_30 = arith.constant 0 : index
    %c0_31 = arith.constant 0 : index
    %c0_32 = arith.constant 0 : index
    %57 = vector.load %arg5[%c0_30, %c0_31, %c0_32] : memref<2x128x384xbf16, #tpu.memory_space<vmem>>, vector<1x128x384xbf16>
    %58 = vector.shape_cast %57 : vector<1x128x384xbf16> to vector<128x384xbf16>
    %cst_33 = arith.constant dense<0.000000e+00> : vector<8x384xf32>
    %59 = tpu.matmul %56, %58, %cst_33 {dimension_numbers = #tpu.dot_dimension_numbers<[1], [0], [0], [1], [0, 0, 1, 1], [], []>} : vector<8x128xbf16>, vector<128x384xbf16>, vector<8x384xf32> -> vector<8x384xf32>
    %c1 = arith.constant 1 : index
    %c0_34 = arith.constant 0 : index
    %c0_35 = arith.constant 0 : index
    %60 = vector.load %arg13[%c1, %c0_34, %c0_35] : memref<8x8x384xf32, #tpu.memory_space<vmem>>, vector<1x8x384xf32>
    %61 = vector.shape_cast %60 : vector<1x8x384xf32> to vector<8x384xf32>
    %62 = vector.extract_strided_slice %61 {offsets = [0, 0], sizes = [8, 128], strides = [1, 1]} : vector<8x384xf32> to vector<8x128xf32>
    %63 = vector.extract_strided_slice %59 {offsets = [0, 0], sizes = [8, 128], strides = [1, 1]} : vector<8x384xf32> to vector<8x128xf32>
    %64 = arith.addf %62, %63 : vector<8x128xf32>
    %65 = arith.negf %64 : vector<8x128xf32>
    %66 = math.exp %65 : vector<8x128xf32>
    %cst_36 = arith.constant 1.000000e+00 : f32
    %67 = vector.broadcast %cst_36 : f32 to vector<8x128xf32>
    %68 = arith.addf %67, %66 : vector<8x128xf32>
    %69 = arith.divf %67, %68 : vector<8x128xf32>
    %70 = vector.extract_strided_slice %61 {offsets = [0, 128], sizes = [8, 128], strides = [1, 1]} : vector<8x384xf32> to vector<8x128xf32>
    %71 = vector.extract_strided_slice %59 {offsets = [0, 128], sizes = [8, 128], strides = [1, 1]} : vector<8x384xf32> to vector<8x128xf32>
    %72 = arith.addf %70, %71 : vector<8x128xf32>
    %73 = arith.negf %72 : vector<8x128xf32>
    %74 = math.exp %73 : vector<8x128xf32>
    %cst_37 = arith.constant 1.000000e+00 : f32
    %75 = vector.broadcast %cst_37 : f32 to vector<8x128xf32>
    %76 = arith.addf %75, %74 : vector<8x128xf32>
    %77 = arith.divf %75, %76 : vector<8x128xf32>
    %78 = vector.extract_strided_slice %61 {offsets = [0, 256], sizes = [8, 128], strides = [1, 1]} : vector<8x384xf32> to vector<8x128xf32>
    %79 = vector.extract_strided_slice %59 {offsets = [0, 256], sizes = [8, 128], strides = [1, 1]} : vector<8x384xf32> to vector<8x128xf32>
    %80 = arith.addf %79, %17 : vector<8x128xf32>
    %81 = arith.mulf %69, %80 : vector<8x128xf32>
    %82 = arith.addf %78, %81 : vector<8x128xf32>
    %83 = math.tanh %82 : vector<8x128xf32>
    %cst_38 = arith.constant 1.000000e+00 : f32
    %84 = vector.broadcast %cst_38 : f32 to vector<8x128xf32>
    %85 = arith.subf %84, %77 : vector<8x128xf32>
    %86 = arith.mulf %85, %83 : vector<8x128xf32>
    %87 = arith.mulf %77, %52 : vector<8x128xf32>
    %88 = arith.addf %86, %87 : vector<8x128xf32>
    %c1_39 = arith.constant 1 : index
    %c0_40 = arith.constant 0 : index
    %c0_41 = arith.constant 0 : index
    %89 = vector.load %arg12[%c1_39, %c0_40, %c0_41] : memref<8x8x128xf32, #tpu.memory_space<vmem>>, vector<1x8x128xf32>
    %90 = vector.shape_cast %89 : vector<1x8x128xf32> to vector<8x128xf32>
    %91 = vector.shape_cast %88 : vector<8x128xf32> to vector<1x8x128xf32>
    tpu.vector_store %arg12[%c1_39, %c0_40, %c0_41], %91 {strides = array<i32>} : memref<8x8x128xf32, #tpu.memory_space<vmem>>, vector<1x8x128xf32>,
    %92 = arith.truncf %88 : vector<8x128xf32> to vector<8x128xbf16>
    %c0_42 = arith.constant 0 : index
    %c0_43 = arith.constant 0 : index
    %c0_44 = arith.constant 0 : index
    %93 = vector.load %arg5[%c0_42, %c0_43, %c0_44] : memref<2x128x384xbf16, #tpu.memory_space<vmem>>, vector<1x128x384xbf16>
    %94 = vector.shape_cast %93 : vector<1x128x384xbf16> to vector<128x384xbf16>
    %cst_45 = arith.constant dense<0.000000e+00> : vector<8x384xf32>
    %95 = tpu.matmul %92, %94, %cst_45 {dimension_numbers = #tpu.dot_dimension_numbers<[1], [0], [0], [1], [0, 0, 1, 1], [], []>} : vector<8x128xbf16>, vector<128x384xbf16>, vector<8x384xf32> -> vector<8x384xf32>
    %c2 = arith.constant 2 : index
    %c0_46 = arith.constant 0 : index
    %c0_47 = arith.constant 0 : index
    %96 = vector.load %arg13[%c2, %c0_46, %c0_47] : memref<8x8x384xf32, #tpu.memory_space<vmem>>, vector<1x8x384xf32>
    %97 = vector.shape_cast %96 : vector<1x8x384xf32> to vector<8x384xf32>
    %98 = vector.extract_strided_slice %97 {offsets = [0, 0], sizes = [8, 128], strides = [1, 1]} : vector<8x384xf32> to vector<8x128xf32>
    %99 = vector.extract_strided_slice %95 {offsets = [0, 0], sizes = [8, 128], strides = [1, 1]} : vector<8x384xf32> to vector<8x128xf32>
    %100 = arith.addf %98, %99 : vector<8x128xf32>
    %101 = arith.negf %100 : vector<8x128xf32>
    %102 = math.exp %101 : vector<8x128xf32>
    %cst_48 = arith.constant 1.000000e+00 : f32
    %103 = vector.broadcast %cst_48 : f32 to vector<8x128xf32>
    %104 = arith.addf %103, %102 : vector<8x128xf32>
    %105 = arith.divf %103, %104 : vector<8x128xf32>
    %106 = vector.extract_strided_slice %97 {offsets = [0, 128], sizes = [8, 128], strides = [1, 1]} : vector<8x384xf32> to vector<8x128xf32>
    %107 = vector.extract_strided_slice %95 {offsets = [0, 128], sizes = [8, 128], strides = [1, 1]} : vector<8x384xf32> to vector<8x128xf32>
    %108 = arith.addf %106, %107 : vector<8x128xf32>
    %109 = arith.negf %108 : vector<8x128xf32>
    %110 = math.exp %109 : vector<8x128xf32>
    %cst_49 = arith.constant 1.000000e+00 : f32
    %111 = vector.broadcast %cst_49 : f32 to vector<8x128xf32>
    %112 = arith.addf %111, %110 : vector<8x128xf32>
    %113 = arith.divf %111, %112 : vector<8x128xf32>
    %114 = vector.extract_strided_slice %97 {offsets = [0, 256], sizes = [8, 128], strides = [1, 1]} : vector<8x384xf32> to vector<8x128xf32>
    %115 = vector.extract_strided_slice %95 {offsets = [0, 256], sizes = [8, 128], strides = [1, 1]} : vector<8x384xf32> to vector<8x128xf32>
    %116 = arith.addf %115, %17 : vector<8x128xf32>
    %117 = arith.mulf %105, %116 : vector<8x128xf32>
    %118 = arith.addf %114, %117 : vector<8x128xf32>
    %119 = math.tanh %118 : vector<8x128xf32>
    %cst_50 = arith.constant 1.000000e+00 : f32
    %120 = vector.broadcast %cst_50 : f32 to vector<8x128xf32>
    %121 = arith.subf %120, %113 : vector<8x128xf32>
    %122 = arith.mulf %121, %119 : vector<8x128xf32>
    %123 = arith.mulf %113, %88 : vector<8x128xf32>
    %124 = arith.addf %122, %123 : vector<8x128xf32>
    %c2_51 = arith.constant 2 : index
    %c0_52 = arith.constant 0 : index
    %c0_53 = arith.constant 0 : index
    %125 = vector.load %arg12[%c2_51, %c0_52, %c0_53] : memref<8x8x128xf32, #tpu.memory_space<vmem>>, vector<1x8x128xf32>
    %126 = vector.shape_cast %125 : vector<1x8x128xf32> to vector<8x128xf32>
    %127 = vector.shape_cast %124 : vector<8x128xf32> to vector<1x8x128xf32>
    tpu.vector_store %arg12[%c2_51, %c0_52, %c0_53], %127 {strides = array<i32>} : memref<8x8x128xf32, #tpu.memory_space<vmem>>, vector<1x8x128xf32>,
    %128 = arith.truncf %124 : vector<8x128xf32> to vector<8x128xbf16>
    %c0_54 = arith.constant 0 : index
    %c0_55 = arith.constant 0 : index
    %c0_56 = arith.constant 0 : index
    %129 = vector.load %arg5[%c0_54, %c0_55, %c0_56] : memref<2x128x384xbf16, #tpu.memory_space<vmem>>, vector<1x128x384xbf16>
    %130 = vector.shape_cast %129 : vector<1x128x384xbf16> to vector<128x384xbf16>
    %cst_57 = arith.constant dense<0.000000e+00> : vector<8x384xf32>
    %131 = tpu.matmul %128, %130, %cst_57 {dimension_numbers = #tpu.dot_dimension_numbers<[1], [0], [0], [1], [0, 0, 1, 1], [], []>} : vector<8x128xbf16>, vector<128x384xbf16>, vector<8x384xf32> -> vector<8x384xf32>
    %c3 = arith.constant 3 : index
    %c0_58 = arith.constant 0 : index
    %c0_59 = arith.constant 0 : index
    %132 = vector.load %arg13[%c3, %c0_58, %c0_59] : memref<8x8x384xf32, #tpu.memory_space<vmem>>, vector<1x8x384xf32>
    %133 = vector.shape_cast %132 : vector<1x8x384xf32> to vector<8x384xf32>
    %134 = vector.extract_strided_slice %133 {offsets = [0, 0], sizes = [8, 128], strides = [1, 1]} : vector<8x384xf32> to vector<8x128xf32>
    %135 = vector.extract_strided_slice %131 {offsets = [0, 0], sizes = [8, 128], strides = [1, 1]} : vector<8x384xf32> to vector<8x128xf32>
    %136 = arith.addf %134, %135 : vector<8x128xf32>
    %137 = arith.negf %136 : vector<8x128xf32>
    %138 = math.exp %137 : vector<8x128xf32>
    %cst_60 = arith.constant 1.000000e+00 : f32
    %139 = vector.broadcast %cst_60 : f32 to vector<8x128xf32>
    %140 = arith.addf %139, %138 : vector<8x128xf32>
    %141 = arith.divf %139, %140 : vector<8x128xf32>
    %142 = vector.extract_strided_slice %133 {offsets = [0, 128], sizes = [8, 128], strides = [1, 1]} : vector<8x384xf32> to vector<8x128xf32>
    %143 = vector.extract_strided_slice %131 {offsets = [0, 128], sizes = [8, 128], strides = [1, 1]} : vector<8x384xf32> to vector<8x128xf32>
    %144 = arith.addf %142, %143 : vector<8x128xf32>
    %145 = arith.negf %144 : vector<8x128xf32>
    %146 = math.exp %145 : vector<8x128xf32>
    %cst_61 = arith.constant 1.000000e+00 : f32
    %147 = vector.broadcast %cst_61 : f32 to vector<8x128xf32>
    %148 = arith.addf %147, %146 : vector<8x128xf32>
    %149 = arith.divf %147, %148 : vector<8x128xf32>
    %150 = vector.extract_strided_slice %133 {offsets = [0, 256], sizes = [8, 128], strides = [1, 1]} : vector<8x384xf32> to vector<8x128xf32>
    %151 = vector.extract_strided_slice %131 {offsets = [0, 256], sizes = [8, 128], strides = [1, 1]} : vector<8x384xf32> to vector<8x128xf32>
    %152 = arith.addf %151, %17 : vector<8x128xf32>
    %153 = arith.mulf %141, %152 : vector<8x128xf32>
    %154 = arith.addf %150, %153 : vector<8x128xf32>
    %155 = math.tanh %154 : vector<8x128xf32>
    %cst_62 = arith.constant 1.000000e+00 : f32
    %156 = vector.broadcast %cst_62 : f32 to vector<8x128xf32>
    %157 = arith.subf %156, %149 : vector<8x128xf32>
    %158 = arith.mulf %157, %155 : vector<8x128xf32>
    %159 = arith.mulf %149, %124 : vector<8x128xf32>
    %160 = arith.addf %158, %159 : vector<8x128xf32>
    %c3_63 = arith.constant 3 : index
    %c0_64 = arith.constant 0 : index
    %c0_65 = arith.constant 0 : index
    %161 = vector.load %arg12[%c3_63, %c0_64, %c0_65] : memref<8x8x128xf32, #tpu.memory_space<vmem>>, vector<1x8x128xf32>
    %162 = vector.shape_cast %161 : vector<1x8x128xf32> to vector<8x128xf32>
    %163 = vector.shape_cast %160 : vector<8x128xf32> to vector<1x8x128xf32>
    tpu.vector_store %arg12[%c3_63, %c0_64, %c0_65], %163 {strides = array<i32>} : memref<8x8x128xf32, #tpu.memory_space<vmem>>, vector<1x8x128xf32>,
    %164 = arith.truncf %160 : vector<8x128xf32> to vector<8x128xbf16>
    %c0_66 = arith.constant 0 : index
    %c0_67 = arith.constant 0 : index
    %c0_68 = arith.constant 0 : index
    %165 = vector.load %arg5[%c0_66, %c0_67, %c0_68] : memref<2x128x384xbf16, #tpu.memory_space<vmem>>, vector<1x128x384xbf16>
    %166 = vector.shape_cast %165 : vector<1x128x384xbf16> to vector<128x384xbf16>
    %cst_69 = arith.constant dense<0.000000e+00> : vector<8x384xf32>
    %167 = tpu.matmul %164, %166, %cst_69 {dimension_numbers = #tpu.dot_dimension_numbers<[1], [0], [0], [1], [0, 0, 1, 1], [], []>} : vector<8x128xbf16>, vector<128x384xbf16>, vector<8x384xf32> -> vector<8x384xf32>
    %c4 = arith.constant 4 : index
    %c0_70 = arith.constant 0 : index
    %c0_71 = arith.constant 0 : index
    %168 = vector.load %arg13[%c4, %c0_70, %c0_71] : memref<8x8x384xf32, #tpu.memory_space<vmem>>, vector<1x8x384xf32>
    %169 = vector.shape_cast %168 : vector<1x8x384xf32> to vector<8x384xf32>
    %170 = vector.extract_strided_slice %169 {offsets = [0, 0], sizes = [8, 128], strides = [1, 1]} : vector<8x384xf32> to vector<8x128xf32>
    %171 = vector.extract_strided_slice %167 {offsets = [0, 0], sizes = [8, 128], strides = [1, 1]} : vector<8x384xf32> to vector<8x128xf32>
    %172 = arith.addf %170, %171 : vector<8x128xf32>
    %173 = arith.negf %172 : vector<8x128xf32>
    %174 = math.exp %173 : vector<8x128xf32>
    %cst_72 = arith.constant 1.000000e+00 : f32
    %175 = vector.broadcast %cst_72 : f32 to vector<8x128xf32>
    %176 = arith.addf %175, %174 : vector<8x128xf32>
    %177 = arith.divf %175, %176 : vector<8x128xf32>
    %178 = vector.extract_strided_slice %169 {offsets = [0, 128], sizes = [8, 128], strides = [1, 1]} : vector<8x384xf32> to vector<8x128xf32>
    %179 = vector.extract_strided_slice %167 {offsets = [0, 128], sizes = [8, 128], strides = [1, 1]} : vector<8x384xf32> to vector<8x128xf32>
    %180 = arith.addf %178, %179 : vector<8x128xf32>
    %181 = arith.negf %180 : vector<8x128xf32>
    %182 = math.exp %181 : vector<8x128xf32>
    %cst_73 = arith.constant 1.000000e+00 : f32
    %183 = vector.broadcast %cst_73 : f32 to vector<8x128xf32>
    %184 = arith.addf %183, %182 : vector<8x128xf32>
    %185 = arith.divf %183, %184 : vector<8x128xf32>
    %186 = vector.extract_strided_slice %169 {offsets = [0, 256], sizes = [8, 128], strides = [1, 1]} : vector<8x384xf32> to vector<8x128xf32>
    %187 = vector.extract_strided_slice %167 {offsets = [0, 256], sizes = [8, 128], strides = [1, 1]} : vector<8x384xf32> to vector<8x128xf32>
    %188 = arith.addf %187, %17 : vector<8x128xf32>
    %189 = arith.mulf %177, %188 : vector<8x128xf32>
    %190 = arith.addf %186, %189 : vector<8x128xf32>
    %191 = math.tanh %190 : vector<8x128xf32>
    %cst_74 = arith.constant 1.000000e+00 : f32
    %192 = vector.broadcast %cst_74 : f32 to vector<8x128xf32>
    %193 = arith.subf %192, %185 : vector<8x128xf32>
    %194 = arith.mulf %193, %191 : vector<8x128xf32>
    %195 = arith.mulf %185, %160 : vector<8x128xf32>
    %196 = arith.addf %194, %195 : vector<8x128xf32>
    %c4_75 = arith.constant 4 : index
    %c0_76 = arith.constant 0 : index
    %c0_77 = arith.constant 0 : index
    %197 = vector.load %arg12[%c4_75, %c0_76, %c0_77] : memref<8x8x128xf32, #tpu.memory_space<vmem>>, vector<1x8x128xf32>
    %198 = vector.shape_cast %197 : vector<1x8x128xf32> to vector<8x128xf32>
    %199 = vector.shape_cast %196 : vector<8x128xf32> to vector<1x8x128xf32>
    tpu.vector_store %arg12[%c4_75, %c0_76, %c0_77], %199 {strides = array<i32>} : memref<8x8x128xf32, #tpu.memory_space<vmem>>, vector<1x8x128xf32>,
    %200 = arith.truncf %196 : vector<8x128xf32> to vector<8x128xbf16>
    %c0_78 = arith.constant 0 : index
    %c0_79 = arith.constant 0 : index
    %c0_80 = arith.constant 0 : index
    %201 = vector.load %arg5[%c0_78, %c0_79, %c0_80] : memref<2x128x384xbf16, #tpu.memory_space<vmem>>, vector<1x128x384xbf16>
    %202 = vector.shape_cast %201 : vector<1x128x384xbf16> to vector<128x384xbf16>
    %cst_81 = arith.constant dense<0.000000e+00> : vector<8x384xf32>
    %203 = tpu.matmul %200, %202, %cst_81 {dimension_numbers = #tpu.dot_dimension_numbers<[1], [0], [0], [1], [0, 0, 1, 1], [], []>} : vector<8x128xbf16>, vector<128x384xbf16>, vector<8x384xf32> -> vector<8x384xf32>
    %c5 = arith.constant 5 : index
    %c0_82 = arith.constant 0 : index
    %c0_83 = arith.constant 0 : index
    %204 = vector.load %arg13[%c5, %c0_82, %c0_83] : memref<8x8x384xf32, #tpu.memory_space<vmem>>, vector<1x8x384xf32>
    %205 = vector.shape_cast %204 : vector<1x8x384xf32> to vector<8x384xf32>
    %206 = vector.extract_strided_slice %205 {offsets = [0, 0], sizes = [8, 128], strides = [1, 1]} : vector<8x384xf32> to vector<8x128xf32>
    %207 = vector.extract_strided_slice %203 {offsets = [0, 0], sizes = [8, 128], strides = [1, 1]} : vector<8x384xf32> to vector<8x128xf32>
    %208 = arith.addf %206, %207 : vector<8x128xf32>
    %209 = arith.negf %208 : vector<8x128xf32>
    %210 = math.exp %209 : vector<8x128xf32>
    %cst_84 = arith.constant 1.000000e+00 : f32
    %211 = vector.broadcast %cst_84 : f32 to vector<8x128xf32>
    %212 = arith.addf %211, %210 : vector<8x128xf32>
    %213 = arith.divf %211, %212 : vector<8x128xf32>
    %214 = vector.extract_strided_slice %205 {offsets = [0, 128], sizes = [8, 128], strides = [1, 1]} : vector<8x384xf32> to vector<8x128xf32>
    %215 = vector.extract_strided_slice %203 {offsets = [0, 128], sizes = [8, 128], strides = [1, 1]} : vector<8x384xf32> to vector<8x128xf32>
    %216 = arith.addf %214, %215 : vector<8x128xf32>
    %217 = arith.negf %216 : vector<8x128xf32>
    %218 = math.exp %217 : vector<8x128xf32>
    %cst_85 = arith.constant 1.000000e+00 : f32
    %219 = vector.broadcast %cst_85 : f32 to vector<8x128xf32>
    %220 = arith.addf %219, %218 : vector<8x128xf32>
    %221 = arith.divf %219, %220 : vector<8x128xf32>
    %222 = vector.extract_strided_slice %205 {offsets = [0, 256], sizes = [8, 128], strides = [1, 1]} : vector<8x384xf32> to vector<8x128xf32>
    %223 = vector.extract_strided_slice %203 {offsets = [0, 256], sizes = [8, 128], strides = [1, 1]} : vector<8x384xf32> to vector<8x128xf32>
    %224 = arith.addf %223, %17 : vector<8x128xf32>
    %225 = arith.mulf %213, %224 : vector<8x128xf32>
    %226 = arith.addf %222, %225 : vector<8x128xf32>
    %227 = math.tanh %226 : vector<8x128xf32>
    %cst_86 = arith.constant 1.000000e+00 : f32
    %228 = vector.broadcast %cst_86 : f32 to vector<8x128xf32>
    %229 = arith.subf %228, %221 : vector<8x128xf32>
    %230 = arith.mulf %229, %227 : vector<8x128xf32>
    %231 = arith.mulf %221, %196 : vector<8x128xf32>
    %232 = arith.addf %230, %231 : vector<8x128xf32>
    %c5_87 = arith.constant 5 : index
    %c0_88 = arith.constant 0 : index
    %c0_89 = arith.constant 0 : index
    %233 = vector.load %arg12[%c5_87, %c0_88, %c0_89] : memref<8x8x128xf32, #tpu.memory_space<vmem>>, vector<1x8x128xf32>
    %234 = vector.shape_cast %233 : vector<1x8x128xf32> to vector<8x128xf32>
    %235 = vector.shape_cast %232 : vector<8x128xf32> to vector<1x8x128xf32>
    tpu.vector_store %arg12[%c5_87, %c0_88, %c0_89], %235 {strides = array<i32>} : memref<8x8x128xf32, #tpu.memory_space<vmem>>, vector<1x8x128xf32>,
    %236 = arith.truncf %232 : vector<8x128xf32> to vector<8x128xbf16>
    %c0_90 = arith.constant 0 : index
    %c0_91 = arith.constant 0 : index
    %c0_92 = arith.constant 0 : index
    %237 = vector.load %arg5[%c0_90, %c0_91, %c0_92] : memref<2x128x384xbf16, #tpu.memory_space<vmem>>, vector<1x128x384xbf16>
    %238 = vector.shape_cast %237 : vector<1x128x384xbf16> to vector<128x384xbf16>
    %cst_93 = arith.constant dense<0.000000e+00> : vector<8x384xf32>
    %239 = tpu.matmul %236, %238, %cst_93 {dimension_numbers = #tpu.dot_dimension_numbers<[1], [0], [0], [1], [0, 0, 1, 1], [], []>} : vector<8x128xbf16>, vector<128x384xbf16>, vector<8x384xf32> -> vector<8x384xf32>
    %c6 = arith.constant 6 : index
    %c0_94 = arith.constant 0 : index
    %c0_95 = arith.constant 0 : index
    %240 = vector.load %arg13[%c6, %c0_94, %c0_95] : memref<8x8x384xf32, #tpu.memory_space<vmem>>, vector<1x8x384xf32>
    %241 = vector.shape_cast %240 : vector<1x8x384xf32> to vector<8x384xf32>
    %242 = vector.extract_strided_slice %241 {offsets = [0, 0], sizes = [8, 128], strides = [1, 1]} : vector<8x384xf32> to vector<8x128xf32>
    %243 = vector.extract_strided_slice %239 {offsets = [0, 0], sizes = [8, 128], strides = [1, 1]} : vector<8x384xf32> to vector<8x128xf32>
    %244 = arith.addf %242, %243 : vector<8x128xf32>
    %245 = arith.negf %244 : vector<8x128xf32>
    %246 = math.exp %245 : vector<8x128xf32>
    %cst_96 = arith.constant 1.000000e+00 : f32
    %247 = vector.broadcast %cst_96 : f32 to vector<8x128xf32>
    %248 = arith.addf %247, %246 : vector<8x128xf32>
    %249 = arith.divf %247, %248 : vector<8x128xf32>
    %250 = vector.extract_strided_slice %241 {offsets = [0, 128], sizes = [8, 128], strides = [1, 1]} : vector<8x384xf32> to vector<8x128xf32>
    %251 = vector.extract_strided_slice %239 {offsets = [0, 128], sizes = [8, 128], strides = [1, 1]} : vector<8x384xf32> to vector<8x128xf32>
    %252 = arith.addf %250, %251 : vector<8x128xf32>
    %253 = arith.negf %252 : vector<8x128xf32>
    %254 = math.exp %253 : vector<8x128xf32>
    %cst_97 = arith.constant 1.000000e+00 : f32
    %255 = vector.broadcast %cst_97 : f32 to vector<8x128xf32>
    %256 = arith.addf %255, %254 : vector<8x128xf32>
    %257 = arith.divf %255, %256 : vector<8x128xf32>
    %258 = vector.extract_strided_slice %241 {offsets = [0, 256], sizes = [8, 128], strides = [1, 1]} : vector<8x384xf32> to vector<8x128xf32>
    %259 = vector.extract_strided_slice %239 {offsets = [0, 256], sizes = [8, 128], strides = [1, 1]} : vector<8x384xf32> to vector<8x128xf32>
    %260 = arith.addf %259, %17 : vector<8x128xf32>
    %261 = arith.mulf %249, %260 : vector<8x128xf32>
    %262 = arith.addf %258, %261 : vector<8x128xf32>
    %263 = math.tanh %262 : vector<8x128xf32>
    %cst_98 = arith.constant 1.000000e+00 : f32
    %264 = vector.broadcast %cst_98 : f32 to vector<8x128xf32>
    %265 = arith.subf %264, %257 : vector<8x128xf32>
    %266 = arith.mulf %265, %263 : vector<8x128xf32>
    %267 = arith.mulf %257, %232 : vector<8x128xf32>
    %268 = arith.addf %266, %267 : vector<8x128xf32>
    %c6_99 = arith.constant 6 : index
    %c0_100 = arith.constant 0 : index
    %c0_101 = arith.constant 0 : index
    %269 = vector.load %arg12[%c6_99, %c0_100, %c0_101] : memref<8x8x128xf32, #tpu.memory_space<vmem>>, vector<1x8x128xf32>
    %270 = vector.shape_cast %269 : vector<1x8x128xf32> to vector<8x128xf32>
    %271 = vector.shape_cast %268 : vector<8x128xf32> to vector<1x8x128xf32>
    tpu.vector_store %arg12[%c6_99, %c0_100, %c0_101], %271 {strides = array<i32>} : memref<8x8x128xf32, #tpu.memory_space<vmem>>, vector<1x8x128xf32>,
    %272 = arith.truncf %268 : vector<8x128xf32> to vector<8x128xbf16>
    %c0_102 = arith.constant 0 : index
    %c0_103 = arith.constant 0 : index
    %c0_104 = arith.constant 0 : index
    %273 = vector.load %arg5[%c0_102, %c0_103, %c0_104] : memref<2x128x384xbf16, #tpu.memory_space<vmem>>, vector<1x128x384xbf16>
    %274 = vector.shape_cast %273 : vector<1x128x384xbf16> to vector<128x384xbf16>
    %cst_105 = arith.constant dense<0.000000e+00> : vector<8x384xf32>
    %275 = tpu.matmul %272, %274, %cst_105 {dimension_numbers = #tpu.dot_dimension_numbers<[1], [0], [0], [1], [0, 0, 1, 1], [], []>} : vector<8x128xbf16>, vector<128x384xbf16>, vector<8x384xf32> -> vector<8x384xf32>
    %c7 = arith.constant 7 : index
    %c0_106 = arith.constant 0 : index
    %c0_107 = arith.constant 0 : index
    %276 = vector.load %arg13[%c7, %c0_106, %c0_107] : memref<8x8x384xf32, #tpu.memory_space<vmem>>, vector<1x8x384xf32>
    %277 = vector.shape_cast %276 : vector<1x8x384xf32> to vector<8x384xf32>
    %278 = vector.extract_strided_slice %277 {offsets = [0, 0], sizes = [8, 128], strides = [1, 1]} : vector<8x384xf32> to vector<8x128xf32>
    %279 = vector.extract_strided_slice %275 {offsets = [0, 0], sizes = [8, 128], strides = [1, 1]} : vector<8x384xf32> to vector<8x128xf32>
    %280 = arith.addf %278, %279 : vector<8x128xf32>
    %281 = arith.negf %280 : vector<8x128xf32>
    %282 = math.exp %281 : vector<8x128xf32>
    %cst_108 = arith.constant 1.000000e+00 : f32
    %283 = vector.broadcast %cst_108 : f32 to vector<8x128xf32>
    %284 = arith.addf %283, %282 : vector<8x128xf32>
    %285 = arith.divf %283, %284 : vector<8x128xf32>
    %286 = vector.extract_strided_slice %277 {offsets = [0, 128], sizes = [8, 128], strides = [1, 1]} : vector<8x384xf32> to vector<8x128xf32>
    %287 = vector.extract_strided_slice %275 {offsets = [0, 128], sizes = [8, 128], strides = [1, 1]} : vector<8x384xf32> to vector<8x128xf32>
    %288 = arith.addf %286, %287 : vector<8x128xf32>
    %289 = arith.negf %288 : vector<8x128xf32>
    %290 = math.exp %289 : vector<8x128xf32>
    %cst_109 = arith.constant 1.000000e+00 : f32
    %291 = vector.broadcast %cst_109 : f32 to vector<8x128xf32>
    %292 = arith.addf %291, %290 : vector<8x128xf32>
    %293 = arith.divf %291, %292 : vector<8x128xf32>
    %294 = vector.extract_strided_slice %277 {offsets = [0, 256], sizes = [8, 128], strides = [1, 1]} : vector<8x384xf32> to vector<8x128xf32>
    %295 = vector.extract_strided_slice %275 {offsets = [0, 256], sizes = [8, 128], strides = [1, 1]} : vector<8x384xf32> to vector<8x128xf32>
    %296 = arith.addf %295, %17 : vector<8x128xf32>
    %297 = arith.mulf %285, %296 : vector<8x128xf32>
    %298 = arith.addf %294, %297 : vector<8x128xf32>
    %299 = math.tanh %298 : vector<8x128xf32>
    %cst_110 = arith.constant 1.000000e+00 : f32
    %300 = vector.broadcast %cst_110 : f32 to vector<8x128xf32>
    %301 = arith.subf %300, %293 : vector<8x128xf32>
    %302 = arith.mulf %301, %299 : vector<8x128xf32>
    %303 = arith.mulf %293, %268 : vector<8x128xf32>
    %304 = arith.addf %302, %303 : vector<8x128xf32>
    %c7_111 = arith.constant 7 : index
    %c0_112 = arith.constant 0 : index
    %c0_113 = arith.constant 0 : index
    %305 = vector.load %arg12[%c7_111, %c0_112, %c0_113] : memref<8x8x128xf32, #tpu.memory_space<vmem>>, vector<1x8x128xf32>
    %306 = vector.shape_cast %305 : vector<1x8x128xf32> to vector<8x128xf32>
    %307 = vector.shape_cast %304 : vector<8x128xf32> to vector<1x8x128xf32>
    tpu.vector_store %arg12[%c7_111, %c0_112, %c0_113], %307 {strides = array<i32>} : memref<8x8x128xf32, #tpu.memory_space<vmem>>, vector<1x8x128xf32>,
    %c0_114 = arith.constant 0 : index
    %c0_115 = arith.constant 0 : index
    %c0_116 = arith.constant 0 : index
    %308 = vector.load %arg11[%c0_114, %c0_115, %c0_116] : memref<2x8x128xf32, #tpu.memory_space<vmem>>, vector<1x8x128xf32>
    %309 = vector.shape_cast %308 : vector<1x8x128xf32> to vector<8x128xf32>
    %310 = vector.shape_cast %304 : vector<8x128xf32> to vector<1x8x128xf32>
    tpu.vector_store %arg11[%c0_114, %c0_115, %c0_116], %310 {strides = array<i32>} : memref<2x8x128xf32, #tpu.memory_space<vmem>>, vector<1x8x128xf32>,
    %c0_117 = arith.constant 0 : index
    %c0_118 = arith.constant 0 : index
    %c0_119 = arith.constant 0 : index
    %311 = vector.load %arg12[%c0_117, %c0_118, %c0_119] : memref<8x8x128xf32, #tpu.memory_space<vmem>>, vector<8x8x128xf32>
    %312 = vector.shape_cast %311 : vector<8x8x128xf32> to vector<64x128xf32>
    %313 = arith.truncf %312 : vector<64x128xf32> to vector<64x128xbf16>
    %c0_120 = arith.constant 0 : index
    %c0_121 = arith.constant 0 : index
    %c0_122 = arith.constant 0 : index
    %314 = vector.load %arg4[%c0_120, %c0_121, %c0_122] : memref<1x128x384xbf16, #tpu.memory_space<vmem>>, vector<1x128x384xbf16>
    %315 = vector.shape_cast %314 : vector<1x128x384xbf16> to vector<128x384xbf16>
    %cst_123 = arith.constant dense<0.000000e+00> : vector<64x384xf32>
    %316 = tpu.matmul %313, %315, %cst_123 {dimension_numbers = #tpu.dot_dimension_numbers<[1], [0], [0], [1], [0, 0, 1, 1], [], []>} : vector<64x128xbf16>, vector<128x384xbf16>, vector<64x384xf32> -> vector<64x384xf32>
    %c1_124 = arith.constant 1 : index
    %c0_125 = arith.constant 0 : index
    %c0_126 = arith.constant 0 : index
    %317 = vector.load %arg6[%c1_124, %c0_125, %c0_126] : memref<2x1x384xf32, #tpu.memory_space<vmem>>, vector<1x1x384xf32>
    %318 = vector.shape_cast %317 : vector<1x1x384xf32> to vector<1x384xf32>
    %319 = vector.broadcast %318 : vector<1x384xf32> to vector<64x384xf32>
    %320 = arith.addf %316, %319 : vector<64x384xf32>
    %321 = vector.shape_cast %320 : vector<64x384xf32> to vector<8x8x384xf32>
    %c0_127 = arith.constant 0 : index
    %c0_128 = arith.constant 0 : index
    %c0_129 = arith.constant 0 : index
    %322 = vector.load %arg13[%c0_127, %c0_128, %c0_129] : memref<8x8x384xf32, #tpu.memory_space<vmem>>, vector<8x8x384xf32>
    tpu.vector_store %arg13[%c0_127, %c0_128, %c0_129], %321 {strides = array<i32>} : memref<8x8x384xf32, #tpu.memory_space<vmem>>, vector<8x8x384xf32>,
    %c1_130 = arith.constant 1 : index
    %c0_131 = arith.constant 0 : index
    %c0_132 = arith.constant 0 : index
    %323 = vector.load %arg7[%c1_130, %c0_131, %c0_132] : memref<2x1x128xf32, #tpu.memory_space<vmem>>, vector<1x1x128xf32>
    %324 = vector.shape_cast %323 : vector<1x1x128xf32> to vector<1x128xf32>
    %325 = vector.shape_cast %324 : vector<1x128xf32> to vector<1x128xf32>
    %326 = vector.broadcast %325 : vector<1x128xf32> to vector<8x128xf32>
    %c1_133 = arith.constant 1 : index
    %c0_134 = arith.constant 0 : index
    %c0_135 = arith.constant 0 : index
    %327 = vector.load %arg11[%c1_133, %c0_134, %c0_135] : memref<2x8x128xf32, #tpu.memory_space<vmem>>, vector<1x8x128xf32>
    %328 = vector.shape_cast %327 : vector<1x8x128xf32> to vector<8x128xf32>
    %329 = arith.truncf %328 : vector<8x128xf32> to vector<8x128xbf16>
    %c1_136 = arith.constant 1 : index
    %c0_137 = arith.constant 0 : index
    %c0_138 = arith.constant 0 : index
    %330 = vector.load %arg5[%c1_136, %c0_137, %c0_138] : memref<2x128x384xbf16, #tpu.memory_space<vmem>>, vector<1x128x384xbf16>
    %331 = vector.shape_cast %330 : vector<1x128x384xbf16> to vector<128x384xbf16>
    %cst_139 = arith.constant dense<0.000000e+00> : vector<8x384xf32>
    %332 = tpu.matmul %329, %331, %cst_139 {dimension_numbers = #tpu.dot_dimension_numbers<[1], [0], [0], [1], [0, 0, 1, 1], [], []>} : vector<8x128xbf16>, vector<128x384xbf16>, vector<8x384xf32> -> vector<8x384xf32>
    %c0_140 = arith.constant 0 : index
    %c0_141 = arith.constant 0 : index
    %c0_142 = arith.constant 0 : index
    %333 = vector.load %arg13[%c0_140, %c0_141, %c0_142] : memref<8x8x384xf32, #tpu.memory_space<vmem>>, vector<1x8x384xf32>
    %334 = vector.shape_cast %333 : vector<1x8x384xf32> to vector<8x384xf32>
    %335 = vector.extract_strided_slice %334 {offsets = [0, 0], sizes = [8, 128], strides = [1, 1]} : vector<8x384xf32> to vector<8x128xf32>
    %336 = vector.extract_strided_slice %332 {offsets = [0, 0], sizes = [8, 128], strides = [1, 1]} : vector<8x384xf32> to vector<8x128xf32>
    %337 = arith.addf %335, %336 : vector<8x128xf32>
    %338 = arith.negf %337 : vector<8x128xf32>
    %339 = math.exp %338 : vector<8x128xf32>
    %cst_143 = arith.constant 1.000000e+00 : f32
    %340 = vector.broadcast %cst_143 : f32 to vector<8x128xf32>
    %341 = arith.addf %340, %339 : vector<8x128xf32>
    %342 = arith.divf %340, %341 : vector<8x128xf32>
    %343 = vector.extract_strided_slice %334 {offsets = [0, 128], sizes = [8, 128], strides = [1, 1]} : vector<8x384xf32> to vector<8x128xf32>
    %344 = vector.extract_strided_slice %332 {offsets = [0, 128], sizes = [8, 128], strides = [1, 1]} : vector<8x384xf32> to vector<8x128xf32>
    %345 = arith.addf %343, %344 : vector<8x128xf32>
    %346 = arith.negf %345 : vector<8x128xf32>
    %347 = math.exp %346 : vector<8x128xf32>
    %cst_144 = arith.constant 1.000000e+00 : f32
    %348 = vector.broadcast %cst_144 : f32 to vector<8x128xf32>
    %349 = arith.addf %348, %347 : vector<8x128xf32>
    %350 = arith.divf %348, %349 : vector<8x128xf32>
    %351 = vector.extract_strided_slice %334 {offsets = [0, 256], sizes = [8, 128], strides = [1, 1]} : vector<8x384xf32> to vector<8x128xf32>
    %352 = vector.extract_strided_slice %332 {offsets = [0, 256], sizes = [8, 128], strides = [1, 1]} : vector<8x384xf32> to vector<8x128xf32>
    %353 = arith.addf %352, %326 : vector<8x128xf32>
    %354 = arith.mulf %342, %353 : vector<8x128xf32>
    %355 = arith.addf %351, %354 : vector<8x128xf32>
    %356 = math.tanh %355 : vector<8x128xf32>
    %cst_145 = arith.constant 1.000000e+00 : f32
    %357 = vector.broadcast %cst_145 : f32 to vector<8x128xf32>
    %358 = arith.subf %357, %350 : vector<8x128xf32>
    %359 = arith.mulf %358, %356 : vector<8x128xf32>
    %360 = arith.mulf %350, %328 : vector<8x128xf32>
    %361 = arith.addf %359, %360 : vector<8x128xf32>
    %362 = arith.truncf %361 : vector<8x128xf32> to vector<8x128xbf16>
    %c1_146 = arith.constant 1 : index
    %c0_147 = arith.constant 0 : index
    %c0_148 = arith.constant 0 : index
    %363 = vector.load %arg5[%c1_146, %c0_147, %c0_148] : memref<2x128x384xbf16, #tpu.memory_space<vmem>>, vector<1x128x384xbf16>
    %364 = vector.shape_cast %363 : vector<1x128x384xbf16> to vector<128x384xbf16>
    %cst_149 = arith.constant dense<0.000000e+00> : vector<8x384xf32>
    %365 = tpu.matmul %362, %364, %cst_149 {dimension_numbers = #tpu.dot_dimension_numbers<[1], [0], [0], [1], [0, 0, 1, 1], [], []>} : vector<8x128xbf16>, vector<128x384xbf16>, vector<8x384xf32> -> vector<8x384xf32>
    %c1_150 = arith.constant 1 : index
    %c0_151 = arith.constant 0 : index
    %c0_152 = arith.constant 0 : index
    %366 = vector.load %arg13[%c1_150, %c0_151, %c0_152] : memref<8x8x384xf32, #tpu.memory_space<vmem>>, vector<1x8x384xf32>
    %367 = vector.shape_cast %366 : vector<1x8x384xf32> to vector<8x384xf32>
    %368 = vector.extract_strided_slice %367 {offsets = [0, 0], sizes = [8, 128], strides = [1, 1]} : vector<8x384xf32> to vector<8x128xf32>
    %369 = vector.extract_strided_slice %365 {offsets = [0, 0], sizes = [8, 128], strides = [1, 1]} : vector<8x384xf32> to vector<8x128xf32>
    %370 = arith.addf %368, %369 : vector<8x128xf32>
    %371 = arith.negf %370 : vector<8x128xf32>
    %372 = math.exp %371 : vector<8x128xf32>
    %cst_153 = arith.constant 1.000000e+00 : f32
    %373 = vector.broadcast %cst_153 : f32 to vector<8x128xf32>
    %374 = arith.addf %373, %372 : vector<8x128xf32>
    %375 = arith.divf %373, %374 : vector<8x128xf32>
    %376 = vector.extract_strided_slice %367 {offsets = [0, 128], sizes = [8, 128], strides = [1, 1]} : vector<8x384xf32> to vector<8x128xf32>
    %377 = vector.extract_strided_slice %365 {offsets = [0, 128], sizes = [8, 128], strides = [1, 1]} : vector<8x384xf32> to vector<8x128xf32>
    %378 = arith.addf %376, %377 : vector<8x128xf32>
    %379 = arith.negf %378 : vector<8x128xf32>
    %380 = math.exp %379 : vector<8x128xf32>
    %cst_154 = arith.constant 1.000000e+00 : f32
    %381 = vector.broadcast %cst_154 : f32 to vector<8x128xf32>
    %382 = arith.addf %381, %380 : vector<8x128xf32>
    %383 = arith.divf %381, %382 : vector<8x128xf32>
    %384 = vector.extract_strided_slice %367 {offsets = [0, 256], sizes = [8, 128], strides = [1, 1]} : vector<8x384xf32> to vector<8x128xf32>
    %385 = vector.extract_strided_slice %365 {offsets = [0, 256], sizes = [8, 128], strides = [1, 1]} : vector<8x384xf32> to vector<8x128xf32>
    %386 = arith.addf %385, %326 : vector<8x128xf32>
    %387 = arith.mulf %375, %386 : vector<8x128xf32>
    %388 = arith.addf %384, %387 : vector<8x128xf32>
    %389 = math.tanh %388 : vector<8x128xf32>
    %cst_155 = arith.constant 1.000000e+00 : f32
    %390 = vector.broadcast %cst_155 : f32 to vector<8x128xf32>
    %391 = arith.subf %390, %383 : vector<8x128xf32>
    %392 = arith.mulf %391, %389 : vector<8x128xf32>
    %393 = arith.mulf %383, %361 : vector<8x128xf32>
    %394 = arith.addf %392, %393 : vector<8x128xf32>
    %395 = arith.truncf %394 : vector<8x128xf32> to vector<8x128xbf16>
    %c1_156 = arith.constant 1 : index
    %c0_157 = arith.constant 0 : index
    %c0_158 = arith.constant 0 : index
    %396 = vector.load %arg5[%c1_156, %c0_157, %c0_158] : memref<2x128x384xbf16, #tpu.memory_space<vmem>>, vector<1x128x384xbf16>
    %397 = vector.shape_cast %396 : vector<1x128x384xbf16> to vector<128x384xbf16>
    %cst_159 = arith.constant dense<0.000000e+00> : vector<8x384xf32>
    %398 = tpu.matmul %395, %397, %cst_159 {dimension_numbers = #tpu.dot_dimension_numbers<[1], [0], [0], [1], [0, 0, 1, 1], [], []>} : vector<8x128xbf16>, vector<128x384xbf16>, vector<8x384xf32> -> vector<8x384xf32>
    %c2_160 = arith.constant 2 : index
    %c0_161 = arith.constant 0 : index
    %c0_162 = arith.constant 0 : index
    %399 = vector.load %arg13[%c2_160, %c0_161, %c0_162] : memref<8x8x384xf32, #tpu.memory_space<vmem>>, vector<1x8x384xf32>
    %400 = vector.shape_cast %399 : vector<1x8x384xf32> to vector<8x384xf32>
    %401 = vector.extract_strided_slice %400 {offsets = [0, 0], sizes = [8, 128], strides = [1, 1]} : vector<8x384xf32> to vector<8x128xf32>
    %402 = vector.extract_strided_slice %398 {offsets = [0, 0], sizes = [8, 128], strides = [1, 1]} : vector<8x384xf32> to vector<8x128xf32>
    %403 = arith.addf %401, %402 : vector<8x128xf32>
    %404 = arith.negf %403 : vector<8x128xf32>
    %405 = math.exp %404 : vector<8x128xf32>
    %cst_163 = arith.constant 1.000000e+00 : f32
    %406 = vector.broadcast %cst_163 : f32 to vector<8x128xf32>
    %407 = arith.addf %406, %405 : vector<8x128xf32>
    %408 = arith.divf %406, %407 : vector<8x128xf32>
    %409 = vector.extract_strided_slice %400 {offsets = [0, 128], sizes = [8, 128], strides = [1, 1]} : vector<8x384xf32> to vector<8x128xf32>
    %410 = vector.extract_strided_slice %398 {offsets = [0, 128], sizes = [8, 128], strides = [1, 1]} : vector<8x384xf32> to vector<8x128xf32>
    %411 = arith.addf %409, %410 : vector<8x128xf32>
    %412 = arith.negf %411 : vector<8x128xf32>
    %413 = math.exp %412 : vector<8x128xf32>
    %cst_164 = arith.constant 1.000000e+00 : f32
    %414 = vector.broadcast %cst_164 : f32 to vector<8x128xf32>
    %415 = arith.addf %414, %413 : vector<8x128xf32>
    %416 = arith.divf %414, %415 : vector<8x128xf32>
    %417 = vector.extract_strided_slice %400 {offsets = [0, 256], sizes = [8, 128], strides = [1, 1]} : vector<8x384xf32> to vector<8x128xf32>
    %418 = vector.extract_strided_slice %398 {offsets = [0, 256], sizes = [8, 128], strides = [1, 1]} : vector<8x384xf32> to vector<8x128xf32>
    %419 = arith.addf %418, %326 : vector<8x128xf32>
    %420 = arith.mulf %408, %419 : vector<8x128xf32>
    %421 = arith.addf %417, %420 : vector<8x128xf32>
    %422 = math.tanh %421 : vector<8x128xf32>
    %cst_165 = arith.constant 1.000000e+00 : f32
    %423 = vector.broadcast %cst_165 : f32 to vector<8x128xf32>
    %424 = arith.subf %423, %416 : vector<8x128xf32>
    %425 = arith.mulf %424, %422 : vector<8x128xf32>
    %426 = arith.mulf %416, %394 : vector<8x128xf32>
    %427 = arith.addf %425, %426 : vector<8x128xf32>
    %428 = arith.truncf %427 : vector<8x128xf32> to vector<8x128xbf16>
    %c1_166 = arith.constant 1 : index
    %c0_167 = arith.constant 0 : index
    %c0_168 = arith.constant 0 : index
    %429 = vector.load %arg5[%c1_166, %c0_167, %c0_168] : memref<2x128x384xbf16, #tpu.memory_space<vmem>>, vector<1x128x384xbf16>
    %430 = vector.shape_cast %429 : vector<1x128x384xbf16> to vector<128x384xbf16>
    %cst_169 = arith.constant dense<0.000000e+00> : vector<8x384xf32>
    %431 = tpu.matmul %428, %430, %cst_169 {dimension_numbers = #tpu.dot_dimension_numbers<[1], [0], [0], [1], [0, 0, 1, 1], [], []>} : vector<8x128xbf16>, vector<128x384xbf16>, vector<8x384xf32> -> vector<8x384xf32>
    %c3_170 = arith.constant 3 : index
    %c0_171 = arith.constant 0 : index
    %c0_172 = arith.constant 0 : index
    %432 = vector.load %arg13[%c3_170, %c0_171, %c0_172] : memref<8x8x384xf32, #tpu.memory_space<vmem>>, vector<1x8x384xf32>
    %433 = vector.shape_cast %432 : vector<1x8x384xf32> to vector<8x384xf32>
    %434 = vector.extract_strided_slice %433 {offsets = [0, 0], sizes = [8, 128], strides = [1, 1]} : vector<8x384xf32> to vector<8x128xf32>
    %435 = vector.extract_strided_slice %431 {offsets = [0, 0], sizes = [8, 128], strides = [1, 1]} : vector<8x384xf32> to vector<8x128xf32>
    %436 = arith.addf %434, %435 : vector<8x128xf32>
    %437 = arith.negf %436 : vector<8x128xf32>
    %438 = math.exp %437 : vector<8x128xf32>
    %cst_173 = arith.constant 1.000000e+00 : f32
    %439 = vector.broadcast %cst_173 : f32 to vector<8x128xf32>
    %440 = arith.addf %439, %438 : vector<8x128xf32>
    %441 = arith.divf %439, %440 : vector<8x128xf32>
    %442 = vector.extract_strided_slice %433 {offsets = [0, 128], sizes = [8, 128], strides = [1, 1]} : vector<8x384xf32> to vector<8x128xf32>
    %443 = vector.extract_strided_slice %431 {offsets = [0, 128], sizes = [8, 128], strides = [1, 1]} : vector<8x384xf32> to vector<8x128xf32>
    %444 = arith.addf %442, %443 : vector<8x128xf32>
    %445 = arith.negf %444 : vector<8x128xf32>
    %446 = math.exp %445 : vector<8x128xf32>
    %cst_174 = arith.constant 1.000000e+00 : f32
    %447 = vector.broadcast %cst_174 : f32 to vector<8x128xf32>
    %448 = arith.addf %447, %446 : vector<8x128xf32>
    %449 = arith.divf %447, %448 : vector<8x128xf32>
    %450 = vector.extract_strided_slice %433 {offsets = [0, 256], sizes = [8, 128], strides = [1, 1]} : vector<8x384xf32> to vector<8x128xf32>
    %451 = vector.extract_strided_slice %431 {offsets = [0, 256], sizes = [8, 128], strides = [1, 1]} : vector<8x384xf32> to vector<8x128xf32>
    %452 = arith.addf %451, %326 : vector<8x128xf32>
    %453 = arith.mulf %441, %452 : vector<8x128xf32>
    %454 = arith.addf %450, %453 : vector<8x128xf32>
    %455 = math.tanh %454 : vector<8x128xf32>
    %cst_175 = arith.constant 1.000000e+00 : f32
    %456 = vector.broadcast %cst_175 : f32 to vector<8x128xf32>
    %457 = arith.subf %456, %449 : vector<8x128xf32>
    %458 = arith.mulf %457, %455 : vector<8x128xf32>
    %459 = arith.mulf %449, %427 : vector<8x128xf32>
    %460 = arith.addf %458, %459 : vector<8x128xf32>
    %461 = arith.truncf %460 : vector<8x128xf32> to vector<8x128xbf16>
    %c1_176 = arith.constant 1 : index
    %c0_177 = arith.constant 0 : index
    %c0_178 = arith.constant 0 : index
    %462 = vector.load %arg5[%c1_176, %c0_177, %c0_178] : memref<2x128x384xbf16, #tpu.memory_space<vmem>>, vector<1x128x384xbf16>
    %463 = vector.shape_cast %462 : vector<1x128x384xbf16> to vector<128x384xbf16>
    %cst_179 = arith.constant dense<0.000000e+00> : vector<8x384xf32>
    %464 = tpu.matmul %461, %463, %cst_179 {dimension_numbers = #tpu.dot_dimension_numbers<[1], [0], [0], [1], [0, 0, 1, 1], [], []>} : vector<8x128xbf16>, vector<128x384xbf16>, vector<8x384xf32> -> vector<8x384xf32>
    %c4_180 = arith.constant 4 : index
    %c0_181 = arith.constant 0 : index
    %c0_182 = arith.constant 0 : index
    %465 = vector.load %arg13[%c4_180, %c0_181, %c0_182] : memref<8x8x384xf32, #tpu.memory_space<vmem>>, vector<1x8x384xf32>
    %466 = vector.shape_cast %465 : vector<1x8x384xf32> to vector<8x384xf32>
    %467 = vector.extract_strided_slice %466 {offsets = [0, 0], sizes = [8, 128], strides = [1, 1]} : vector<8x384xf32> to vector<8x128xf32>
    %468 = vector.extract_strided_slice %464 {offsets = [0, 0], sizes = [8, 128], strides = [1, 1]} : vector<8x384xf32> to vector<8x128xf32>
    %469 = arith.addf %467, %468 : vector<8x128xf32>
    %470 = arith.negf %469 : vector<8x128xf32>
    %471 = math.exp %470 : vector<8x128xf32>
    %cst_183 = arith.constant 1.000000e+00 : f32
    %472 = vector.broadcast %cst_183 : f32 to vector<8x128xf32>
    %473 = arith.addf %472, %471 : vector<8x128xf32>
    %474 = arith.divf %472, %473 : vector<8x128xf32>
    %475 = vector.extract_strided_slice %466 {offsets = [0, 128], sizes = [8, 128], strides = [1, 1]} : vector<8x384xf32> to vector<8x128xf32>
    %476 = vector.extract_strided_slice %464 {offsets = [0, 128], sizes = [8, 128], strides = [1, 1]} : vector<8x384xf32> to vector<8x128xf32>
    %477 = arith.addf %475, %476 : vector<8x128xf32>
    %478 = arith.negf %477 : vector<8x128xf32>
    %479 = math.exp %478 : vector<8x128xf32>
    %cst_184 = arith.constant 1.000000e+00 : f32
    %480 = vector.broadcast %cst_184 : f32 to vector<8x128xf32>
    %481 = arith.addf %480, %479 : vector<8x128xf32>
    %482 = arith.divf %480, %481 : vector<8x128xf32>
    %483 = vector.extract_strided_slice %466 {offsets = [0, 256], sizes = [8, 128], strides = [1, 1]} : vector<8x384xf32> to vector<8x128xf32>
    %484 = vector.extract_strided_slice %464 {offsets = [0, 256], sizes = [8, 128], strides = [1, 1]} : vector<8x384xf32> to vector<8x128xf32>
    %485 = arith.addf %484, %326 : vector<8x128xf32>
    %486 = arith.mulf %474, %485 : vector<8x128xf32>
    %487 = arith.addf %483, %486 : vector<8x128xf32>
    %488 = math.tanh %487 : vector<8x128xf32>
    %cst_185 = arith.constant 1.000000e+00 : f32
    %489 = vector.broadcast %cst_185 : f32 to vector<8x128xf32>
    %490 = arith.subf %489, %482 : vector<8x128xf32>
    %491 = arith.mulf %490, %488 : vector<8x128xf32>
    %492 = arith.mulf %482, %460 : vector<8x128xf32>
    %493 = arith.addf %491, %492 : vector<8x128xf32>
    %494 = arith.truncf %493 : vector<8x128xf32> to vector<8x128xbf16>
    %c1_186 = arith.constant 1 : index
    %c0_187 = arith.constant 0 : index
    %c0_188 = arith.constant 0 : index
    %495 = vector.load %arg5[%c1_186, %c0_187, %c0_188] : memref<2x128x384xbf16, #tpu.memory_space<vmem>>, vector<1x128x384xbf16>
    %496 = vector.shape_cast %495 : vector<1x128x384xbf16> to vector<128x384xbf16>
    %cst_189 = arith.constant dense<0.000000e+00> : vector<8x384xf32>
    %497 = tpu.matmul %494, %496, %cst_189 {dimension_numbers = #tpu.dot_dimension_numbers<[1], [0], [0], [1], [0, 0, 1, 1], [], []>} : vector<8x128xbf16>, vector<128x384xbf16>, vector<8x384xf32> -> vector<8x384xf32>
    %c5_190 = arith.constant 5 : index
    %c0_191 = arith.constant 0 : index
    %c0_192 = arith.constant 0 : index
    %498 = vector.load %arg13[%c5_190, %c0_191, %c0_192] : memref<8x8x384xf32, #tpu.memory_space<vmem>>, vector<1x8x384xf32>
    %499 = vector.shape_cast %498 : vector<1x8x384xf32> to vector<8x384xf32>
    %500 = vector.extract_strided_slice %499 {offsets = [0, 0], sizes = [8, 128], strides = [1, 1]} : vector<8x384xf32> to vector<8x128xf32>
    %501 = vector.extract_strided_slice %497 {offsets = [0, 0], sizes = [8, 128], strides = [1, 1]} : vector<8x384xf32> to vector<8x128xf32>
    %502 = arith.addf %500, %501 : vector<8x128xf32>
    %503 = arith.negf %502 : vector<8x128xf32>
    %504 = math.exp %503 : vector<8x128xf32>
    %cst_193 = arith.constant 1.000000e+00 : f32
    %505 = vector.broadcast %cst_193 : f32 to vector<8x128xf32>
    %506 = arith.addf %505, %504 : vector<8x128xf32>
    %507 = arith.divf %505, %506 : vector<8x128xf32>
    %508 = vector.extract_strided_slice %499 {offsets = [0, 128], sizes = [8, 128], strides = [1, 1]} : vector<8x384xf32> to vector<8x128xf32>
    %509 = vector.extract_strided_slice %497 {offsets = [0, 128], sizes = [8, 128], strides = [1, 1]} : vector<8x384xf32> to vector<8x128xf32>
    %510 = arith.addf %508, %509 : vector<8x128xf32>
    %511 = arith.negf %510 : vector<8x128xf32>
    %512 = math.exp %511 : vector<8x128xf32>
    %cst_194 = arith.constant 1.000000e+00 : f32
    %513 = vector.broadcast %cst_194 : f32 to vector<8x128xf32>
    %514 = arith.addf %513, %512 : vector<8x128xf32>
    %515 = arith.divf %513, %514 : vector<8x128xf32>
    %516 = vector.extract_strided_slice %499 {offsets = [0, 256], sizes = [8, 128], strides = [1, 1]} : vector<8x384xf32> to vector<8x128xf32>
    %517 = vector.extract_strided_slice %497 {offsets = [0, 256], sizes = [8, 128], strides = [1, 1]} : vector<8x384xf32> to vector<8x128xf32>
    %518 = arith.addf %517, %326 : vector<8x128xf32>
    %519 = arith.mulf %507, %518 : vector<8x128xf32>
    %520 = arith.addf %516, %519 : vector<8x128xf32>
    %521 = math.tanh %520 : vector<8x128xf32>
    %cst_195 = arith.constant 1.000000e+00 : f32
    %522 = vector.broadcast %cst_195 : f32 to vector<8x128xf32>
    %523 = arith.subf %522, %515 : vector<8x128xf32>
    %524 = arith.mulf %523, %521 : vector<8x128xf32>
    %525 = arith.mulf %515, %493 : vector<8x128xf32>
    %526 = arith.addf %524, %525 : vector<8x128xf32>
    %527 = arith.truncf %526 : vector<8x128xf32> to vector<8x128xbf16>
    %c1_196 = arith.constant 1 : index
    %c0_197 = arith.constant 0 : index
    %c0_198 = arith.constant 0 : index
    %528 = vector.load %arg5[%c1_196, %c0_197, %c0_198] : memref<2x128x384xbf16, #tpu.memory_space<vmem>>, vector<1x128x384xbf16>
    %529 = vector.shape_cast %528 : vector<1x128x384xbf16> to vector<128x384xbf16>
    %cst_199 = arith.constant dense<0.000000e+00> : vector<8x384xf32>
    %530 = tpu.matmul %527, %529, %cst_199 {dimension_numbers = #tpu.dot_dimension_numbers<[1], [0], [0], [1], [0, 0, 1, 1], [], []>} : vector<8x128xbf16>, vector<128x384xbf16>, vector<8x384xf32> -> vector<8x384xf32>
    %c6_200 = arith.constant 6 : index
    %c0_201 = arith.constant 0 : index
    %c0_202 = arith.constant 0 : index
    %531 = vector.load %arg13[%c6_200, %c0_201, %c0_202] : memref<8x8x384xf32, #tpu.memory_space<vmem>>, vector<1x8x384xf32>
    %532 = vector.shape_cast %531 : vector<1x8x384xf32> to vector<8x384xf32>
    %533 = vector.extract_strided_slice %532 {offsets = [0, 0], sizes = [8, 128], strides = [1, 1]} : vector<8x384xf32> to vector<8x128xf32>
    %534 = vector.extract_strided_slice %530 {offsets = [0, 0], sizes = [8, 128], strides = [1, 1]} : vector<8x384xf32> to vector<8x128xf32>
    %535 = arith.addf %533, %534 : vector<8x128xf32>
    %536 = arith.negf %535 : vector<8x128xf32>
    %537 = math.exp %536 : vector<8x128xf32>
    %cst_203 = arith.constant 1.000000e+00 : f32
    %538 = vector.broadcast %cst_203 : f32 to vector<8x128xf32>
    %539 = arith.addf %538, %537 : vector<8x128xf32>
    %540 = arith.divf %538, %539 : vector<8x128xf32>
    %541 = vector.extract_strided_slice %532 {offsets = [0, 128], sizes = [8, 128], strides = [1, 1]} : vector<8x384xf32> to vector<8x128xf32>
    %542 = vector.extract_strided_slice %530 {offsets = [0, 128], sizes = [8, 128], strides = [1, 1]} : vector<8x384xf32> to vector<8x128xf32>
    %543 = arith.addf %541, %542 : vector<8x128xf32>
    %544 = arith.negf %543 : vector<8x128xf32>
    %545 = math.exp %544 : vector<8x128xf32>
    %cst_204 = arith.constant 1.000000e+00 : f32
    %546 = vector.broadcast %cst_204 : f32 to vector<8x128xf32>
    %547 = arith.addf %546, %545 : vector<8x128xf32>
    %548 = arith.divf %546, %547 : vector<8x128xf32>
    %549 = vector.extract_strided_slice %532 {offsets = [0, 256], sizes = [8, 128], strides = [1, 1]} : vector<8x384xf32> to vector<8x128xf32>
    %550 = vector.extract_strided_slice %530 {offsets = [0, 256], sizes = [8, 128], strides = [1, 1]} : vector<8x384xf32> to vector<8x128xf32>
    %551 = arith.addf %550, %326 : vector<8x128xf32>
    %552 = arith.mulf %540, %551 : vector<8x128xf32>
    %553 = arith.addf %549, %552 : vector<8x128xf32>
    %554 = math.tanh %553 : vector<8x128xf32>
    %cst_205 = arith.constant 1.000000e+00 : f32
    %555 = vector.broadcast %cst_205 : f32 to vector<8x128xf32>
    %556 = arith.subf %555, %548 : vector<8x128xf32>
    %557 = arith.mulf %556, %554 : vector<8x128xf32>
    %558 = arith.mulf %548, %526 : vector<8x128xf32>
    %559 = arith.addf %557, %558 : vector<8x128xf32>
    %560 = arith.truncf %559 : vector<8x128xf32> to vector<8x128xbf16>
    %c1_206 = arith.constant 1 : index
    %c0_207 = arith.constant 0 : index
    %c0_208 = arith.constant 0 : index
    %561 = vector.load %arg5[%c1_206, %c0_207, %c0_208] : memref<2x128x384xbf16, #tpu.memory_space<vmem>>, vector<1x128x384xbf16>
    %562 = vector.shape_cast %561 : vector<1x128x384xbf16> to vector<128x384xbf16>
    %cst_209 = arith.constant dense<0.000000e+00> : vector<8x384xf32>
    %563 = tpu.matmul %560, %562, %cst_209 {dimension_numbers = #tpu.dot_dimension_numbers<[1], [0], [0], [1], [0, 0, 1, 1], [], []>} : vector<8x128xbf16>, vector<128x384xbf16>, vector<8x384xf32> -> vector<8x384xf32>
    %c7_210 = arith.constant 7 : index
    %c0_211 = arith.constant 0 : index
    %c0_212 = arith.constant 0 : index
    %564 = vector.load %arg13[%c7_210, %c0_211, %c0_212] : memref<8x8x384xf32, #tpu.memory_space<vmem>>, vector<1x8x384xf32>
    %565 = vector.shape_cast %564 : vector<1x8x384xf32> to vector<8x384xf32>
    %566 = vector.extract_strided_slice %565 {offsets = [0, 0], sizes = [8, 128], strides = [1, 1]} : vector<8x384xf32> to vector<8x128xf32>
    %567 = vector.extract_strided_slice %563 {offsets = [0, 0], sizes = [8, 128], strides = [1, 1]} : vector<8x384xf32> to vector<8x128xf32>
    %568 = arith.addf %566, %567 : vector<8x128xf32>
    %569 = arith.negf %568 : vector<8x128xf32>
    %570 = math.exp %569 : vector<8x128xf32>
    %cst_213 = arith.constant 1.000000e+00 : f32
    %571 = vector.broadcast %cst_213 : f32 to vector<8x128xf32>
    %572 = arith.addf %571, %570 : vector<8x128xf32>
    %573 = arith.divf %571, %572 : vector<8x128xf32>
    %574 = vector.extract_strided_slice %565 {offsets = [0, 128], sizes = [8, 128], strides = [1, 1]} : vector<8x384xf32> to vector<8x128xf32>
    %575 = vector.extract_strided_slice %563 {offsets = [0, 128], sizes = [8, 128], strides = [1, 1]} : vector<8x384xf32> to vector<8x128xf32>
    %576 = arith.addf %574, %575 : vector<8x128xf32>
    %577 = arith.negf %576 : vector<8x128xf32>
    %578 = math.exp %577 : vector<8x128xf32>
    %cst_214 = arith.constant 1.000000e+00 : f32
    %579 = vector.broadcast %cst_214 : f32 to vector<8x128xf32>
    %580 = arith.addf %579, %578 : vector<8x128xf32>
    %581 = arith.divf %579, %580 : vector<8x128xf32>
    %582 = vector.extract_strided_slice %565 {offsets = [0, 256], sizes = [8, 128], strides = [1, 1]} : vector<8x384xf32> to vector<8x128xf32>
    %583 = vector.extract_strided_slice %563 {offsets = [0, 256], sizes = [8, 128], strides = [1, 1]} : vector<8x384xf32> to vector<8x128xf32>
    %584 = arith.addf %583, %326 : vector<8x128xf32>
    %585 = arith.mulf %573, %584 : vector<8x128xf32>
    %586 = arith.addf %582, %585 : vector<8x128xf32>
    %587 = math.tanh %586 : vector<8x128xf32>
    %cst_215 = arith.constant 1.000000e+00 : f32
    %588 = vector.broadcast %cst_215 : f32 to vector<8x128xf32>
    %589 = arith.subf %588, %581 : vector<8x128xf32>
    %590 = arith.mulf %589, %587 : vector<8x128xf32>
    %591 = arith.mulf %581, %559 : vector<8x128xf32>
    %592 = arith.addf %590, %591 : vector<8x128xf32>
    %c1_216 = arith.constant 1 : index
    %c0_217 = arith.constant 0 : index
    %c0_218 = arith.constant 0 : index
    %593 = vector.load %arg11[%c1_216, %c0_217, %c0_218] : memref<2x8x128xf32, #tpu.memory_space<vmem>>, vector<1x8x128xf32>
    %594 = vector.shape_cast %593 : vector<1x8x128xf32> to vector<8x128xf32>
    %595 = vector.shape_cast %592 : vector<8x128xf32> to vector<1x8x128xf32>
    tpu.vector_store %arg11[%c1_216, %c0_217, %c0_218], %595 {strides = array<i32>} : memref<2x8x128xf32, #tpu.memory_space<vmem>>, vector<1x8x128xf32>,
    %c0_i32_219 = arith.constant 0 : i32
    %596 = arith.cmpi eq, %arg1, %c0_i32_219 : i32
    %597 = arith.extui %596 : i1 to i32
    %c0_i32_220 = arith.constant 0 : i32
    %598 = arith.cmpi ne, %597, %c0_i32_220 : i32
    scf.if %598 {
      %c1_221 = arith.constant 1 : index
      %c0_222 = arith.constant 0 : index
      %c0_223 = arith.constant 0 : index
      %599 = vector.load %arg11[%c1_221, %c0_222, %c0_223] : memref<2x8x128xf32, #tpu.memory_space<vmem>>, vector<1x8x128xf32>
      %600 = vector.shape_cast %599 : vector<1x8x128xf32> to vector<8x128xf32>
      %c0_224 = arith.constant 0 : index
      %c0_225 = arith.constant 0 : index
      %601 = vector.load %arg8[%c0_224, %c0_225] : memref<1x128xf32, #tpu.memory_space<vmem>>, vector<1x128xf32>
      %602 = vector.broadcast %601 : vector<1x128xf32> to vector<8x128xf32>
      %603 = arith.mulf %600, %602 : vector<8x128xf32>
      %cst_226 = arith.constant dense<0.000000e+00> : vector<8xf32>
      %604 = vector.multi_reduction <add>, %603, %cst_226 [1] : vector<8x128xf32> to vector<8xf32>
      %605 = vector.shape_cast %604 : vector<8xf32> to vector<8x1xf32>
      %c0_227 = arith.constant 0 : index
      %c0_228 = arith.constant 0 : index
      %606 = vector.load %arg9[%c0_227, %c0_228] : memref<1x1xf32, #tpu.memory_space<vmem>>, vector<1x1xf32>
      %607 = vector.broadcast %606 : vector<1x1xf32> to vector<8x1xf32>
      %608 = arith.addf %605, %607 : vector<8x1xf32>
      %c0_229 = arith.constant 0 : index
      %c0_230 = arith.constant 0 : index
      %609 = vector.load %arg10[%c0_229, %c0_230] : memref<8x1xf32, #tpu.memory_space<vmem>>, vector<8x1xf32>
      tpu.vector_store %arg10[%c0_229, %c0_230], %608 {strides = array<i32>} : memref<8x1xf32, #tpu.memory_space<vmem>>, vector<8x1xf32>,
    } else {
    }
    return
  }
  func.func @transform_0(%arg0: i32, %arg1: i32) -> (i32, i32, i32) {
    %c0_i32 = arith.constant 0 : i32
    %c0_i32_0 = arith.constant 0 : i32
    return %arg1, %arg0, %c0_i32 : i32, i32, i32
  }
  func.func @transform_1(%arg0: i32, %arg1: i32) -> (i32, i32) {
    %c0_i32 = arith.constant 0 : i32
    %c0_i32_0 = arith.constant 0 : i32
    %c0_i32_1 = arith.constant 0 : i32
    return %c0_i32, %c0_i32_0 : i32, i32
  }
  func.func @transform_2(%arg0: i32, %arg1: i32) -> (i32, i32, i32) {
    %c0_i32 = arith.constant 0 : i32
    %c0_i32_0 = arith.constant 0 : i32
    %c0_i32_1 = arith.constant 0 : i32
    %c0_i32_2 = arith.constant 0 : i32
    return %c0_i32, %c0_i32_0, %c0_i32_1 : i32, i32, i32
  }
  func.func @transform_3(%arg0: i32, %arg1: i32) -> (i32, i32, i32) {
    %c0_i32 = arith.constant 0 : i32
    %c0_i32_0 = arith.constant 0 : i32
    %c0_i32_1 = arith.constant 0 : i32
    %c0_i32_2 = arith.constant 0 : i32
    return %c0_i32, %c0_i32_0, %c0_i32_1 : i32, i32, i32
  }
  func.func @transform_4(%arg0: i32, %arg1: i32) -> (i32, i32, i32) {
    %c0_i32 = arith.constant 0 : i32
    %c0_i32_0 = arith.constant 0 : i32
    %c0_i32_1 = arith.constant 0 : i32
    %c0_i32_2 = arith.constant 0 : i32
    return %c0_i32, %c0_i32_0, %c0_i32_1 : i32, i32, i32
  }
  func.func @transform_5(%arg0: i32, %arg1: i32) -> (i32, i32, i32) {
    %c0_i32 = arith.constant 0 : i32
    %c0_i32_0 = arith.constant 0 : i32
    %c0_i32_1 = arith.constant 0 : i32
    %c0_i32_2 = arith.constant 0 : i32
    return %c0_i32, %c0_i32_0, %c0_i32_1 : i32, i32, i32
  }
  func.func @transform_6(%arg0: i32, %arg1: i32) -> (i32, i32) {
    %c0_i32 = arith.constant 0 : i32
    %c0_i32_0 = arith.constant 0 : i32
    %c0_i32_1 = arith.constant 0 : i32
    return %c0_i32, %c0_i32_0 : i32, i32
  }
  func.func @transform_7(%arg0: i32, %arg1: i32) -> (i32, i32) {
    %c0_i32 = arith.constant 0 : i32
    %c0_i32_0 = arith.constant 0 : i32
    %c0_i32_1 = arith.constant 0 : i32
    return %c0_i32, %c0_i32_0 : i32, i32
  }
  func.func @transform_8(%arg0: i32, %arg1: i32) -> (i32, i32) {
    %c0_i32 = arith.constant 0 : i32
    %c0_i32_0 = arith.constant 0 : i32
    return %arg0, %c0_i32 : i32, i32
  }
}

</mosaic_0001>

<llo_original>
// kernel: gru_model_forward.1
$region0: #{gru_model_forward.1}
  #allocation0 [shape = 'u32[]', space=smem, size = 0x4, offset = 0x4, fixed_abs, tag = 'smem constant byte address 0x4 - core index']
  #allocation1 [shape = 'u32[144,128]{1,0:T(1,128)}', space=vmem, size = 0x12000, scoped, tag = 'internal scratch']
  #allocation2 [shape = 'f32[2,8,128]{2,1,0:T(8,128)}', space=vmem, size = 0x2000, scoped, tag = 'scratch operand']
  #allocation3 [shape = 'f32[8,8,128]{2,1,0:T(8,128)}', space=vmem, size = 0x8000, scoped, tag = 'scratch operand']
  #allocation4 [shape = 'f32[8,8,384]{2,1,0:T(8,128)}', space=vmem, size = 0x18000, scoped, tag = 'scratch operand']
  #allocation5 [shape = 'f32[1,1]{1,0:T(1,128)S(1)}', space=vmem, size = 0x200, scoped, tag = 'scoped memory for gru_model_forward.1']
  %s0 = inlined_call_operand.vmem [shape: f32[8,8,128], index: 0, kind: input, shape index: {}]
  %s1 = inlined_call_operand.vmem [shape: bf16[128,384], index: 1, kind: input, shape index: {}]
  %s2 = inlined_call_operand.vmem [shape: bf16[1,128,384], index: 2, kind: input, shape index: {}]
  %s3 = inlined_call_operand.vmem [shape: bf16[2,128,384], index: 3, kind: input, shape index: {}]
  %s4 = inlined_call_operand.vmem [shape: f32[2,1,384], index: 4, kind: input, shape index: {}]
  %s5 = inlined_call_operand.vmem [shape: f32[2,1,128], index: 5, kind: input, shape index: {}]
  %s6 = inlined_call_operand.vmem [shape: f32[1,128], index: 6, kind: input, shape index: {}]
  %s7 = inlined_call_operand.<no memory space> [shape: f32[1,1], index: 7, kind: input, shape index: {}]
  %s8 = inlined_call_operand.vmem [shape: f32[8,1], index: 8, kind: output, shape index: {}]
  %s9 = sld [smem:[#allocation0]]
  $region50: #{gru_model_forward.1} parent=0
    _
  %s11 = ssub.s32 1, %s9
  %s12 = scalar_select 0, %s11, %s9
  %v13 = vstv %s7
  %14 = vst [vmem:[#allocation5] sm:$0x1] %v13
  // Predicated region
  $region2: #{gru_model_forward.1} parent=0 // pred_check
    _
  $region3: #{gru_model_forward.1} parent=0 // pred_check_branch
    %16 = sbr.rel (0) target = $region5
  $region4: #{gru_model_forward.1} parent=0 // pred_region
    _
  $region5: #{gru_model_forward.1} parent=0 // pred_fallthru
    _
  // Predicated region
  $region6: #{gru_model_forward.1} parent=0 // pred_check
    _
  $region7: #{gru_model_forward.1} parent=0 // pred_check_branch
    %18 = sbr.rel (0) target = $region9
  $region8: #{gru_model_forward.1} parent=0 // pred_region
    _
  $region9: #{gru_model_forward.1} parent=0 // pred_fallthru
    _
  // Predicated region
  $region10: #{gru_model_forward.1} parent=0 // pred_check
    _
  $region11: #{gru_model_forward.1} parent=0 // pred_check_branch
    %20 = sbr.rel (0) target = $region13
  $region12: #{gru_model_forward.1} parent=0 // pred_region
    _
  $region13: #{gru_model_forward.1} parent=0 // pred_fallthru
    _
  // Predicated region
  $region14: #{gru_model_forward.1} parent=0 // pred_check
    _
  $region15: #{gru_model_forward.1} parent=0 // pred_check_branch
    %22 = sbr.rel (0) target = $region17
  $region16: #{gru_model_forward.1} parent=0 // pred_region
    _
  $region17: #{gru_model_forward.1} parent=0 // pred_fallthru
    _
  // Predicated region
  $region18: #{gru_model_forward.1} parent=0 // pred_check
    _
  $region19: #{gru_model_forward.1} parent=0 // pred_check_branch
    %24 = sbr.rel (0) target = $region21
  $region20: #{gru_model_forward.1} parent=0 // pred_region
    _
  $region21: #{gru_model_forward.1} parent=0 // pred_fallthru
    _
  // Predicated region
  $region22: #{gru_model_forward.1} parent=0 // pred_check
    _
  $region23: #{gru_model_forward.1} parent=0 // pred_check_branch
    %26 = sbr.rel (0) target = $region25
  $region24: #{gru_model_forward.1} parent=0 // pred_region
    _
  $region25: #{gru_model_forward.1} parent=0 // pred_fallthru
    _
  // Predicated region
  $region26: #{gru_model_forward.1} parent=0 // pred_check
    _
  $region27: #{gru_model_forward.1} parent=0 // pred_check_branch
    %28 = sbr.rel (0) target = $region29
  $region28: #{gru_model_forward.1} parent=0 // pred_region
    _
  $region29: #{gru_model_forward.1} parent=0 // pred_fallthru
    _
  // Predicated region
  $region30: #{gru_model_forward.1} parent=0 // pred_check
    _
  $region31: #{gru_model_forward.1} parent=0 // pred_check_branch
    %30 = sbr.rel (0) target = $region33
  $region32: #{gru_model_forward.1} parent=0 // pred_region
    _
  $region33: #{gru_model_forward.1} parent=0 // pred_fallthru
    _
  %p32 = scmp.eq.s32.totalorder 0, 0
  // Predicated region
  $region34: #{gru_model_forward.1} parent=0 // pred_check
    %p33 = pneg %p32
  $region35: #{gru_model_forward.1} parent=0 // pred_check_branch
    %35 = sbr.rel (%p33) target = $region37
  $region36: #{gru_model_forward.1} parent=0 // pred_region
    %36 = vst [vmem:[#allocation2] sm:$0xff] 0.0
    %37 = vst [vmem:[#allocation2 + $0x8] sm:$0xff] 0.0
  $region37: #{gru_model_forward.1} parent=0 // pred_fallthru
    _
  %v38 = vld [vmem:[%s0] sm:$0xff]
  %v39 = vld [vmem:[%s0 + $0x8] sm:$0xff]
  %v40 = vld [vmem:[%s0 + $0x10] sm:$0xff]
  %v41 = vld [vmem:[%s0 + $0x18] sm:$0xff]
  %v42 = vld [vmem:[%s0 + $0x20] sm:$0xff]
  %v43 = vld [vmem:[%s0 + $0x28] sm:$0xff]
  %v44 = vld [vmem:[%s0 + $0x30] sm:$0xff]
  %v45 = vld [vmem:[%s0 + $0x38] sm:$0xff]
  %v46 = vpack.c.bf16 %v39, %v38
  %v47 = vpack.c.bf16 %v41, %v40
  %v48 = vpack.c.bf16 %v43, %v42
  %v49 = vpack.c.bf16 %v45, %v44
  %v50 = vld [vmem:[%s1] sm:$0xff]
  %v51 = vld [vmem:[%s1 + $0x8] sm:$0xf]
  %v52 = vld [vmem:[%s1 + $0xc] sm:$0xff]
  %v53 = vld [vmem:[%s1 + $0x14] sm:$0xf]
  %v54 = vld [vmem:[%s1 + $0x18] sm:$0xff]
  %v55 = vld [vmem:[%s1 + $0x20] sm:$0xf]
  %v56 = vld [vmem:[%s1 + $0x24] sm:$0xff]
  %v57 = vld [vmem:[%s1 + $0x2c] sm:$0xf]
  %v58 = vld [vmem:[%s1 + $0x30] sm:$0xff]
  %v59 = vld [vmem:[%s1 + $0x38] sm:$0xf]
  %v60 = vld [vmem:[%s1 + $0x3c] sm:$0xff]
  %v61 = vld [vmem:[%s1 + $0x44] sm:$0xf]
  %v62 = vld [vmem:[%s1 + $0x48] sm:$0xff]
  %v63 = vld [vmem:[%s1 + $0x50] sm:$0xf]
  %v64 = vld [vmem:[%s1 + $0x54] sm:$0xff]
  %v65 = vld [vmem:[%s1 + $0x5c] sm:$0xf]
  %v66 = vld [vmem:[%s1 + $0x60] sm:$0xff]
  %v67 = vld [vmem:[%s1 + $0x68] sm:$0xf]
  %v68 = vld [vmem:[%s1 + $0x6c] sm:$0xff]
  %v69 = vld [vmem:[%s1 + $0x74] sm:$0xf]
  %v70 = vld [vmem:[%s1 + $0x78] sm:$0xff]
  %v71 = vld [vmem:[%s1 + $0x80] sm:$0xf]
  %v72 = vld [vmem:[%s1 + $0x84] sm:$0xff]
  %v73 = vld [vmem:[%s1 + $0x8c] sm:$0xf]
  %v74 = vld [vmem:[%s1 + $0x90] sm:$0xff]
  %v75 = vld [vmem:[%s1 + $0x98] sm:$0xf]
  %v76 = vld [vmem:[%s1 + $0x9c] sm:$0xff]
  %v77 = vld [vmem:[%s1 + $0xa4] sm:$0xf]
  %v78 = vld [vmem:[%s1 + $0xa8] sm:$0xff]
  %v79 = vld [vmem:[%s1 + $0xb0] sm:$0xf]
  %v80 = vld [vmem:[%s1 + $0xb4] sm:$0xff]
  %v81 = vld [vmem:[%s1 + $0xbc] sm:$0xf]
  %v82 = vld [vmem:[%s4] sm:$0x7]
  %v84 = vlaneseq
  %v85 = vshrl.u32 %v84, 7
  %v86 = vsub.s32 0, %v85
  %v87 = vrot.slane %v82, %v86
  %v88 = vlaneseq
  %v89 = vshrl.u32 %v88, 7
  %v90 = vsub.s32 1, %v89
  %v91 = vrot.slane %v82, %v90
  %v92 = vlaneseq
  %v93 = vshrl.u32 %v92, 7
  %v94 = vsub.s32 2, %v93
  %v95 = vrot.slane %v82, %v94
  %v131 = vunpack.c.l.b16 %v50
  %v132 = vunpack.c.h.b16 %v50
  %v133 = vunpack.c.l.b16 %v51
  %v134 = vunpack.c.l.b16 %v52
  %v135 = vunpack.c.h.b16 %v52
  %v136 = vunpack.c.l.b16 %v53
  %v137 = vunpack.c.l.b16 %v54
  %v138 = vunpack.c.h.b16 %v54
  %v139 = vunpack.c.l.b16 %v55
  %v140 = vunpack.c.l.b16 %v56
  %v141 = vunpack.c.h.b16 %v56
  %v142 = vunpack.c.l.b16 %v57
  %v143 = vunpack.c.l.b16 %v58
  %v144 = vunpack.c.h.b16 %v58
  %v145 = vunpack.c.l.b16 %v59
  %v146 = vunpack.c.l.b16 %v60
  %v147 = vunpack.c.h.b16 %v60
  %v148 = vunpack.c.l.b16 %v61
  %v149 = vunpack.c.l.b16 %v62
  %v150 = vunpack.c.h.b16 %v62
  %v151 = vunpack.c.l.b16 %v63
  %v152 = vunpack.c.l.b16 %v64
  %v153 = vunpack.c.h.b16 %v64
  %v154 = vunpack.c.l.b16 %v65
  %v155 = vunpack.c.l.b16 %v66
  %v156 = vunpack.c.h.b16 %v66
  %v157 = vunpack.c.l.b16 %v67
  %v158 = vunpack.c.l.b16 %v68
  %v159 = vunpack.c.h.b16 %v68
  %v160 = vunpack.c.l.b16 %v69
  %v161 = vunpack.c.l.b16 %v70
  %v162 = vunpack.c.h.b16 %v70
  %v163 = vunpack.c.l.b16 %v71
  %v164 = vunpack.c.l.b16 %v72
  %v165 = vunpack.c.h.b16 %v72
  %v166 = vunpack.c.l.b16 %v73
  %v167 = vunpack.c.l.b16 %v74
  %v168 = vunpack.c.h.b16 %v74
  %v169 = vunpack.c.l.b16 %v75
  %v170 = vunpack.c.l.b16 %v76
  %v171 = vunpack.c.h.b16 %v76
  %v172 = vunpack.c.l.b16 %v77
  %v173 = vunpack.c.l.b16 %v78
  %v174 = vunpack.c.h.b16 %v78
  %v175 = vunpack.c.l.b16 %v79
  %v176 = vunpack.c.l.b16 %v80
  %v177 = vunpack.c.h.b16 %v80
  %v178 = vunpack.c.l.b16 %v81
  %v179 = vpack.c.b16 %v134, %v131
  %v180 = vpack.c.b16 %v135, %v132
  %v181 = vpack.c.b16 %v136, %v133
  %v182 = vpack.c.b16 %v140, %v137
  %v183 = vpack.c.b16 %v141, %v138
  %v184 = vpack.c.b16 %v142, %v139
  %v185 = vpack.c.b16 %v146, %v143
  %v186 = vpack.c.b16 %v147, %v144
  %v187 = vpack.c.b16 %v148, %v145
  %v188 = vpack.c.b16 %v152, %v149
  %v189 = vpack.c.b16 %v153, %v150
  %v190 = vpack.c.b16 %v154, %v151
  %v191 = vpack.c.b16 %v158, %v155
  %v192 = vpack.c.b16 %v159, %v156
  %v193 = vpack.c.b16 %v160, %v157
  %v194 = vpack.c.b16 %v164, %v161
  %v195 = vpack.c.b16 %v165, %v162
  %v196 = vpack.c.b16 %v166, %v163
  %v197 = vpack.c.b16 %v170, %v167
  %v198 = vpack.c.b16 %v171, %v168
  %v199 = vpack.c.b16 %v172, %v169
  %v200 = vpack.c.b16 %v176, %v173
  %v201 = vpack.c.b16 %v177, %v174
  %v202 = vpack.c.b16 %v178, %v175
  %227 = vmatprep.subr.bf16.mxu0 %v180
  %228 = vmatpush1.bf16.msra.mxu0 %v179
  %229 = vmatprep.subr.bf16.mxu0 %v183
  %230 = vmatpush1.bf16.msra.mxu0 %v182
  %231 = vmatprep.subr.bf16.mxu0 %v186
  %232 = vmatpush1.bf16.msra.mxu0 %v185
  %233 = vmatprep.subr.bf16.mxu0 %v189
  %234 = vmatpush1.bf16.msra.mxu0 %v188
  %235 = vmatprep.subr.bf16.mxu0 %v192
  %236 = vmatpush1.bf16.msra.mxu0 %v191
  %237 = vmatprep.subr.bf16.mxu0 %v195
  %238 = vmatpush1.bf16.msra.mxu0 %v194
  %239 = vmatprep.subr.bf16.mxu0 %v198
  %240 = vmatpush1.bf16.msra.mxu0 %v197
  %241 = vmatprep.subr.bf16.mxu0 %v201
  %242 = vmatpush1.bf16.msra.mxu0 %v200
  %243 = vmatprep.subr.bf16.mxu0 0
  %244 = vmatpush1.bf16.msra.mxu0 0
  %245 = vmatprep.subr.bf16.mxu0 0
  %246 = vmatpush1.bf16.msra.mxu0 0
  %247 = vmatprep.subr.bf16.mxu0 0
  %248 = vmatpush1.bf16.msra.mxu0 0
  %249 = vmatprep.subr.bf16.mxu0 0
  %250 = vmatpush1.bf16.msra.mxu0 0
  %251 = vmatprep.subr.bf16.mxu0 0
  %252 = vmatpush1.bf16.msra.mxu0 0
  %253 = vmatprep.subr.bf16.mxu0 0
  %254 = vmatpush1.bf16.msra.mxu0 0
  %255 = vmatprep.subr.bf16.mxu0 0
  %256 = vmatpush1.bf16.msra.mxu0 0
  %257 = vmatprep.subr.bf16.mxu0 0
  %258 = vmatpush1.bf16.msra.mxu0 0
  %259 = vmatprep.mubr.bf16.mxu0 0
  %260 = vmatmul.mubr.bf16.gmra.mrb[0].mxu0 %v46
  %v261 = vpop.f32.mrb[0].mxu0
  %v262 = vadd.f32 %v87, %v261
  %v263 = vpop.f32.mrb[0].mxu0
  %v264 = vadd.f32 %v91, %v263
  %v265 = vpop.f32.mrb[0].mxu0
  %v266 = vadd.f32 %v87, %v265
  %v267 = vpop.f32.mrb[0].mxu0
  %v268 = vadd.f32 %v91, %v267
  %269 = vmatprep.mubr.bf16.mxu0 0
  %270 = vmatmul.mubr.bf16.gmra.mrb[0].mxu0 %v47
  %v271 = vpop.f32.mrb[0].mxu0
  %v272 = vadd.f32 %v87, %v271
  %v273 = vpop.f32.mrb[0].mxu0
  %v274 = vadd.f32 %v91, %v273
  %v275 = vpop.f32.mrb[0].mxu0
  %v276 = vadd.f32 %v87, %v275
  %v277 = vpop.f32.mrb[0].mxu0
  %v278 = vadd.f32 %v91, %v277
  %279 = vmatprep.mubr.bf16.mxu0 0
  %280 = vmatmul.mubr.bf16.gmra.mrb[0].mxu0 %v48
  %v281 = vpop.f32.mrb[0].mxu0
  %v282 = vadd.f32 %v87, %v281
  %v283 = vpop.f32.mrb[0].mxu0
  %v284 = vadd.f32 %v91, %v283
  %v285 = vpop.f32.mrb[0].mxu0
  %v286 = vadd.f32 %v87, %v285
  %v287 = vpop.f32.mrb[0].mxu0
  %v288 = vadd.f32 %v91, %v287
  %289 = vmatprep.mubr.bf16.mxu0 0
  %290 = vmatmul.mubr.bf16.gmra.mrb[0].mxu0 %v49
  %v291 = vpop.f32.mrb[0].mxu0
  %v292 = vadd.f32 %v87, %v291
  %v293 = vpop.f32.mrb[0].mxu0
  %v294 = vadd.f32 %v91, %v293
  %v295 = vpop.f32.mrb[0].mxu0
  %v296 = vadd.f32 %v87, %v295
  %v297 = vpop.f32.mrb[0].mxu0
  %v298 = vadd.f32 %v91, %v297
  %299 = vdwg.mxu0
  %300 = vmatprep.subr.bf16.mxu0 0
  %301 = vmatpush1.bf16.msra.mxu0 %v181
  %302 = vmatprep.subr.bf16.mxu0 0
  %303 = vmatpush1.bf16.msra.mxu0 %v184
  %304 = vmatprep.subr.bf16.mxu0 0
  %305 = vmatpush1.bf16.msra.mxu0 %v187
  %306 = vmatprep.subr.bf16.mxu0 0
  %307 = vmatpush1.bf16.msra.mxu0 %v190
  %308 = vmatprep.subr.bf16.mxu0 0
  %309 = vmatpush1.bf16.msra.mxu0 %v193
  %310 = vmatprep.subr.bf16.mxu0 0
  %311 = vmatpush1.bf16.msra.mxu0 %v196
  %312 = vmatprep.subr.bf16.mxu0 0
  %313 = vmatpush1.bf16.msra.mxu0 %v199
  %314 = vmatprep.subr.bf16.mxu0 0
  %315 = vmatpush1.bf16.msra.mxu0 %v202
  %316 = vmatprep.subr.bf16.mxu0 0
  %317 = vmatpush1.bf16.msra.mxu0 0
  %318 = vmatprep.subr.bf16.mxu0 0
  %319 = vmatpush1.bf16.msra.mxu0 0
  %320 = vmatprep.subr.bf16.mxu0 0
  %321 = vmatpush1.bf16.msra.mxu0 0
  %322 = vmatprep.subr.bf16.mxu0 0
  %323 = vmatpush1.bf16.msra.mxu0 0
  %324 = vmatprep.subr.bf16.mxu0 0
  %325 = vmatpush1.bf16.msra.mxu0 0
  %326 = vmatprep.subr.bf16.mxu0 0
  %327 = vmatpush1.bf16.msra.mxu0 0
  %328 = vmatprep.subr.bf16.mxu0 0
  %329 = vmatpush1.bf16.msra.mxu0 0
  %330 = vmatprep.subr.bf16.mxu0 0
  %331 = vmatpush1.bf16.msra.mxu0 0
  %332 = vmatprep.mubr.bf16.mxu0 0
  %333 = vmatmul.mubr.bf16.gmra.mrb[0].mxu0 %v46
  %v334 = vpop.f32.mrb[0].mxu0
  %v335 = vadd.f32 %v95, %v334
  %v336 = vpop.f32.mrb[0].mxu0
  %v337 = vpop.f32.mrb[0].mxu0
  %v338 = vadd.f32 %v95, %v337
  %v339 = vpop.f32.mrb[0].mxu0
  %340 = vmatprep.mubr.bf16.mxu0 0
  %341 = vmatmul.mubr.bf16.gmra.mrb[0].mxu0 %v47
  %v342 = vpop.f32.mrb[0].mxu0
  %v343 = vadd.f32 %v95, %v342
  %v344 = vpop.f32.mrb[0].mxu0
  %v345 = vpop.f32.mrb[0].mxu0
  %v346 = vadd.f32 %v95, %v345
  %v347 = vpop.f32.mrb[0].mxu0
  %348 = vmatprep.mubr.bf16.mxu0 0
  %349 = vmatmul.mubr.bf16.gmra.mrb[0].mxu0 %v48
  %v350 = vpop.f32.mrb[0].mxu0
  %v351 = vadd.f32 %v95, %v350
  %v352 = vpop.f32.mrb[0].mxu0
  %v353 = vpop.f32.mrb[0].mxu0
  %v354 = vadd.f32 %v95, %v353
  %v355 = vpop.f32.mrb[0].mxu0
  %356 = vmatprep.mubr.bf16.mxu0 0
  %357 = vmatmul.mubr.bf16.gmra.mrb[0].mxu0 %v49
  %v358 = vpop.f32.mrb[0].mxu0
  %v359 = vadd.f32 %v95, %v358
  %v360 = vpop.f32.mrb[0].mxu0
  %v361 = vpop.f32.mrb[0].mxu0
  %v362 = vadd.f32 %v95, %v361
  %v363 = vpop.f32.mrb[0].mxu0
  %364 = vdwg.mxu0
  %365 = vst [vmem:[#allocation4] sm:$0xff] %v262
  %366 = vst [vmem:[#allocation4 + $0x8] sm:$0xff] %v264
  %367 = vst [vmem:[#allocation4 + $0x10] sm:$0xff] %v335
  %368 = vst [vmem:[#allocation4 + $0x18] sm:$0xff] %v266
  %369 = vst [vmem:[#allocation4 + $0x20] sm:$0xff] %v268
  %370 = vst [vmem:[#allocation4 + $0x28] sm:$0xff] %v338
  %371 = vst [vmem:[#allocation4 + $0x30] sm:$0xff] %v272
  %372 = vst [vmem:[#allocation4 + $0x38] sm:$0xff] %v274
  %373 = vst [vmem:[#allocation4 + $0x40] sm:$0xff] %v343
  %374 = vst [vmem:[#allocation4 + $0x48] sm:$0xff] %v276
  %375 = vst [vmem:[#allocation4 + $0x50] sm:$0xff] %v278
  %376 = vst [vmem:[#allocation4 + $0x58] sm:$0xff] %v346
  %377 = vst [vmem:[#allocation4 + $0x60] sm:$0xff] %v282
  %378 = vst [vmem:[#allocation4 + $0x68] sm:$0xff] %v284
  %379 = vst [vmem:[#allocation4 + $0x70] sm:$0xff] %v351
  %380 = vst [vmem:[#allocation4 + $0x78] sm:$0xff] %v286
  %381 = vst [vmem:[#allocation4 + $0x80] sm:$0xff] %v288
  %382 = vst [vmem:[#allocation4 + $0x88] sm:$0xff] %v354
  %383 = vst [vmem:[#allocation4 + $0x90] sm:$0xff] %v292
  %384 = vst [vmem:[#allocation4 + $0x98] sm:$0xff] %v294
  %385 = vst [vmem:[#allocation4 + $0xa0] sm:$0xff] %v359
  %386 = vst [vmem:[#allocation4 + $0xa8] sm:$0xff] %v296
  %387 = vst [vmem:[#allocation4 + $0xb0] sm:$0xff] %v298
  %388 = vst [vmem:[#allocation4 + $0xb8] sm:$0xff] %v362
  %v389 = vld [vmem:[%s5] sm:$0x1]
  %v391 = vlaneseq
  %v392 = vshrl.u32 %v391, 7
  %v393 = vsub.s32 0, %v392
  %v394 = vrot.slane %v389, %v393
  %v396 = vld [vmem:[#allocation2] sm:$0xff]
  %v397 = vpack.c.bf16 %v396, %v396
  %v398 = vld [vmem:[%s3] sm:$0xff]
  %v399 = vld [vmem:[%s3 + $0x8] sm:$0xf]
  %v400 = vld [vmem:[%s3 + $0xc] sm:$0xff]
  %v401 = vld [vmem:[%s3 + $0x14] sm:$0xf]
  %v402 = vld [vmem:[%s3 + $0x18] sm:$0xff]
  %v403 = vld [vmem:[%s3 + $0x20] sm:$0xf]
  %v404 = vld [vmem:[%s3 + $0x24] sm:$0xff]
  %v405 = vld [vmem:[%s3 + $0x2c] sm:$0xf]
  %v406 = vld [vmem:[%s3 + $0x30] sm:$0xff]
  %v407 = vld [vmem:[%s3 + $0x38] sm:$0xf]
  %v408 = vld [vmem:[%s3 + $0x3c] sm:$0xff]
  %v409 = vld [vmem:[%s3 + $0x44] sm:$0xf]
  %v410 = vld [vmem:[%s3 + $0x48] sm:$0xff]
  %v411 = vld [vmem:[%s3 + $0x50] sm:$0xf]
  %v412 = vld [vmem:[%s3 + $0x54] sm:$0xff]
  %v413 = vld [vmem:[%s3 + $0x5c] sm:$0xf]
  %v414 = vld [vmem:[%s3 + $0x60] sm:$0xff]
  %v415 = vld [vmem:[%s3 + $0x68] sm:$0xf]
  %v416 = vld [vmem:[%s3 + $0x6c] sm:$0xff]
  %v417 = vld [vmem:[%s3 + $0x74] sm:$0xf]
  %v418 = vld [vmem:[%s3 + $0x78] sm:$0xff]
  %v419 = vld [vmem:[%s3 + $0x80] sm:$0xf]
  %v420 = vld [vmem:[%s3 + $0x84] sm:$0xff]
  %v421 = vld [vmem:[%s3 + $0x8c] sm:$0xf]
  %v422 = vld [vmem:[%s3 + $0x90] sm:$0xff]
  %v423 = vld [vmem:[%s3 + $0x98] sm:$0xf]
  %v424 = vld [vmem:[%s3 + $0x9c] sm:$0xff]
  %v425 = vld [vmem:[%s3 + $0xa4] sm:$0xf]
  %v426 = vld [vmem:[%s3 + $0xa8] sm:$0xff]
  %v427 = vld [vmem:[%s3 + $0xb0] sm:$0xf]
  %v428 = vld [vmem:[%s3 + $0xb4] sm:$0xff]
  %v429 = vld [vmem:[%s3 + $0xbc] sm:$0xf]
  %v462 = vunpack.c.l.b16 %v398
  %v463 = vunpack.c.h.b16 %v398
  %v464 = vunpack.c.l.b16 %v399
  %v465 = vunpack.c.l.b16 %v400
  %v466 = vunpack.c.h.b16 %v400
  %v467 = vunpack.c.l.b16 %v401
  %v468 = vunpack.c.l.b16 %v402
  %v469 = vunpack.c.h.b16 %v402
  %v470 = vunpack.c.l.b16 %v403
  %v471 = vunpack.c.l.b16 %v404
  %v472 = vunpack.c.h.b16 %v404
  %v473 = vunpack.c.l.b16 %v405
  %v474 = vunpack.c.l.b16 %v406
  %v475 = vunpack.c.h.b16 %v406
  %v476 = vunpack.c.l.b16 %v407
  %v477 = vunpack.c.l.b16 %v408
  %v478 = vunpack.c.h.b16 %v408
  %v479 = vunpack.c.l.b16 %v409
  %v480 = vunpack.c.l.b16 %v410
  %v481 = vunpack.c.h.b16 %v410
  %v482 = vunpack.c.l.b16 %v411
  %v483 = vunpack.c.l.b16 %v412
  %v484 = vunpack.c.h.b16 %v412
  %v485 = vunpack.c.l.b16 %v413
  %v486 = vunpack.c.l.b16 %v414
  %v487 = vunpack.c.h.b16 %v414
  %v488 = vunpack.c.l.b16 %v415
  %v489 = vunpack.c.l.b16 %v416
  %v490 = vunpack.c.h.b16 %v416
  %v491 = vunpack.c.l.b16 %v417
  %v492 = vunpack.c.l.b16 %v418
  %v493 = vunpack.c.h.b16 %v418
  %v494 = vunpack.c.l.b16 %v419
  %v495 = vunpack.c.l.b16 %v420
  %v496 = vunpack.c.h.b16 %v420
  %v497 = vunpack.c.l.b16 %v421
  %v498 = vunpack.c.l.b16 %v422
  %v499 = vunpack.c.h.b16 %v422
  %v500 = vunpack.c.l.b16 %v423
  %v501 = vunpack.c.l.b16 %v424
  %v502 = vunpack.c.h.b16 %v424
  %v503 = vunpack.c.l.b16 %v425
  %v504 = vunpack.c.l.b16 %v426
  %v505 = vunpack.c.h.b16 %v426
  %v506 = vunpack.c.l.b16 %v427
  %v507 = vunpack.c.l.b16 %v428
  %v508 = vunpack.c.h.b16 %v428
  %v509 = vunpack.c.l.b16 %v429
  %v510 = vpack.c.b16 %v465, %v462
  %v511 = vpack.c.b16 %v466, %v463
  %v512 = vpack.c.b16 %v467, %v464
  %v513 = vpack.c.b16 %v471, %v468
  %v514 = vpack.c.b16 %v472, %v469
  %v515 = vpack.c.b16 %v473, %v470
  %v516 = vpack.c.b16 %v477, %v474
  %v517 = vpack.c.b16 %v478, %v475
  %v518 = vpack.c.b16 %v479, %v476
  %v519 = vpack.c.b16 %v483, %v480
  %v520 = vpack.c.b16 %v484, %v481
  %v521 = vpack.c.b16 %v485, %v482
  %v522 = vpack.c.b16 %v489, %v486
  %v523 = vpack.c.b16 %v490, %v487
  %v524 = vpack.c.b16 %v491, %v488
  %v525 = vpack.c.b16 %v495, %v492
  %v526 = vpack.c.b16 %v496, %v493
  %v527 = vpack.c.b16 %v497, %v494
  %v528 = vpack.c.b16 %v501, %v498
  %v529 = vpack.c.b16 %v502, %v499
  %v530 = vpack.c.b16 %v503, %v500
  %v531 = vpack.c.b16 %v507, %v504
  %v532 = vpack.c.b16 %v508, %v505
  %v533 = vpack.c.b16 %v509, %v506
  %558 = vmatprep.subr.bf16.mxu0 %v511
  %559 = vmatpush1.bf16.msra.mxu0 %v510
  %560 = vmatprep.subr.bf16.mxu0 %v514
  %561 = vmatpush1.bf16.msra.mxu0 %v513
  %562 = vmatprep.subr.bf16.mxu0 %v517
  %563 = vmatpush1.bf16.msra.mxu0 %v516
  %564 = vmatprep.subr.bf16.mxu0 %v520
  %565 = vmatpush1.bf16.msra.mxu0 %v519
  %566 = vmatprep.subr.bf16.mxu0 %v523
  %567 = vmatpush1.bf16.msra.mxu0 %v522
  %568 = vmatprep.subr.bf16.mxu0 %v526
  %569 = vmatpush1.bf16.msra.mxu0 %v525
  %570 = vmatprep.subr.bf16.mxu0 %v529
  %571 = vmatpush1.bf16.msra.mxu0 %v528
  %572 = vmatprep.subr.bf16.mxu0 %v532
  %573 = vmatpush1.bf16.msra.mxu0 %v531
  %574 = vmatprep.subr.bf16.mxu0 0
  %575 = vmatpush1.bf16.msra.mxu0 0
  %576 = vmatprep.subr.bf16.mxu0 0
  %577 = vmatpush1.bf16.msra.mxu0 0
  %578 = vmatprep.subr.bf16.mxu0 0
  %579 = vmatpush1.bf16.msra.mxu0 0
  %580 = vmatprep.subr.bf16.mxu0 0
  %581 = vmatpush1.bf16.msra.mxu0 0
  %582 = vmatprep.subr.bf16.mxu0 0
  %583 = vmatpush1.bf16.msra.mxu0 0
  %584 = vmatprep.subr.bf16.mxu0 0
  %585 = vmatpush1.bf16.msra.mxu0 0
  %586 = vmatprep.subr.bf16.mxu0 0
  %587 = vmatpush1.bf16.msra.mxu0 0
  %588 = vmatprep.subr.bf16.mxu0 0
  %589 = vmatpush1.bf16.msra.mxu0 0
  %590 = vmatprep.mubr.bf16.mxu0 0
  %591 = vmatmul.mubr.bf16.gmra.mrb[0].mxu0 %v397
  %v592 = vpop.f32.mrb[0].mxu0
  %v593 = vadd.f32 0.0, %v592
  %v594 = vpop.f32.mrb[0].mxu0
  %v595 = vadd.f32 0.0, %v594
  %v596 = vpop.f32.mrb[0].mxu0
  %v597 = vpop.f32.mrb[0].mxu0
  %598 = vdwg.mxu0
  %599 = vmatprep.subr.bf16.mxu0 0
  %600 = vmatpush1.bf16.msra.mxu0 %v512
  %601 = vmatprep.subr.bf16.mxu0 0
  %602 = vmatpush1.bf16.msra.mxu0 %v515
  %603 = vmatprep.subr.bf16.mxu0 0
  %604 = vmatpush1.bf16.msra.mxu0 %v518
  %605 = vmatprep.subr.bf16.mxu0 0
  %606 = vmatpush1.bf16.msra.mxu0 %v521
  %607 = vmatprep.subr.bf16.mxu0 0
  %608 = vmatpush1.bf16.msra.mxu0 %v524
  %609 = vmatprep.subr.bf16.mxu0 0
  %610 = vmatpush1.bf16.msra.mxu0 %v527
  %611 = vmatprep.subr.bf16.mxu0 0
  %612 = vmatpush1.bf16.msra.mxu0 %v530
  %613 = vmatprep.subr.bf16.mxu0 0
  %614 = vmatpush1.bf16.msra.mxu0 %v533
  %615 = vmatprep.subr.bf16.mxu0 0
  %616 = vmatpush1.bf16.msra.mxu0 0
  %617 = vmatprep.subr.bf16.mxu0 0
  %618 = vmatpush1.bf16.msra.mxu0 0
  %619 = vmatprep.subr.bf16.mxu0 0
  %620 = vmatpush1.bf16.msra.mxu0 0
  %621 = vmatprep.subr.bf16.mxu0 0
  %622 = vmatpush1.bf16.msra.mxu0 0
  %623 = vmatprep.subr.bf16.mxu0 0
  %624 = vmatpush1.bf16.msra.mxu0 0
  %625 = vmatprep.subr.bf16.mxu0 0
  %626 = vmatpush1.bf16.msra.mxu0 0
  %627 = vmatprep.subr.bf16.mxu0 0
  %628 = vmatpush1.bf16.msra.mxu0 0
  %629 = vmatprep.subr.bf16.mxu0 0
  %630 = vmatpush1.bf16.msra.mxu0 0
  %631 = vmatprep.mubr.bf16.mxu0 0
  %632 = vmatmul.mubr.bf16.gmra.mrb[0].mxu0 %v397
  %v633 = vpop.f32.mrb[0].mxu0
  %v634 = vadd.f32 0.0, %v633
  %v635 = vpop.f32.mrb[0].mxu0
  %v636 = vpop.f32.mrb[0].mxu0
  %v637 = vpop.f32.mrb[0].mxu0
  %638 = vdwg.mxu0
  %v639 = vld [vmem:[#allocation4] sm:$0xff]
  %v640 = vld [vmem:[#allocation4 + $0x8] sm:$0xff]
  %v641 = vld [vmem:[#allocation4 + $0x10] sm:$0xff]
  %v642 = vadd.f32 %v639, %v593
  %v643 = vxor.u32 %v642, 2147483648
  %v644 = vmul.f32 %v643, 1.442695
  %v645 = vpow.pop %v644
  %v646 = vadd.f32 %v645, 1.0
  %v647 = vrcp.pop %v646
  %v648 = vmul.f32 1.0, %v647
  %v649 = vadd.f32 %v640, %v595
  %v650 = vxor.u32 %v649, 2147483648
  %v651 = vmul.f32 %v650, 1.442695
  %v652 = vpow.pop %v651
  %v653 = vadd.f32 %v652, 1.0
  %v654 = vrcp.pop %v653
  %v655 = vmul.f32 1.0, %v654
  %v656 = vadd.f32 %v634, %v394
  %v657 = vmul.f32 %v648, %v656
  %v658 = vadd.f32 %v641, %v657
  %v659 = vtanh.pop %v658
  %v660 = vsub.f32 1.0, %v655
  %v661 = vmul.f32 %v660, %v659
  %v662 = vmul.f32 %v655, %v396
  %v663 = vadd.f32 %v661, %v662
  %664 = vst [vmem:[#allocation3] sm:$0xff] %v663
  %v665 = vpack.c.bf16 %v663, %v663
  %v666 = vld [vmem:[%s3] sm:$0xff]
  %v667 = vld [vmem:[%s3 + $0x8] sm:$0xf]
  %v668 = vld [vmem:[%s3 + $0xc] sm:$0xff]
  %v669 = vld [vmem:[%s3 + $0x14] sm:$0xf]
  %v670 = vld [vmem:[%s3 + $0x18] sm:$0xff]
  %v671 = vld [vmem:[%s3 + $0x20] sm:$0xf]
  %v672 = vld [vmem:[%s3 + $0x24] sm:$0xff]
  %v673 = vld [vmem:[%s3 + $0x2c] sm:$0xf]
  %v674 = vld [vmem:[%s3 + $0x30] sm:$0xff]
  %v675 = vld [vmem:[%s3 + $0x38] sm:$0xf]
  %v676 = vld [vmem:[%s3 + $0x3c] sm:$0xff]
  %v677 = vld [vmem:[%s3 + $0x44] sm:$0xf]
  %v678 = vld [vmem:[%s3 + $0x48] sm:$0xff]
  %v679 = vld [vmem:[%s3 + $0x50] sm:$0xf]
  %v680 = vld [vmem:[%s3 + $0x54] sm:$0xff]
  %v681 = vld [vmem:[%s3 + $0x5c] sm:$0xf]
  %v682 = vld [vmem:[%s3 + $0x60] sm:$0xff]
  %v683 = vld [vmem:[%s3 + $0x68] sm:$0xf]
  %v684 = vld [vmem:[%s3 + $0x6c] sm:$0xff]
  %v685 = vld [vmem:[%s3 + $0x74] sm:$0xf]
  %v686 = vld [vmem:[%s3 + $0x78] sm:$0xff]
  %v687 = vld [vmem:[%s3 + $0x80] sm:$0xf]
  %v688 = vld [vmem:[%s3 + $0x84] sm:$0xff]
  %v689 = vld [vmem:[%s3 + $0x8c] sm:$0xf]
  %v690 = vld [vmem:[%s3 + $0x90] sm:$0xff]
  %v691 = vld [vmem:[%s3 + $0x98] sm:$0xf]
  %v692 = vld [vmem:[%s3 + $0x9c] sm:$0xff]
  %v693 = vld [vmem:[%s3 + $0xa4] sm:$0xf]
  %v694 = vld [vmem:[%s3 + $0xa8] sm:$0xff]
  %v695 = vld [vmem:[%s3 + $0xb0] sm:$0xf]
  %v696 = vld [vmem:[%s3 + $0xb4] sm:$0xff]
  %v697 = vld [vmem:[%s3 + $0xbc] sm:$0xf]
  %v730 = vunpack.c.l.b16 %v666
  %v731 = vunpack.c.h.b16 %v666
  %v732 = vunpack.c.l.b16 %v667
  %v733 = vunpack.c.l.b16 %v668
  %v734 = vunpack.c.h.b16 %v668
  %v735 = vunpack.c.l.b16 %v669
  %v736 = vunpack.c.l.b16 %v670
  %v737 = vunpack.c.h.b16 %v670
  %v738 = vunpack.c.l.b16 %v671
  %v739 = vunpack.c.l.b16 %v672
  %v740 = vunpack.c.h.b16 %v672
  %v741 = vunpack.c.l.b16 %v673
  %v742 = vunpack.c.l.b16 %v674
  %v743 = vunpack.c.h.b16 %v674
  %v744 = vunpack.c.l.b16 %v675
  %v745 = vunpack.c.l.b16 %v676
  %v746 = vunpack.c.h.b16 %v676
  %v747 = vunpack.c.l.b16 %v677
  %v748 = vunpack.c.l.b16 %v678
  %v749 = vunpack.c.h.b16 %v678
  %v750 = vunpack.c.l.b16 %v679
  %v751 = vunpack.c.l.b16 %v680
  %v752 = vunpack.c.h.b16 %v680
  %v753 = vunpack.c.l.b16 %v681
  %v754 = vunpack.c.l.b16 %v682
  %v755 = vunpack.c.h.b16 %v682
  %v756 = vunpack.c.l.b16 %v683
  %v757 = vunpack.c.l.b16 %v684
  %v758 = vunpack.c.h.b16 %v684
  %v759 = vunpack.c.l.b16 %v685
  %v760 = vunpack.c.l.b16 %v686
  %v761 = vunpack.c.h.b16 %v686
  %v762 = vunpack.c.l.b16 %v687
  %v763 = vunpack.c.l.b16 %v688
  %v764 = vunpack.c.h.b16 %v688
  %v765 = vunpack.c.l.b16 %v689
  %v766 = vunpack.c.l.b16 %v690
  %v767 = vunpack.c.h.b16 %v690
  %v768 = vunpack.c.l.b16 %v691
  %v769 = vunpack.c.l.b16 %v692
  %v770 = vunpack.c.h.b16 %v692
  %v771 = vunpack.c.l.b16 %v693
  %v772 = vunpack.c.l.b16 %v694
  %v773 = vunpack.c.h.b16 %v694
  %v774 = vunpack.c.l.b16 %v695
  %v775 = vunpack.c.l.b16 %v696
  %v776 = vunpack.c.h.b16 %v696
  %v777 = vunpack.c.l.b16 %v697
  %v778 = vpack.c.b16 %v733, %v730
  %v779 = vpack.c.b16 %v734, %v731
  %v780 = vpack.c.b16 %v735, %v732
  %v781 = vpack.c.b16 %v739, %v736
  %v782 = vpack.c.b16 %v740, %v737
  %v783 = vpack.c.b16 %v741, %v738
  %v784 = vpack.c.b16 %v745, %v742
  %v785 = vpack.c.b16 %v746, %v743
  %v786 = vpack.c.b16 %v747, %v744
  %v787 = vpack.c.b16 %v751, %v748
  %v788 = vpack.c.b16 %v752, %v749
  %v789 = vpack.c.b16 %v753, %v750
  %v790 = vpack.c.b16 %v757, %v754
  %v791 = vpack.c.b16 %v758, %v755
  %v792 = vpack.c.b16 %v759, %v756
  %v793 = vpack.c.b16 %v763, %v760
  %v794 = vpack.c.b16 %v764, %v761
  %v795 = vpack.c.b16 %v765, %v762
  %v796 = vpack.c.b16 %v769, %v766
  %v797 = vpack.c.b16 %v770, %v767
  %v798 = vpack.c.b16 %v771, %v768
  %v799 = vpack.c.b16 %v775, %v772
  %v800 = vpack.c.b16 %v776, %v773
  %v801 = vpack.c.b16 %v777, %v774
  %826 = vmatprep.subr.bf16.mxu0 %v779
  %827 = vmatpush1.bf16.msra.mxu0 %v778
  %828 = vmatprep.subr.bf16.mxu0 %v782
  %829 = vmatpush1.bf16.msra.mxu0 %v781
  %830 = vmatprep.subr.bf16.mxu0 %v785
  %831 = vmatpush1.bf16.msra.mxu0 %v784
  %832 = vmatprep.subr.bf16.mxu0 %v788
  %833 = vmatpush1.bf16.msra.mxu0 %v787
  %834 = vmatprep.subr.bf16.mxu0 %v791
  %835 = vmatpush1.bf16.msra.mxu0 %v790
  %836 = vmatprep.subr.bf16.mxu0 %v794
  %837 = vmatpush1.bf16.msra.mxu0 %v793
  %838 = vmatprep.subr.bf16.mxu0 %v797
  %839 = vmatpush1.bf16.msra.mxu0 %v796
  %840 = vmatprep.subr.bf16.mxu0 %v800
  %841 = vmatpush1.bf16.msra.mxu0 %v799
  %842 = vmatprep.subr.bf16.mxu0 0
  %843 = vmatpush1.bf16.msra.mxu0 0
  %844 = vmatprep.subr.bf16.mxu0 0
  %845 = vmatpush1.bf16.msra.mxu0 0
  %846 = vmatprep.subr.bf16.mxu0 0
  %847 = vmatpush1.bf16.msra.mxu0 0
  %848 = vmatprep.subr.bf16.mxu0 0
  %849 = vmatpush1.bf16.msra.mxu0 0
  %850 = vmatprep.subr.bf16.mxu0 0
  %851 = vmatpush1.bf16.msra.mxu0 0
  %852 = vmatprep.subr.bf16.mxu0 0
  %853 = vmatpush1.bf16.msra.mxu0 0
  %854 = vmatprep.subr.bf16.mxu0 0
  %855 = vmatpush1.bf16.msra.mxu0 0
  %856 = vmatprep.subr.bf16.mxu0 0
  %857 = vmatpush1.bf16.msra.mxu0 0
  %858 = vmatprep.mubr.bf16.mxu0 0
  %859 = vmatmul.mubr.bf16.gmra.mrb[0].mxu0 %v665
  %v860 = vpop.f32.mrb[0].mxu0
  %v861 = vadd.f32 0.0, %v860
  %v862 = vpop.f32.mrb[0].mxu0
  %v863 = vadd.f32 0.0, %v862
  %v864 = vpop.f32.mrb[0].mxu0
  %v865 = vpop.f32.mrb[0].mxu0
  %866 = vdwg.mxu0
  %867 = vmatprep.subr.bf16.mxu0 0
  %868 = vmatpush1.bf16.msra.mxu0 %v780
  %869 = vmatprep.subr.bf16.mxu0 0
  %870 = vmatpush1.bf16.msra.mxu0 %v783
  %871 = vmatprep.subr.bf16.mxu0 0
  %872 = vmatpush1.bf16.msra.mxu0 %v786
  %873 = vmatprep.subr.bf16.mxu0 0
  %874 = vmatpush1.bf16.msra.mxu0 %v789
  %875 = vmatprep.subr.bf16.mxu0 0
  %876 = vmatpush1.bf16.msra.mxu0 %v792
  %877 = vmatprep.subr.bf16.mxu0 0
  %878 = vmatpush1.bf16.msra.mxu0 %v795
  %879 = vmatprep.subr.bf16.mxu0 0
  %880 = vmatpush1.bf16.msra.mxu0 %v798
  %881 = vmatprep.subr.bf16.mxu0 0
  %882 = vmatpush1.bf16.msra.mxu0 %v801
  %883 = vmatprep.subr.bf16.mxu0 0
  %884 = vmatpush1.bf16.msra.mxu0 0
  %885 = vmatprep.subr.bf16.mxu0 0
  %886 = vmatpush1.bf16.msra.mxu0 0
  %887 = vmatprep.subr.bf16.mxu0 0
  %888 = vmatpush1.bf16.msra.mxu0 0
  %889 = vmatprep.subr.bf16.mxu0 0
  %890 = vmatpush1.bf16.msra.mxu0 0
  %891 = vmatprep.subr.bf16.mxu0 0
  %892 = vmatpush1.bf16.msra.mxu0 0
  %893 = vmatprep.subr.bf16.mxu0 0
  %894 = vmatpush1.bf16.msra.mxu0 0
  %895 = vmatprep.subr.bf16.mxu0 0
  %896 = vmatpush1.bf16.msra.mxu0 0
  %897 = vmatprep.subr.bf16.mxu0 0
  %898 = vmatpush1.bf16.msra.mxu0 0
  %899 = vmatprep.mubr.bf16.mxu0 0
  %900 = vmatmul.mubr.bf16.gmra.mrb[0].mxu0 %v665
  %v901 = vpop.f32.mrb[0].mxu0
  %v902 = vadd.f32 0.0, %v901
  %v903 = vpop.f32.mrb[0].mxu0
  %v904 = vpop.f32.mrb[0].mxu0
  %v905 = vpop.f32.mrb[0].mxu0
  %906 = vdwg.mxu0
  %s907 = scalar_lea.vmem [#allocation4], 24
  %v908 = vld [vmem:[%s907] sm:$0xff]
  %v909 = vld [vmem:[%s907 + $0x8] sm:$0xff]
  %v910 = vld [vmem:[%s907 + $0x10] sm:$0xff]
  %v911 = vadd.f32 %v908, %v861
  %v912 = vxor.u32 %v911, 2147483648
  %v913 = vmul.f32 %v912, 1.442695
  %v914 = vpow.pop %v913
  %v915 = vadd.f32 %v914, 1.0
  %v916 = vrcp.pop %v915
  %v917 = vmul.f32 1.0, %v916
  %v918 = vadd.f32 %v909, %v863
  %v919 = vxor.u32 %v918, 2147483648
  %v920 = vmul.f32 %v919, 1.442695
  %v921 = vpow.pop %v920
  %v922 = vadd.f32 %v921, 1.0
  %v923 = vrcp.pop %v922
  %v924 = vmul.f32 1.0, %v923
  %v925 = vadd.f32 %v902, %v394
  %v926 = vmul.f32 %v917, %v925
  %v927 = vadd.f32 %v910, %v926
  %v928 = vtanh.pop %v927
  %v929 = vsub.f32 1.0, %v924
  %v930 = vmul.f32 %v929, %v928
  %v931 = vmul.f32 %v924, %v663
  %v932 = vadd.f32 %v930, %v931
  %s933 = scalar_lea.vmem [#allocation3], 8
  %934 = vst [vmem:[%s933] sm:$0xff] %v932
  %v935 = vpack.c.bf16 %v932, %v932
  %v936 = vld [vmem:[%s3] sm:$0xff]
  %v937 = vld [vmem:[%s3 + $0x8] sm:$0xf]
  %v938 = vld [vmem:[%s3 + $0xc] sm:$0xff]
  %v939 = vld [vmem:[%s3 + $0x14] sm:$0xf]
  %v940 = vld [vmem:[%s3 + $0x18] sm:$0xff]
  %v941 = vld [vmem:[%s3 + $0x20] sm:$0xf]
  %v942 = vld [vmem:[%s3 + $0x24] sm:$0xff]
  %v943 = vld [vmem:[%s3 + $0x2c] sm:$0xf]
  %v944 = vld [vmem:[%s3 + $0x30] sm:$0xff]
  %v945 = vld [vmem:[%s3 + $0x38] sm:$0xf]
  %v946 = vld [vmem:[%s3 + $0x3c] sm:$0xff]
  %v947 = vld [vmem:[%s3 + $0x44] sm:$0xf]
  %v948 = vld [vmem:[%s3 + $0x48] sm:$0xff]
  %v949 = vld [vmem:[%s3 + $0x50] sm:$0xf]
  %v950 = vld [vmem:[%s3 + $0x54] sm:$0xff]
  %v951 = vld [vmem:[%s3 + $0x5c] sm:$0xf]
  %v952 = vld [vmem:[%s3 + $0x60] sm:$0xff]
  %v953 = vld [vmem:[%s3 + $0x68] sm:$0xf]
  %v954 = vld [vmem:[%s3 + $0x6c] sm:$0xff]
  %v955 = vld [vmem:[%s3 + $0x74] sm:$0xf]
  %v956 = vld [vmem:[%s3 + $0x78] sm:$0xff]
  %v957 = vld [vmem:[%s3 + $0x80] sm:$0xf]
  %v958 = vld [vmem:[%s3 + $0x84] sm:$0xff]
  %v959 = vld [vmem:[%s3 + $0x8c] sm:$0xf]
  %v960 = vld [vmem:[%s3 + $0x90] sm:$0xff]
  %v961 = vld [vmem:[%s3 + $0x98] sm:$0xf]
  %v962 = vld [vmem:[%s3 + $0x9c] sm:$0xff]
  %v963 = vld [vmem:[%s3 + $0xa4] sm:$0xf]
  %v964 = vld [vmem:[%s3 + $0xa8] sm:$0xff]
  %v965 = vld [vmem:[%s3 + $0xb0] sm:$0xf]
  %v966 = vld [vmem:[%s3 + $0xb4] sm:$0xff]
  %v967 = vld [vmem:[%s3 + $0xbc] sm:$0xf]
  %v1000 = vunpack.c.l.b16 %v936
  %v1001 = vunpack.c.h.b16 %v936
  %v1002 = vunpack.c.l.b16 %v937
  %v1003 = vunpack.c.l.b16 %v938
  %v1004 = vunpack.c.h.b16 %v938
  %v1005 = vunpack.c.l.b16 %v939
  %v1006 = vunpack.c.l.b16 %v940
  %v1007 = vunpack.c.h.b16 %v940
  %v1008 = vunpack.c.l.b16 %v941
  %v1009 = vunpack.c.l.b16 %v942
  %v1010 = vunpack.c.h.b16 %v942
  %v1011 = vunpack.c.l.b16 %v943
  %v1012 = vunpack.c.l.b16 %v944
  %v1013 = vunpack.c.h.b16 %v944
  %v1014 = vunpack.c.l.b16 %v945
  %v1015 = vunpack.c.l.b16 %v946
  %v1016 = vunpack.c.h.b16 %v946
  %v1017 = vunpack.c.l.b16 %v947
  %v1018 = vunpack.c.l.b16 %v948
  %v1019 = vunpack.c.h.b16 %v948
  %v1020 = vunpack.c.l.b16 %v949
  %v1021 = vunpack.c.l.b16 %v950
  %v1022 = vunpack.c.h.b16 %v950
  %v1023 = vunpack.c.l.b16 %v951
  %v1024 = vunpack.c.l.b16 %v952
  %v1025 = vunpack.c.h.b16 %v952
  %v1026 = vunpack.c.l.b16 %v953
  %v1027 = vunpack.c.l.b16 %v954
  %v1028 = vunpack.c.h.b16 %v954
  %v1029 = vunpack.c.l.b16 %v955
  %v1030 = vunpack.c.l.b16 %v956
  %v1031 = vunpack.c.h.b16 %v956
  %v1032 = vunpack.c.l.b16 %v957
  %v1033 = vunpack.c.l.b16 %v958
  %v1034 = vunpack.c.h.b16 %v958
  %v1035 = vunpack.c.l.b16 %v959
  %v1036 = vunpack.c.l.b16 %v960
  %v1037 = vunpack.c.h.b16 %v960
  %v1038 = vunpack.c.l.b16 %v961
  %v1039 = vunpack.c.l.b16 %v962
  %v1040 = vunpack.c.h.b16 %v962
  %v1041 = vunpack.c.l.b16 %v963
  %v1042 = vunpack.c.l.b16 %v964
  %v1043 = vunpack.c.h.b16 %v964
  %v1044 = vunpack.c.l.b16 %v965
  %v1045 = vunpack.c.l.b16 %v966
  %v1046 = vunpack.c.h.b16 %v966
  %v1047 = vunpack.c.l.b16 %v967
  %v1048 = vpack.c.b16 %v1003, %v1000
  %v1049 = vpack.c.b16 %v1004, %v1001
  %v1050 = vpack.c.b16 %v1005, %v1002
  %v1051 = vpack.c.b16 %v1009, %v1006
  %v1052 = vpack.c.b16 %v1010, %v1007
  %v1053 = vpack.c.b16 %v1011, %v1008
  %v1054 = vpack.c.b16 %v1015, %v1012
  %v1055 = vpack.c.b16 %v1016, %v1013
  %v1056 = vpack.c.b16 %v1017, %v1014
  %v1057 = vpack.c.b16 %v1021, %v1018
  %v1058 = vpack.c.b16 %v1022, %v1019
  %v1059 = vpack.c.b16 %v1023, %v1020
  %v1060 = vpack.c.b16 %v1027, %v1024
  %v1061 = vpack.c.b16 %v1028, %v1025
  %v1062 = vpack.c.b16 %v1029, %v1026
  %v1063 = vpack.c.b16 %v1033, %v1030
  %v1064 = vpack.c.b16 %v1034, %v1031
  %v1065 = vpack.c.b16 %v1035, %v1032
  %v1066 = vpack.c.b16 %v1039, %v1036
  %v1067 = vpack.c.b16 %v1040, %v1037
  %v1068 = vpack.c.b16 %v1041, %v1038
  %v1069 = vpack.c.b16 %v1045, %v1042
  %v1070 = vpack.c.b16 %v1046, %v1043
  %v1071 = vpack.c.b16 %v1047, %v1044
  %1096 = vmatprep.subr.bf16.mxu0 %v1049
  %1097 = vmatpush1.bf16.msra.mxu0 %v1048
  %1098 = vmatprep.subr.bf16.mxu0 %v1052
  %1099 = vmatpush1.bf16.msra.mxu0 %v1051
  %1100 = vmatprep.subr.bf16.mxu0 %v1055
  %1101 = vmatpush1.bf16.msra.mxu0 %v1054
  %1102 = vmatprep.subr.bf16.mxu0 %v1058
  %1103 = vmatpush1.bf16.msra.mxu0 %v1057
  %1104 = vmatprep.subr.bf16.mxu0 %v1061
  %1105 = vmatpush1.bf16.msra.mxu0 %v1060
  %1106 = vmatprep.subr.bf16.mxu0 %v1064
  %1107 = vmatpush1.bf16.msra.mxu0 %v1063
  %1108 = vmatprep.subr.bf16.mxu0 %v1067
  %1109 = vmatpush1.bf16.msra.mxu0 %v1066
  %1110 = vmatprep.subr.bf16.mxu0 %v1070
  %1111 = vmatpush1.bf16.msra.mxu0 %v1069
  %1112 = vmatprep.subr.bf16.mxu0 0
  %1113 = vmatpush1.bf16.msra.mxu0 0
  %1114 = vmatprep.subr.bf16.mxu0 0
  %1115 = vmatpush1.bf16.msra.mxu0 0
  %1116 = vmatprep.subr.bf16.mxu0 0
  %1117 = vmatpush1.bf16.msra.mxu0 0
  %1118 = vmatprep.subr.bf16.mxu0 0
  %1119 = vmatpush1.bf16.msra.mxu0 0
  %1120 = vmatprep.subr.bf16.mxu0 0
  %1121 = vmatpush1.bf16.msra.mxu0 0
  %1122 = vmatprep.subr.bf16.mxu0 0
  %1123 = vmatpush1.bf16.msra.mxu0 0
  %1124 = vmatprep.subr.bf16.mxu0 0
  %1125 = vmatpush1.bf16.msra.mxu0 0
  %1126 = vmatprep.subr.bf16.mxu0 0
  %1127 = vmatpush1.bf16.msra.mxu0 0
  %1128 = vmatprep.mubr.bf16.mxu0 0
  %1129 = vmatmul.mubr.bf16.gmra.mrb[0].mxu0 %v935
  %v1130 = vpop.f32.mrb[0].mxu0
  %v1131 = vadd.f32 0.0, %v1130
  %v1132 = vpop.f32.mrb[0].mxu0
  %v1133 = vadd.f32 0.0, %v1132
  %v1134 = vpop.f32.mrb[0].mxu0
  %v1135 = vpop.f32.mrb[0].mxu0
  %1136 = vdwg.mxu0
  %1137 = vmatprep.subr.bf16.mxu0 0
  %1138 = vmatpush1.bf16.msra.mxu0 %v1050
  %1139 = vmatprep.subr.bf16.mxu0 0
  %1140 = vmatpush1.bf16.msra.mxu0 %v1053
  %1141 = vmatprep.subr.bf16.mxu0 0
  %1142 = vmatpush1.bf16.msra.mxu0 %v1056
  %1143 = vmatprep.subr.bf16.mxu0 0
  %1144 = vmatpush1.bf16.msra.mxu0 %v1059
  %1145 = vmatprep.subr.bf16.mxu0 0
  %1146 = vmatpush1.bf16.msra.mxu0 %v1062
  %1147 = vmatprep.subr.bf16.mxu0 0
  %1148 = vmatpush1.bf16.msra.mxu0 %v1065
  %1149 = vmatprep.subr.bf16.mxu0 0
  %1150 = vmatpush1.bf16.msra.mxu0 %v1068
  %1151 = vmatprep.subr.bf16.mxu0 0
  %1152 = vmatpush1.bf16.msra.mxu0 %v1071
  %1153 = vmatprep.subr.bf16.mxu0 0
  %1154 = vmatpush1.bf16.msra.mxu0 0
  %1155 = vmatprep.subr.bf16.mxu0 0
  %1156 = vmatpush1.bf16.msra.mxu0 0
  %1157 = vmatprep.subr.bf16.mxu0 0
  %1158 = vmatpush1.bf16.msra.mxu0 0
  %1159 = vmatprep.subr.bf16.mxu0 0
  %1160 = vmatpush1.bf16.msra.mxu0 0
  %1161 = vmatprep.subr.bf16.mxu0 0
  %1162 = vmatpush1.bf16.msra.mxu0 0
  %1163 = vmatprep.subr.bf16.mxu0 0
  %1164 = vmatpush1.bf16.msra.mxu0 0
  %1165 = vmatprep.subr.bf16.mxu0 0
  %1166 = vmatpush1.bf16.msra.mxu0 0
  %1167 = vmatprep.subr.bf16.mxu0 0
  %1168 = vmatpush1.bf16.msra.mxu0 0
  %1169 = vmatprep.mubr.bf16.mxu0 0
  %1170 = vmatmul.mubr.bf16.gmra.mrb[0].mxu0 %v935
  %v1171 = vpop.f32.mrb[0].mxu0
  %v1172 = vadd.f32 0.0, %v1171
  %v1173 = vpop.f32.mrb[0].mxu0
  %v1174 = vpop.f32.mrb[0].mxu0
  %v1175 = vpop.f32.mrb[0].mxu0
  %1176 = vdwg.mxu0
  %s1177 = scalar_lea.vmem [#allocation4], 48
  %v1178 = vld [vmem:[%s1177] sm:$0xff]
  %v1179 = vld [vmem:[%s1177 + $0x8] sm:$0xff]
  %v1180 = vld [vmem:[%s1177 + $0x10] sm:$0xff]
  %v1181 = vadd.f32 %v1178, %v1131
  %v1182 = vxor.u32 %v1181, 2147483648
  %v1183 = vmul.f32 %v1182, 1.442695
  %v1184 = vpow.pop %v1183
  %v1185 = vadd.f32 %v1184, 1.0
  %v1186 = vrcp.pop %v1185
  %v1187 = vmul.f32 1.0, %v1186
  %v1188 = vadd.f32 %v1179, %v1133
  %v1189 = vxor.u32 %v1188, 2147483648
  %v1190 = vmul.f32 %v1189, 1.442695
  %v1191 = vpow.pop %v1190
  %v1192 = vadd.f32 %v1191, 1.0
  %v1193 = vrcp.pop %v1192
  %v1194 = vmul.f32 1.0, %v1193
  %v1195 = vadd.f32 %v1172, %v394
  %v1196 = vmul.f32 %v1187, %v1195
  %v1197 = vadd.f32 %v1180, %v1196
  %v1198 = vtanh.pop %v1197
  %v1199 = vsub.f32 1.0, %v1194
  %v1200 = vmul.f32 %v1199, %v1198
  %v1201 = vmul.f32 %v1194, %v932
  %v1202 = vadd.f32 %v1200, %v1201
  %s1203 = scalar_lea.vmem [#allocation3], 16
  %1204 = vst [vmem:[%s1203] sm:$0xff] %v1202
  %v1205 = vpack.c.bf16 %v1202, %v1202
  %v1206 = vld [vmem:[%s3] sm:$0xff]
  %v1207 = vld [vmem:[%s3 + $0x8] sm:$0xf]
  %v1208 = vld [vmem:[%s3 + $0xc] sm:$0xff]
  %v1209 = vld [vmem:[%s3 + $0x14] sm:$0xf]
  %v1210 = vld [vmem:[%s3 + $0x18] sm:$0xff]
  %v1211 = vld [vmem:[%s3 + $0x20] sm:$0xf]
  %v1212 = vld [vmem:[%s3 + $0x24] sm:$0xff]
  %v1213 = vld [vmem:[%s3 + $0x2c] sm:$0xf]
  %v1214 = vld [vmem:[%s3 + $0x30] sm:$0xff]
  %v1215 = vld [vmem:[%s3 + $0x38] sm:$0xf]
  %v1216 = vld [vmem:[%s3 + $0x3c] sm:$0xff]
  %v1217 = vld [vmem:[%s3 + $0x44] sm:$0xf]
  %v1218 = vld [vmem:[%s3 + $0x48] sm:$0xff]
  %v1219 = vld [vmem:[%s3 + $0x50] sm:$0xf]
  %v1220 = vld [vmem:[%s3 + $0x54] sm:$0xff]
  %v1221 = vld [vmem:[%s3 + $0x5c] sm:$0xf]
  %v1222 = vld [vmem:[%s3 + $0x60] sm:$0xff]
  %v1223 = vld [vmem:[%s3 + $0x68] sm:$0xf]
  %v1224 = vld [vmem:[%s3 + $0x6c] sm:$0xff]
  %v1225 = vld [vmem:[%s3 + $0x74] sm:$0xf]
  %v1226 = vld [vmem:[%s3 + $0x78] sm:$0xff]
  %v1227 = vld [vmem:[%s3 + $0x80] sm:$0xf]
  %v1228 = vld [vmem:[%s3 + $0x84] sm:$0xff]
  %v1229 = vld [vmem:[%s3 + $0x8c] sm:$0xf]
  %v1230 = vld [vmem:[%s3 + $0x90] sm:$0xff]
  %v1231 = vld [vmem:[%s3 + $0x98] sm:$0xf]
  %v1232 = vld [vmem:[%s3 + $0x9c] sm:$0xff]
  %v1233 = vld [vmem:[%s3 + $0xa4] sm:$0xf]
  %v1234 = vld [vmem:[%s3 + $0xa8] sm:$0xff]
  %v1235 = vld [vmem:[%s3 + $0xb0] sm:$0xf]
  %v1236 = vld [vmem:[%s3 + $0xb4] sm:$0xff]
  %v1237 = vld [vmem:[%s3 + $0xbc] sm:$0xf]
  %v1270 = vunpack.c.l.b16 %v1206
  %v1271 = vunpack.c.h.b16 %v1206
  %v1272 = vunpack.c.l.b16 %v1207
  %v1273 = vunpack.c.l.b16 %v1208
  %v1274 = vunpack.c.h.b16 %v1208
  %v1275 = vunpack.c.l.b16 %v1209
  %v1276 = vunpack.c.l.b16 %v1210
  %v1277 = vunpack.c.h.b16 %v1210
  %v1278 = vunpack.c.l.b16 %v1211
  %v1279 = vunpack.c.l.b16 %v1212
  %v1280 = vunpack.c.h.b16 %v1212
  %v1281 = vunpack.c.l.b16 %v1213
  %v1282 = vunpack.c.l.b16 %v1214
  %v1283 = vunpack.c.h.b16 %v1214
  %v1284 = vunpack.c.l.b16 %v1215
  %v1285 = vunpack.c.l.b16 %v1216
  %v1286 = vunpack.c.h.b16 %v1216
  %v1287 = vunpack.c.l.b16 %v1217
  %v1288 = vunpack.c.l.b16 %v1218
  %v1289 = vunpack.c.h.b16 %v1218
  %v1290 = vunpack.c.l.b16 %v1219
  %v1291 = vunpack.c.l.b16 %v1220
  %v1292 = vunpack.c.h.b16 %v1220
  %v1293 = vunpack.c.l.b16 %v1221
  %v1294 = vunpack.c.l.b16 %v1222
  %v1295 = vunpack.c.h.b16 %v1222
  %v1296 = vunpack.c.l.b16 %v1223
  %v1297 = vunpack.c.l.b16 %v1224
  %v1298 = vunpack.c.h.b16 %v1224
  %v1299 = vunpack.c.l.b16 %v1225
  %v1300 = vunpack.c.l.b16 %v1226
  %v1301 = vunpack.c.h.b16 %v1226
  %v1302 = vunpack.c.l.b16 %v1227
  %v1303 = vunpack.c.l.b16 %v1228
  %v1304 = vunpack.c.h.b16 %v1228
  %v1305 = vunpack.c.l.b16 %v1229
  %v1306 = vunpack.c.l.b16 %v1230
  %v1307 = vunpack.c.h.b16 %v1230
  %v1308 = vunpack.c.l.b16 %v1231
  %v1309 = vunpack.c.l.b16 %v1232
  %v1310 = vunpack.c.h.b16 %v1232
  %v1311 = vunpack.c.l.b16 %v1233
  %v1312 = vunpack.c.l.b16 %v1234
  %v1313 = vunpack.c.h.b16 %v1234
  %v1314 = vunpack.c.l.b16 %v1235
  %v1315 = vunpack.c.l.b16 %v1236
  %v1316 = vunpack.c.h.b16 %v1236
  %v1317 = vunpack.c.l.b16 %v1237
  %v1318 = vpack.c.b16 %v1273, %v1270
  %v1319 = vpack.c.b16 %v1274, %v1271
  %v1320 = vpack.c.b16 %v1275, %v1272
  %v1321 = vpack.c.b16 %v1279, %v1276
  %v1322 = vpack.c.b16 %v1280, %v1277
  %v1323 = vpack.c.b16 %v1281, %v1278
  %v1324 = vpack.c.b16 %v1285, %v1282
  %v1325 = vpack.c.b16 %v1286, %v1283
  %v1326 = vpack.c.b16 %v1287, %v1284
  %v1327 = vpack.c.b16 %v1291, %v1288
  %v1328 = vpack.c.b16 %v1292, %v1289
  %v1329 = vpack.c.b16 %v1293, %v1290
  %v1330 = vpack.c.b16 %v1297, %v1294
  %v1331 = vpack.c.b16 %v1298, %v1295
  %v1332 = vpack.c.b16 %v1299, %v1296
  %v1333 = vpack.c.b16 %v1303, %v1300
  %v1334 = vpack.c.b16 %v1304, %v1301
  %v1335 = vpack.c.b16 %v1305, %v1302
  %v1336 = vpack.c.b16 %v1309, %v1306
  %v1337 = vpack.c.b16 %v1310, %v1307
  %v1338 = vpack.c.b16 %v1311, %v1308
  %v1339 = vpack.c.b16 %v1315, %v1312
  %v1340 = vpack.c.b16 %v1316, %v1313
  %v1341 = vpack.c.b16 %v1317, %v1314
  %1366 = vmatprep.subr.bf16.mxu0 %v1319
  %1367 = vmatpush1.bf16.msra.mxu0 %v1318
  %1368 = vmatprep.subr.bf16.mxu0 %v1322
  %1369 = vmatpush1.bf16.msra.mxu0 %v1321
  %1370 = vmatprep.subr.bf16.mxu0 %v1325
  %1371 = vmatpush1.bf16.msra.mxu0 %v1324
  %1372 = vmatprep.subr.bf16.mxu0 %v1328
  %1373 = vmatpush1.bf16.msra.mxu0 %v1327
  %1374 = vmatprep.subr.bf16.mxu0 %v1331
  %1375 = vmatpush1.bf16.msra.mxu0 %v1330
  %1376 = vmatprep.subr.bf16.mxu0 %v1334
  %1377 = vmatpush1.bf16.msra.mxu0 %v1333
  %1378 = vmatprep.subr.bf16.mxu0 %v1337
  %1379 = vmatpush1.bf16.msra.mxu0 %v1336
  %1380 = vmatprep.subr.bf16.mxu0 %v1340
  %1381 = vmatpush1.bf16.msra.mxu0 %v1339
  %1382 = vmatprep.subr.bf16.mxu0 0
  %1383 = vmatpush1.bf16.msra.mxu0 0
  %1384 = vmatprep.subr.bf16.mxu0 0
  %1385 = vmatpush1.bf16.msra.mxu0 0
  %1386 = vmatprep.subr.bf16.mxu0 0
  %1387 = vmatpush1.bf16.msra.mxu0 0
  %1388 = vmatprep.subr.bf16.mxu0 0
  %1389 = vmatpush1.bf16.msra.mxu0 0
  %1390 = vmatprep.subr.bf16.mxu0 0
  %1391 = vmatpush1.bf16.msra.mxu0 0
  %1392 = vmatprep.subr.bf16.mxu0 0
  %1393 = vmatpush1.bf16.msra.mxu0 0
  %1394 = vmatprep.subr.bf16.mxu0 0
  %1395 = vmatpush1.bf16.msra.mxu0 0
  %1396 = vmatprep.subr.bf16.mxu0 0
  %1397 = vmatpush1.bf16.msra.mxu0 0
  %1398 = vmatprep.mubr.bf16.mxu0 0
  %1399 = vmatmul.mubr.bf16.gmra.mrb[0].mxu0 %v1205
  %v1400 = vpop.f32.mrb[0].mxu0
  %v1401 = vadd.f32 0.0, %v1400
  %v1402 = vpop.f32.mrb[0].mxu0
  %v1403 = vadd.f32 0.0, %v1402
  %v1404 = vpop.f32.mrb[0].mxu0
  %v1405 = vpop.f32.mrb[0].mxu0
  %1406 = vdwg.mxu0
  %1407 = vmatprep.subr.bf16.mxu0 0
  %1408 = vmatpush1.bf16.msra.mxu0 %v1320
  %1409 = vmatprep.subr.bf16.mxu0 0
  %1410 = vmatpush1.bf16.msra.mxu0 %v1323
  %1411 = vmatprep.subr.bf16.mxu0 0
  %1412 = vmatpush1.bf16.msra.mxu0 %v1326
  %1413 = vmatprep.subr.bf16.mxu0 0
  %1414 = vmatpush1.bf16.msra.mxu0 %v1329
  %1415 = vmatprep.subr.bf16.mxu0 0
  %1416 = vmatpush1.bf16.msra.mxu0 %v1332
  %1417 = vmatprep.subr.bf16.mxu0 0
  %1418 = vmatpush1.bf16.msra.mxu0 %v1335
  %1419 = vmatprep.subr.bf16.mxu0 0
  %1420 = vmatpush1.bf16.msra.mxu0 %v1338
  %1421 = vmatprep.subr.bf16.mxu0 0
  %1422 = vmatpush1.bf16.msra.mxu0 %v1341
  %1423 = vmatprep.subr.bf16.mxu0 0
  %1424 = vmatpush1.bf16.msra.mxu0 0
  %1425 = vmatprep.subr.bf16.mxu0 0
  %1426 = vmatpush1.bf16.msra.mxu0 0
  %1427 = vmatprep.subr.bf16.mxu0 0
  %1428 = vmatpush1.bf16.msra.mxu0 0
  %1429 = vmatprep.subr.bf16.mxu0 0
  %1430 = vmatpush1.bf16.msra.mxu0 0
  %1431 = vmatprep.subr.bf16.mxu0 0
  %1432 = vmatpush1.bf16.msra.mxu0 0
  %1433 = vmatprep.subr.bf16.mxu0 0
  %1434 = vmatpush1.bf16.msra.mxu0 0
  %1435 = vmatprep.subr.bf16.mxu0 0
  %1436 = vmatpush1.bf16.msra.mxu0 0
  %1437 = vmatprep.subr.bf16.mxu0 0
  %1438 = vmatpush1.bf16.msra.mxu0 0
  %1439 = vmatprep.mubr.bf16.mxu0 0
  %1440 = vmatmul.mubr.bf16.gmra.mrb[0].mxu0 %v1205
  %v1441 = vpop.f32.mrb[0].mxu0
  %v1442 = vadd.f32 0.0, %v1441
  %v1443 = vpop.f32.mrb[0].mxu0
  %v1444 = vpop.f32.mrb[0].mxu0
  %v1445 = vpop.f32.mrb[0].mxu0
  %1446 = vdwg.mxu0
  %s1447 = scalar_lea.vmem [#allocation4], 72
  %v1448 = vld [vmem:[%s1447] sm:$0xff]
  %v1449 = vld [vmem:[%s1447 + $0x8] sm:$0xff]
  %v1450 = vld [vmem:[%s1447 + $0x10] sm:$0xff]
  %v1451 = vadd.f32 %v1448, %v1401
  %v1452 = vxor.u32 %v1451, 2147483648
  %v1453 = vmul.f32 %v1452, 1.442695
  %v1454 = vpow.pop %v1453
  %v1455 = vadd.f32 %v1454, 1.0
  %v1456 = vrcp.pop %v1455
  %v1457 = vmul.f32 1.0, %v1456
  %v1458 = vadd.f32 %v1449, %v1403
  %v1459 = vxor.u32 %v1458, 2147483648
  %v1460 = vmul.f32 %v1459, 1.442695
  %v1461 = vpow.pop %v1460
  %v1462 = vadd.f32 %v1461, 1.0
  %v1463 = vrcp.pop %v1462
  %v1464 = vmul.f32 1.0, %v1463
  %v1465 = vadd.f32 %v1442, %v394
  %v1466 = vmul.f32 %v1457, %v1465
  %v1467 = vadd.f32 %v1450, %v1466
  %v1468 = vtanh.pop %v1467
  %v1469 = vsub.f32 1.0, %v1464
  %v1470 = vmul.f32 %v1469, %v1468
  %v1471 = vmul.f32 %v1464, %v1202
  %v1472 = vadd.f32 %v1470, %v1471
  %s1473 = scalar_lea.vmem [#allocation3], 24
  %1474 = vst [vmem:[%s1473] sm:$0xff] %v1472
  %v1475 = vpack.c.bf16 %v1472, %v1472
  %v1476 = vld [vmem:[%s3] sm:$0xff]
  %v1477 = vld [vmem:[%s3 + $0x8] sm:$0xf]
  %v1478 = vld [vmem:[%s3 + $0xc] sm:$0xff]
  %v1479 = vld [vmem:[%s3 + $0x14] sm:$0xf]
  %v1480 = vld [vmem:[%s3 + $0x18] sm:$0xff]
  %v1481 = vld [vmem:[%s3 + $0x20] sm:$0xf]
  %v1482 = vld [vmem:[%s3 + $0x24] sm:$0xff]
  %v1483 = vld [vmem:[%s3 + $0x2c] sm:$0xf]
  %v1484 = vld [vmem:[%s3 + $0x30] sm:$0xff]
  %v1485 = vld [vmem:[%s3 + $0x38] sm:$0xf]
  %v1486 = vld [vmem:[%s3 + $0x3c] sm:$0xff]
  %v1487 = vld [vmem:[%s3 + $0x44] sm:$0xf]
  %v1488 = vld [vmem:[%s3 + $0x48] sm:$0xff]
  %v1489 = vld [vmem:[%s3 + $0x50] sm:$0xf]
  %v1490 = vld [vmem:[%s3 + $0x54] sm:$0xff]
  %v1491 = vld [vmem:[%s3 + $0x5c] sm:$0xf]
  %v1492 = vld [vmem:[%s3 + $0x60] sm:$0xff]
  %v1493 = vld [vmem:[%s3 + $0x68] sm:$0xf]
  %v1494 = vld [vmem:[%s3 + $0x6c] sm:$0xff]
  %v1495 = vld [vmem:[%s3 + $0x74] sm:$0xf]
  %v1496 = vld [vmem:[%s3 + $0x78] sm:$0xff]
  %v1497 = vld [vmem:[%s3 + $0x80] sm:$0xf]
  %v1498 = vld [vmem:[%s3 + $0x84] sm:$0xff]
  %v1499 = vld [vmem:[%s3 + $0x8c] sm:$0xf]
  %v1500 = vld [vmem:[%s3 + $0x90] sm:$0xff]
  %v1501 = vld [vmem:[%s3 + $0x98] sm:$0xf]
  %v1502 = vld [vmem:[%s3 + $0x9c] sm:$0xff]
  %v1503 = vld [vmem:[%s3 + $0xa4] sm:$0xf]
  %v1504 = vld [vmem:[%s3 + $0xa8] sm:$0xff]
  %v1505 = vld [vmem:[%s3 + $0xb0] sm:$0xf]
  %v1506 = vld [vmem:[%s3 + $0xb4] sm:$0xff]
  %v1507 = vld [vmem:[%s3 + $0xbc] sm:$0xf]
  %v1540 = vunpack.c.l.b16 %v1476
  %v1541 = vunpack.c.h.b16 %v1476
  %v1542 = vunpack.c.l.b16 %v1477
  %v1543 = vunpack.c.l.b16 %v1478
  %v1544 = vunpack.c.h.b16 %v1478
  %v1545 = vunpack.c.l.b16 %v1479
  %v1546 = vunpack.c.l.b16 %v1480
  %v1547 = vunpack.c.h.b16 %v1480
  %v1548 = vunpack.c.l.b16 %v1481
  %v1549 = vunpack.c.l.b16 %v1482
  %v1550 = vunpack.c.h.b16 %v1482
  %v1551 = vunpack.c.l.b16 %v1483
  %v1552 = vunpack.c.l.b16 %v1484
  %v1553 = vunpack.c.h.b16 %v1484
  %v1554 = vunpack.c.l.b16 %v1485
  %v1555 = vunpack.c.l.b16 %v1486
  %v1556 = vunpack.c.h.b16 %v1486
  %v1557 = vunpack.c.l.b16 %v1487
  %v1558 = vunpack.c.l.b16 %v1488
  %v1559 = vunpack.c.h.b16 %v1488
  %v1560 = vunpack.c.l.b16 %v1489
  %v1561 = vunpack.c.l.b16 %v1490
  %v1562 = vunpack.c.h.b16 %v1490
  %v1563 = vunpack.c.l.b16 %v1491
  %v1564 = vunpack.c.l.b16 %v1492
  %v1565 = vunpack.c.h.b16 %v1492
  %v1566 = vunpack.c.l.b16 %v1493
  %v1567 = vunpack.c.l.b16 %v1494
  %v1568 = vunpack.c.h.b16 %v1494
  %v1569 = vunpack.c.l.b16 %v1495
  %v1570 = vunpack.c.l.b16 %v1496
  %v1571 = vunpack.c.h.b16 %v1496
  %v1572 = vunpack.c.l.b16 %v1497
  %v1573 = vunpack.c.l.b16 %v1498
  %v1574 = vunpack.c.h.b16 %v1498
  %v1575 = vunpack.c.l.b16 %v1499
  %v1576 = vunpack.c.l.b16 %v1500
  %v1577 = vunpack.c.h.b16 %v1500
  %v1578 = vunpack.c.l.b16 %v1501
  %v1579 = vunpack.c.l.b16 %v1502
  %v1580 = vunpack.c.h.b16 %v1502
  %v1581 = vunpack.c.l.b16 %v1503
  %v1582 = vunpack.c.l.b16 %v1504
  %v1583 = vunpack.c.h.b16 %v1504
  %v1584 = vunpack.c.l.b16 %v1505
  %v1585 = vunpack.c.l.b16 %v1506
  %v1586 = vunpack.c.h.b16 %v1506
  %v1587 = vunpack.c.l.b16 %v1507
  %v1588 = vpack.c.b16 %v1543, %v1540
  %v1589 = vpack.c.b16 %v1544, %v1541
  %v1590 = vpack.c.b16 %v1545, %v1542
  %v1591 = vpack.c.b16 %v1549, %v1546
  %v1592 = vpack.c.b16 %v1550, %v1547
  %v1593 = vpack.c.b16 %v1551, %v1548
  %v1594 = vpack.c.b16 %v1555, %v1552
  %v1595 = vpack.c.b16 %v1556, %v1553
  %v1596 = vpack.c.b16 %v1557, %v1554
  %v1597 = vpack.c.b16 %v1561, %v1558
  %v1598 = vpack.c.b16 %v1562, %v1559
  %v1599 = vpack.c.b16 %v1563, %v1560
  %v1600 = vpack.c.b16 %v1567, %v1564
  %v1601 = vpack.c.b16 %v1568, %v1565
  %v1602 = vpack.c.b16 %v1569, %v1566
  %v1603 = vpack.c.b16 %v1573, %v1570
  %v1604 = vpack.c.b16 %v1574, %v1571
  %v1605 = vpack.c.b16 %v1575, %v1572
  %v1606 = vpack.c.b16 %v1579, %v1576
  %v1607 = vpack.c.b16 %v1580, %v1577
  %v1608 = vpack.c.b16 %v1581, %v1578
  %v1609 = vpack.c.b16 %v1585, %v1582
  %v1610 = vpack.c.b16 %v1586, %v1583
  %v1611 = vpack.c.b16 %v1587, %v1584
  %1636 = vmatprep.subr.bf16.mxu0 %v1589
  %1637 = vmatpush1.bf16.msra.mxu0 %v1588
  %1638 = vmatprep.subr.bf16.mxu0 %v1592
  %1639 = vmatpush1.bf16.msra.mxu0 %v1591
  %1640 = vmatprep.subr.bf16.mxu0 %v1595
  %1641 = vmatpush1.bf16.msra.mxu0 %v1594
  %1642 = vmatprep.subr.bf16.mxu0 %v1598
  %1643 = vmatpush1.bf16.msra.mxu0 %v1597
  %1644 = vmatprep.subr.bf16.mxu0 %v1601
  %1645 = vmatpush1.bf16.msra.mxu0 %v1600
  %1646 = vmatprep.subr.bf16.mxu0 %v1604
  %1647 = vmatpush1.bf16.msra.mxu0 %v1603
  %1648 = vmatprep.subr.bf16.mxu0 %v1607
  %1649 = vmatpush1.bf16.msra.mxu0 %v1606
  %1650 = vmatprep.subr.bf16.mxu0 %v1610
  %1651 = vmatpush1.bf16.msra.mxu0 %v1609
  %1652 = vmatprep.subr.bf16.mxu0 0
  %1653 = vmatpush1.bf16.msra.mxu0 0
  %1654 = vmatprep.subr.bf16.mxu0 0
  %1655 = vmatpush1.bf16.msra.mxu0 0
  %1656 = vmatprep.subr.bf16.mxu0 0
  %1657 = vmatpush1.bf16.msra.mxu0 0
  %1658 = vmatprep.subr.bf16.mxu0 0
  %1659 = vmatpush1.bf16.msra.mxu0 0
  %1660 = vmatprep.subr.bf16.mxu0 0
  %1661 = vmatpush1.bf16.msra.mxu0 0
  %1662 = vmatprep.subr.bf16.mxu0 0
  %1663 = vmatpush1.bf16.msra.mxu0 0
  %1664 = vmatprep.subr.bf16.mxu0 0
  %1665 = vmatpush1.bf16.msra.mxu0 0
  %1666 = vmatprep.subr.bf16.mxu0 0
  %1667 = vmatpush1.bf16.msra.mxu0 0
  %1668 = vmatprep.mubr.bf16.mxu0 0
  %1669 = vmatmul.mubr.bf16.gmra.mrb[0].mxu0 %v1475
  %v1670 = vpop.f32.mrb[0].mxu0
  %v1671 = vadd.f32 0.0, %v1670
  %v1672 = vpop.f32.mrb[0].mxu0
  %v1673 = vadd.f32 0.0, %v1672
  %v1674 = vpop.f32.mrb[0].mxu0
  %v1675 = vpop.f32.mrb[0].mxu0
  %1676 = vdwg.mxu0
  %1677 = vmatprep.subr.bf16.mxu0 0
  %1678 = vmatpush1.bf16.msra.mxu0 %v1590
  %1679 = vmatprep.subr.bf16.mxu0 0
  %1680 = vmatpush1.bf16.msra.mxu0 %v1593
  %1681 = vmatprep.subr.bf16.mxu0 0
  %1682 = vmatpush1.bf16.msra.mxu0 %v1596
  %1683 = vmatprep.subr.bf16.mxu0 0
  %1684 = vmatpush1.bf16.msra.mxu0 %v1599
  %1685 = vmatprep.subr.bf16.mxu0 0
  %1686 = vmatpush1.bf16.msra.mxu0 %v1602
  %1687 = vmatprep.subr.bf16.mxu0 0
  %1688 = vmatpush1.bf16.msra.mxu0 %v1605
  %1689 = vmatprep.subr.bf16.mxu0 0
  %1690 = vmatpush1.bf16.msra.mxu0 %v1608
  %1691 = vmatprep.subr.bf16.mxu0 0
  %1692 = vmatpush1.bf16.msra.mxu0 %v1611
  %1693 = vmatprep.subr.bf16.mxu0 0
  %1694 = vmatpush1.bf16.msra.mxu0 0
  %1695 = vmatprep.subr.bf16.mxu0 0
  %1696 = vmatpush1.bf16.msra.mxu0 0
  %1697 = vmatprep.subr.bf16.mxu0 0
  %1698 = vmatpush1.bf16.msra.mxu0 0
  %1699 = vmatprep.subr.bf16.mxu0 0
  %1700 = vmatpush1.bf16.msra.mxu0 0
  %1701 = vmatprep.subr.bf16.mxu0 0
  %1702 = vmatpush1.bf16.msra.mxu0 0
  %1703 = vmatprep.subr.bf16.mxu0 0
  %1704 = vmatpush1.bf16.msra.mxu0 0
  %1705 = vmatprep.subr.bf16.mxu0 0
  %1706 = vmatpush1.bf16.msra.mxu0 0
  %1707 = vmatprep.subr.bf16.mxu0 0
  %1708 = vmatpush1.bf16.msra.mxu0 0
  %1709 = vmatprep.mubr.bf16.mxu0 0
  %1710 = vmatmul.mubr.bf16.gmra.mrb[0].mxu0 %v1475
  %v1711 = vpop.f32.mrb[0].mxu0
  %v1712 = vadd.f32 0.0, %v1711
  %v1713 = vpop.f32.mrb[0].mxu0
  %v1714 = vpop.f32.mrb[0].mxu0
  %v1715 = vpop.f32.mrb[0].mxu0
  %1716 = vdwg.mxu0
  %s1717 = scalar_lea.vmem [#allocation4], 96
  %v1718 = vld [vmem:[%s1717] sm:$0xff]
  %v1719 = vld [vmem:[%s1717 + $0x8] sm:$0xff]
  %v1720 = vld [vmem:[%s1717 + $0x10] sm:$0xff]
  %v1721 = vadd.f32 %v1718, %v1671
  %v1722 = vxor.u32 %v1721, 2147483648
  %v1723 = vmul.f32 %v1722, 1.442695
  %v1724 = vpow.pop %v1723
  %v1725 = vadd.f32 %v1724, 1.0
  %v1726 = vrcp.pop %v1725
  %v1727 = vmul.f32 1.0, %v1726
  %v1728 = vadd.f32 %v1719, %v1673
  %v1729 = vxor.u32 %v1728, 2147483648
  %v1730 = vmul.f32 %v1729, 1.442695
  %v1731 = vpow.pop %v1730
  %v1732 = vadd.f32 %v1731, 1.0
  %v1733 = vrcp.pop %v1732
  %v1734 = vmul.f32 1.0, %v1733
  %v1735 = vadd.f32 %v1712, %v394
  %v1736 = vmul.f32 %v1727, %v1735
  %v1737 = vadd.f32 %v1720, %v1736
  %v1738 = vtanh.pop %v1737
  %v1739 = vsub.f32 1.0, %v1734
  %v1740 = vmul.f32 %v1739, %v1738
  %v1741 = vmul.f32 %v1734, %v1472
  %v1742 = vadd.f32 %v1740, %v1741
  %s1743 = scalar_lea.vmem [#allocation3], 32
  %1744 = vst [vmem:[%s1743] sm:$0xff] %v1742
  %v1745 = vpack.c.bf16 %v1742, %v1742
  %v1746 = vld [vmem:[%s3] sm:$0xff]
  %v1747 = vld [vmem:[%s3 + $0x8] sm:$0xf]
  %v1748 = vld [vmem:[%s3 + $0xc] sm:$0xff]
  %v1749 = vld [vmem:[%s3 + $0x14] sm:$0xf]
  %v1750 = vld [vmem:[%s3 + $0x18] sm:$0xff]
  %v1751 = vld [vmem:[%s3 + $0x20] sm:$0xf]
  %v1752 = vld [vmem:[%s3 + $0x24] sm:$0xff]
  %v1753 = vld [vmem:[%s3 + $0x2c] sm:$0xf]
  %v1754 = vld [vmem:[%s3 + $0x30] sm:$0xff]
  %v1755 = vld [vmem:[%s3 + $0x38] sm:$0xf]
  %v1756 = vld [vmem:[%s3 + $0x3c] sm:$0xff]
  %v1757 = vld [vmem:[%s3 + $0x44] sm:$0xf]
  %v1758 = vld [vmem:[%s3 + $0x48] sm:$0xff]
  %v1759 = vld [vmem:[%s3 + $0x50] sm:$0xf]
  %v1760 = vld [vmem:[%s3 + $0x54] sm:$0xff]
  %v1761 = vld [vmem:[%s3 + $0x5c] sm:$0xf]
  %v1762 = vld [vmem:[%s3 + $0x60] sm:$0xff]
  %v1763 = vld [vmem:[%s3 + $0x68] sm:$0xf]
  %v1764 = vld [vmem:[%s3 + $0x6c] sm:$0xff]
  %v1765 = vld [vmem:[%s3 + $0x74] sm:$0xf]
  %v1766 = vld [vmem:[%s3 + $0x78] sm:$0xff]
  %v1767 = vld [vmem:[%s3 + $0x80] sm:$0xf]
  %v1768 = vld [vmem:[%s3 + $0x84] sm:$0xff]
  %v1769 = vld [vmem:[%s3 + $0x8c] sm:$0xf]
  %v1770 = vld [vmem:[%s3 + $0x90] sm:$0xff]
  %v1771 = vld [vmem:[%s3 + $0x98] sm:$0xf]
  %v1772 = vld [vmem:[%s3 + $0x9c] sm:$0xff]
  %v1773 = vld [vmem:[%s3 + $0xa4] sm:$0xf]
  %v1774 = vld [vmem:[%s3 + $0xa8] sm:$0xff]
  %v1775 = vld [vmem:[%s3 + $0xb0] sm:$0xf]
  %v1776 = vld [vmem:[%s3 + $0xb4] sm:$0xff]
  %v1777 = vld [vmem:[%s3 + $0xbc] sm:$0xf]
  %v1810 = vunpack.c.l.b16 %v1746
  %v1811 = vunpack.c.h.b16 %v1746
  %v1812 = vunpack.c.l.b16 %v1747
  %v1813 = vunpack.c.l.b16 %v1748
  %v1814 = vunpack.c.h.b16 %v1748
  %v1815 = vunpack.c.l.b16 %v1749
  %v1816 = vunpack.c.l.b16 %v1750
  %v1817 = vunpack.c.h.b16 %v1750
  %v1818 = vunpack.c.l.b16 %v1751
  %v1819 = vunpack.c.l.b16 %v1752
  %v1820 = vunpack.c.h.b16 %v1752
  %v1821 = vunpack.c.l.b16 %v1753
  %v1822 = vunpack.c.l.b16 %v1754
  %v1823 = vunpack.c.h.b16 %v1754
  %v1824 = vunpack.c.l.b16 %v1755
  %v1825 = vunpack.c.l.b16 %v1756
  %v1826 = vunpack.c.h.b16 %v1756
  %v1827 = vunpack.c.l.b16 %v1757
  %v1828 = vunpack.c.l.b16 %v1758
  %v1829 = vunpack.c.h.b16 %v1758
  %v1830 = vunpack.c.l.b16 %v1759
  %v1831 = vunpack.c.l.b16 %v1760
  %v1832 = vunpack.c.h.b16 %v1760
  %v1833 = vunpack.c.l.b16 %v1761
  %v1834 = vunpack.c.l.b16 %v1762
  %v1835 = vunpack.c.h.b16 %v1762
  %v1836 = vunpack.c.l.b16 %v1763
  %v1837 = vunpack.c.l.b16 %v1764
  %v1838 = vunpack.c.h.b16 %v1764
  %v1839 = vunpack.c.l.b16 %v1765
  %v1840 = vunpack.c.l.b16 %v1766
  %v1841 = vunpack.c.h.b16 %v1766
  %v1842 = vunpack.c.l.b16 %v1767
  %v1843 = vunpack.c.l.b16 %v1768
  %v1844 = vunpack.c.h.b16 %v1768
  %v1845 = vunpack.c.l.b16 %v1769
  %v1846 = vunpack.c.l.b16 %v1770
  %v1847 = vunpack.c.h.b16 %v1770
  %v1848 = vunpack.c.l.b16 %v1771
  %v1849 = vunpack.c.l.b16 %v1772
  %v1850 = vunpack.c.h.b16 %v1772
  %v1851 = vunpack.c.l.b16 %v1773
  %v1852 = vunpack.c.l.b16 %v1774
  %v1853 = vunpack.c.h.b16 %v1774
  %v1854 = vunpack.c.l.b16 %v1775
  %v1855 = vunpack.c.l.b16 %v1776
  %v1856 = vunpack.c.h.b16 %v1776
  %v1857 = vunpack.c.l.b16 %v1777
  %v1858 = vpack.c.b16 %v1813, %v1810
  %v1859 = vpack.c.b16 %v1814, %v1811
  %v1860 = vpack.c.b16 %v1815, %v1812
  %v1861 = vpack.c.b16 %v1819, %v1816
  %v1862 = vpack.c.b16 %v1820, %v1817
  %v1863 = vpack.c.b16 %v1821, %v1818
  %v1864 = vpack.c.b16 %v1825, %v1822
  %v1865 = vpack.c.b16 %v1826, %v1823
  %v1866 = vpack.c.b16 %v1827, %v1824
  %v1867 = vpack.c.b16 %v1831, %v1828
  %v1868 = vpack.c.b16 %v1832, %v1829
  %v1869 = vpack.c.b16 %v1833, %v1830
  %v1870 = vpack.c.b16 %v1837, %v1834
  %v1871 = vpack.c.b16 %v1838, %v1835
  %v1872 = vpack.c.b16 %v1839, %v1836
  %v1873 = vpack.c.b16 %v1843, %v1840
  %v1874 = vpack.c.b16 %v1844, %v1841
  %v1875 = vpack.c.b16 %v1845, %v1842
  %v1876 = vpack.c.b16 %v1849, %v1846
  %v1877 = vpack.c.b16 %v1850, %v1847
  %v1878 = vpack.c.b16 %v1851, %v1848
  %v1879 = vpack.c.b16 %v1855, %v1852
  %v1880 = vpack.c.b16 %v1856, %v1853
  %v1881 = vpack.c.b16 %v1857, %v1854
  %1906 = vmatprep.subr.bf16.mxu0 %v1859
  %1907 = vmatpush1.bf16.msra.mxu0 %v1858
  %1908 = vmatprep.subr.bf16.mxu0 %v1862
  %1909 = vmatpush1.bf16.msra.mxu0 %v1861
  %1910 = vmatprep.subr.bf16.mxu0 %v1865
  %1911 = vmatpush1.bf16.msra.mxu0 %v1864
  %1912 = vmatprep.subr.bf16.mxu0 %v1868
  %1913 = vmatpush1.bf16.msra.mxu0 %v1867
  %1914 = vmatprep.subr.bf16.mxu0 %v1871
  %1915 = vmatpush1.bf16.msra.mxu0 %v1870
  %1916 = vmatprep.subr.bf16.mxu0 %v1874
  %1917 = vmatpush1.bf16.msra.mxu0 %v1873
  %1918 = vmatprep.subr.bf16.mxu0 %v1877
  %1919 = vmatpush1.bf16.msra.mxu0 %v1876
  %1920 = vmatprep.subr.bf16.mxu0 %v1880
  %1921 = vmatpush1.bf16.msra.mxu0 %v1879
  %1922 = vmatprep.subr.bf16.mxu0 0
  %1923 = vmatpush1.bf16.msra.mxu0 0
  %1924 = vmatprep.subr.bf16.mxu0 0
  %1925 = vmatpush1.bf16.msra.mxu0 0
  %1926 = vmatprep.subr.bf16.mxu0 0
  %1927 = vmatpush1.bf16.msra.mxu0 0
  %1928 = vmatprep.subr.bf16.mxu0 0
  %1929 = vmatpush1.bf16.msra.mxu0 0
  %1930 = vmatprep.subr.bf16.mxu0 0
  %1931 = vmatpush1.bf16.msra.mxu0 0
  %1932 = vmatprep.subr.bf16.mxu0 0
  %1933 = vmatpush1.bf16.msra.mxu0 0
  %1934 = vmatprep.subr.bf16.mxu0 0
  %1935 = vmatpush1.bf16.msra.mxu0 0
  %1936 = vmatprep.subr.bf16.mxu0 0
  %1937 = vmatpush1.bf16.msra.mxu0 0
  %1938 = vmatprep.mubr.bf16.mxu0 0
  %1939 = vmatmul.mubr.bf16.gmra.mrb[0].mxu0 %v1745
  %v1940 = vpop.f32.mrb[0].mxu0
  %v1941 = vadd.f32 0.0, %v1940
  %v1942 = vpop.f32.mrb[0].mxu0
  %v1943 = vadd.f32 0.0, %v1942
  %v1944 = vpop.f32.mrb[0].mxu0
  %v1945 = vpop.f32.mrb[0].mxu0
  %1946 = vdwg.mxu0
  %1947 = vmatprep.subr.bf16.mxu0 0
  %1948 = vmatpush1.bf16.msra.mxu0 %v1860
  %1949 = vmatprep.subr.bf16.mxu0 0
  %1950 = vmatpush1.bf16.msra.mxu0 %v1863
  %1951 = vmatprep.subr.bf16.mxu0 0
  %1952 = vmatpush1.bf16.msra.mxu0 %v1866
  %1953 = vmatprep.subr.bf16.mxu0 0
  %1954 = vmatpush1.bf16.msra.mxu0 %v1869
  %1955 = vmatprep.subr.bf16.mxu0 0
  %1956 = vmatpush1.bf16.msra.mxu0 %v1872
  %1957 = vmatprep.subr.bf16.mxu0 0
  %1958 = vmatpush1.bf16.msra.mxu0 %v1875
  %1959 = vmatprep.subr.bf16.mxu0 0
  %1960 = vmatpush1.bf16.msra.mxu0 %v1878
  %1961 = vmatprep.subr.bf16.mxu0 0
  %1962 = vmatpush1.bf16.msra.mxu0 %v1881
  %1963 = vmatprep.subr.bf16.mxu0 0
  %1964 = vmatpush1.bf16.msra.mxu0 0
  %1965 = vmatprep.subr.bf16.mxu0 0
  %1966 = vmatpush1.bf16.msra.mxu0 0
  %1967 = vmatprep.subr.bf16.mxu0 0
  %1968 = vmatpush1.bf16.msra.mxu0 0
  %1969 = vmatprep.subr.bf16.mxu0 0
  %1970 = vmatpush1.bf16.msra.mxu0 0
  %1971 = vmatprep.subr.bf16.mxu0 0
  %1972 = vmatpush1.bf16.msra.mxu0 0
  %1973 = vmatprep.subr.bf16.mxu0 0
  %1974 = vmatpush1.bf16.msra.mxu0 0
  %1975 = vmatprep.subr.bf16.mxu0 0
  %1976 = vmatpush1.bf16.msra.mxu0 0
  %1977 = vmatprep.subr.bf16.mxu0 0
  %1978 = vmatpush1.bf16.msra.mxu0 0
  %1979 = vmatprep.mubr.bf16.mxu0 0
  %1980 = vmatmul.mubr.bf16.gmra.mrb[0].mxu0 %v1745
  %v1981 = vpop.f32.mrb[0].mxu0
  %v1982 = vadd.f32 0.0, %v1981
  %v1983 = vpop.f32.mrb[0].mxu0
  %v1984 = vpop.f32.mrb[0].mxu0
  %v1985 = vpop.f32.mrb[0].mxu0
  %1986 = vdwg.mxu0
  %s1987 = scalar_lea.vmem [#allocation4], 120
  %v1988 = vld [vmem:[%s1987] sm:$0xff]
  %v1989 = vld [vmem:[%s1987 + $0x8] sm:$0xff]
  %v1990 = vld [vmem:[%s1987 + $0x10] sm:$0xff]
  %v1991 = vadd.f32 %v1988, %v1941
  %v1992 = vxor.u32 %v1991, 2147483648
  %v1993 = vmul.f32 %v1992, 1.442695
  %v1994 = vpow.pop %v1993
  %v1995 = vadd.f32 %v1994, 1.0
  %v1996 = vrcp.pop %v1995
  %v1997 = vmul.f32 1.0, %v1996
  %v1998 = vadd.f32 %v1989, %v1943
  %v1999 = vxor.u32 %v1998, 2147483648
  %v2000 = vmul.f32 %v1999, 1.442695
  %v2001 = vpow.pop %v2000
  %v2002 = vadd.f32 %v2001, 1.0
  %v2003 = vrcp.pop %v2002
  %v2004 = vmul.f32 1.0, %v2003
  %v2005 = vadd.f32 %v1982, %v394
  %v2006 = vmul.f32 %v1997, %v2005
  %v2007 = vadd.f32 %v1990, %v2006
  %v2008 = vtanh.pop %v2007
  %v2009 = vsub.f32 1.0, %v2004
  %v2010 = vmul.f32 %v2009, %v2008
  %v2011 = vmul.f32 %v2004, %v1742
  %v2012 = vadd.f32 %v2010, %v2011
  %s2013 = scalar_lea.vmem [#allocation3], 40
  %2014 = vst [vmem:[%s2013] sm:$0xff] %v2012
  %v2015 = vpack.c.bf16 %v2012, %v2012
  %v2016 = vld [vmem:[%s3] sm:$0xff]
  %v2017 = vld [vmem:[%s3 + $0x8] sm:$0xf]
  %v2018 = vld [vmem:[%s3 + $0xc] sm:$0xff]
  %v2019 = vld [vmem:[%s3 + $0x14] sm:$0xf]
  %v2020 = vld [vmem:[%s3 + $0x18] sm:$0xff]
  %v2021 = vld [vmem:[%s3 + $0x20] sm:$0xf]
  %v2022 = vld [vmem:[%s3 + $0x24] sm:$0xff]
  %v2023 = vld [vmem:[%s3 + $0x2c] sm:$0xf]
  %v2024 = vld [vmem:[%s3 + $0x30] sm:$0xff]
  %v2025 = vld [vmem:[%s3 + $0x38] sm:$0xf]
  %v2026 = vld [vmem:[%s3 + $0x3c] sm:$0xff]
  %v2027 = vld [vmem:[%s3 + $0x44] sm:$0xf]
  %v2028 = vld [vmem:[%s3 + $0x48] sm:$0xff]
  %v2029 = vld [vmem:[%s3 + $0x50] sm:$0xf]
  %v2030 = vld [vmem:[%s3 + $0x54] sm:$0xff]
  %v2031 = vld [vmem:[%s3 + $0x5c] sm:$0xf]
  %v2032 = vld [vmem:[%s3 + $0x60] sm:$0xff]
  %v2033 = vld [vmem:[%s3 + $0x68] sm:$0xf]
  %v2034 = vld [vmem:[%s3 + $0x6c] sm:$0xff]
  %v2035 = vld [vmem:[%s3 + $0x74] sm:$0xf]
  %v2036 = vld [vmem:[%s3 + $0x78] sm:$0xff]
  %v2037 = vld [vmem:[%s3 + $0x80] sm:$0xf]
  %v2038 = vld [vmem:[%s3 + $0x84] sm:$0xff]
  %v2039 = vld [vmem:[%s3 + $0x8c] sm:$0xf]
  %v2040 = vld [vmem:[%s3 + $0x90] sm:$0xff]
  %v2041 = vld [vmem:[%s3 + $0x98] sm:$0xf]
  %v2042 = vld [vmem:[%s3 + $0x9c] sm:$0xff]
  %v2043 = vld [vmem:[%s3 + $0xa4] sm:$0xf]
  %v2044 = vld [vmem:[%s3 + $0xa8] sm:$0xff]
  %v2045 = vld [vmem:[%s3 + $0xb0] sm:$0xf]
  %v2046 = vld [vmem:[%s3 + $0xb4] sm:$0xff]
  %v2047 = vld [vmem:[%s3 + $0xbc] sm:$0xf]
  %v2080 = vunpack.c.l.b16 %v2016
  %v2081 = vunpack.c.h.b16 %v2016
  %v2082 = vunpack.c.l.b16 %v2017
  %v2083 = vunpack.c.l.b16 %v2018
  %v2084 = vunpack.c.h.b16 %v2018
  %v2085 = vunpack.c.l.b16 %v2019
  %v2086 = vunpack.c.l.b16 %v2020
  %v2087 = vunpack.c.h.b16 %v2020
  %v2088 = vunpack.c.l.b16 %v2021
  %v2089 = vunpack.c.l.b16 %v2022
  %v2090 = vunpack.c.h.b16 %v2022
  %v2091 = vunpack.c.l.b16 %v2023
  %v2092 = vunpack.c.l.b16 %v2024
  %v2093 = vunpack.c.h.b16 %v2024
  %v2094 = vunpack.c.l.b16 %v2025
  %v2095 = vunpack.c.l.b16 %v2026
  %v2096 = vunpack.c.h.b16 %v2026
  %v2097 = vunpack.c.l.b16 %v2027
  %v2098 = vunpack.c.l.b16 %v2028
  %v2099 = vunpack.c.h.b16 %v2028
  %v2100 = vunpack.c.l.b16 %v2029
  %v2101 = vunpack.c.l.b16 %v2030
  %v2102 = vunpack.c.h.b16 %v2030
  %v2103 = vunpack.c.l.b16 %v2031
  %v2104 = vunpack.c.l.b16 %v2032
  %v2105 = vunpack.c.h.b16 %v2032
  %v2106 = vunpack.c.l.b16 %v2033
  %v2107 = vunpack.c.l.b16 %v2034
  %v2108 = vunpack.c.h.b16 %v2034
  %v2109 = vunpack.c.l.b16 %v2035
  %v2110 = vunpack.c.l.b16 %v2036
  %v2111 = vunpack.c.h.b16 %v2036
  %v2112 = vunpack.c.l.b16 %v2037
  %v2113 = vunpack.c.l.b16 %v2038
  %v2114 = vunpack.c.h.b16 %v2038
  %v2115 = vunpack.c.l.b16 %v2039
  %v2116 = vunpack.c.l.b16 %v2040
  %v2117 = vunpack.c.h.b16 %v2040
  %v2118 = vunpack.c.l.b16 %v2041
  %v2119 = vunpack.c.l.b16 %v2042
  %v2120 = vunpack.c.h.b16 %v2042
  %v2121 = vunpack.c.l.b16 %v2043
  %v2122 = vunpack.c.l.b16 %v2044
  %v2123 = vunpack.c.h.b16 %v2044
  %v2124 = vunpack.c.l.b16 %v2045
  %v2125 = vunpack.c.l.b16 %v2046
  %v2126 = vunpack.c.h.b16 %v2046
  %v2127 = vunpack.c.l.b16 %v2047
  %v2128 = vpack.c.b16 %v2083, %v2080
  %v2129 = vpack.c.b16 %v2084, %v2081
  %v2130 = vpack.c.b16 %v2085, %v2082
  %v2131 = vpack.c.b16 %v2089, %v2086
  %v2132 = vpack.c.b16 %v2090, %v2087
  %v2133 = vpack.c.b16 %v2091, %v2088
  %v2134 = vpack.c.b16 %v2095, %v2092
  %v2135 = vpack.c.b16 %v2096, %v2093
  %v2136 = vpack.c.b16 %v2097, %v2094
  %v2137 = vpack.c.b16 %v2101, %v2098
  %v2138 = vpack.c.b16 %v2102, %v2099
  %v2139 = vpack.c.b16 %v2103, %v2100
  %v2140 = vpack.c.b16 %v2107, %v2104
  %v2141 = vpack.c.b16 %v2108, %v2105
  %v2142 = vpack.c.b16 %v2109, %v2106
  %v2143 = vpack.c.b16 %v2113, %v2110
  %v2144 = vpack.c.b16 %v2114, %v2111
  %v2145 = vpack.c.b16 %v2115, %v2112
  %v2146 = vpack.c.b16 %v2119, %v2116
  %v2147 = vpack.c.b16 %v2120, %v2117
  %v2148 = vpack.c.b16 %v2121, %v2118
  %v2149 = vpack.c.b16 %v2125, %v2122
  %v2150 = vpack.c.b16 %v2126, %v2123
  %v2151 = vpack.c.b16 %v2127, %v2124
  %2176 = vmatprep.subr.bf16.mxu0 %v2129
  %2177 = vmatpush1.bf16.msra.mxu0 %v2128
  %2178 = vmatprep.subr.bf16.mxu0 %v2132
  %2179 = vmatpush1.bf16.msra.mxu0 %v2131
  %2180 = vmatprep.subr.bf16.mxu0 %v2135
  %2181 = vmatpush1.bf16.msra.mxu0 %v2134
  %2182 = vmatprep.subr.bf16.mxu0 %v2138
  %2183 = vmatpush1.bf16.msra.mxu0 %v2137
  %2184 = vmatprep.subr.bf16.mxu0 %v2141
  %2185 = vmatpush1.bf16.msra.mxu0 %v2140
  %2186 = vmatprep.subr.bf16.mxu0 %v2144
  %2187 = vmatpush1.bf16.msra.mxu0 %v2143
  %2188 = vmatprep.subr.bf16.mxu0 %v2147
  %2189 = vmatpush1.bf16.msra.mxu0 %v2146
  %2190 = vmatprep.subr.bf16.mxu0 %v2150
  %2191 = vmatpush1.bf16.msra.mxu0 %v2149
  %2192 = vmatprep.subr.bf16.mxu0 0
  %2193 = vmatpush1.bf16.msra.mxu0 0
  %2194 = vmatprep.subr.bf16.mxu0 0
  %2195 = vmatpush1.bf16.msra.mxu0 0
  %2196 = vmatprep.subr.bf16.mxu0 0
  %2197 = vmatpush1.bf16.msra.mxu0 0
  %2198 = vmatprep.subr.bf16.mxu0 0
  %2199 = vmatpush1.bf16.msra.mxu0 0
  %2200 = vmatprep.subr.bf16.mxu0 0
  %2201 = vmatpush1.bf16.msra.mxu0 0
  %2202 = vmatprep.subr.bf16.mxu0 0
  %2203 = vmatpush1.bf16.msra.mxu0 0
  %2204 = vmatprep.subr.bf16.mxu0 0
  %2205 = vmatpush1.bf16.msra.mxu0 0
  %2206 = vmatprep.subr.bf16.mxu0 0
  %2207 = vmatpush1.bf16.msra.mxu0 0
  %2208 = vmatprep.mubr.bf16.mxu0 0
  %2209 = vmatmul.mubr.bf16.gmra.mrb[0].mxu0 %v2015
  %v2210 = vpop.f32.mrb[0].mxu0
  %v2211 = vadd.f32 0.0, %v2210
  %v2212 = vpop.f32.mrb[0].mxu0
  %v2213 = vadd.f32 0.0, %v2212
  %v2214 = vpop.f32.mrb[0].mxu0
  %v2215 = vpop.f32.mrb[0].mxu0
  %2216 = vdwg.mxu0
  %2217 = vmatprep.subr.bf16.mxu0 0
  %2218 = vmatpush1.bf16.msra.mxu0 %v2130
  %2219 = vmatprep.subr.bf16.mxu0 0
  %2220 = vmatpush1.bf16.msra.mxu0 %v2133
  %2221 = vmatprep.subr.bf16.mxu0 0
  %2222 = vmatpush1.bf16.msra.mxu0 %v2136
  %2223 = vmatprep.subr.bf16.mxu0 0
  %2224 = vmatpush1.bf16.msra.mxu0 %v2139
  %2225 = vmatprep.subr.bf16.mxu0 0
  %2226 = vmatpush1.bf16.msra.mxu0 %v2142
  %2227 = vmatprep.subr.bf16.mxu0 0
  %2228 = vmatpush1.bf16.msra.mxu0 %v2145
  %2229 = vmatprep.subr.bf16.mxu0 0
  %2230 = vmatpush1.bf16.msra.mxu0 %v2148
  %2231 = vmatprep.subr.bf16.mxu0 0
  %2232 = vmatpush1.bf16.msra.mxu0 %v2151
  %2233 = vmatprep.subr.bf16.mxu0 0
  %2234 = vmatpush1.bf16.msra.mxu0 0
  %2235 = vmatprep.subr.bf16.mxu0 0
  %2236 = vmatpush1.bf16.msra.mxu0 0
  %2237 = vmatprep.subr.bf16.mxu0 0
  %2238 = vmatpush1.bf16.msra.mxu0 0
  %2239 = vmatprep.subr.bf16.mxu0 0
  %2240 = vmatpush1.bf16.msra.mxu0 0
  %2241 = vmatprep.subr.bf16.mxu0 0
  %2242 = vmatpush1.bf16.msra.mxu0 0
  %2243 = vmatprep.subr.bf16.mxu0 0
  %2244 = vmatpush1.bf16.msra.mxu0 0
  %2245 = vmatprep.subr.bf16.mxu0 0
  %2246 = vmatpush1.bf16.msra.mxu0 0
  %2247 = vmatprep.subr.bf16.mxu0 0
  %2248 = vmatpush1.bf16.msra.mxu0 0
  %2249 = vmatprep.mubr.bf16.mxu0 0
  %2250 = vmatmul.mubr.bf16.gmra.mrb[0].mxu0 %v2015
  %v2251 = vpop.f32.mrb[0].mxu0
  %v2252 = vadd.f32 0.0, %v2251
  %v2253 = vpop.f32.mrb[0].mxu0
  %v2254 = vpop.f32.mrb[0].mxu0
  %v2255 = vpop.f32.mrb[0].mxu0
  %2256 = vdwg.mxu0
  %s2257 = scalar_lea.vmem [#allocation4], 144
  %v2258 = vld [vmem:[%s2257] sm:$0xff]
  %v2259 = vld [vmem:[%s2257 + $0x8] sm:$0xff]
  %v2260 = vld [vmem:[%s2257 + $0x10] sm:$0xff]
  %v2261 = vadd.f32 %v2258, %v2211
  %v2262 = vxor.u32 %v2261, 2147483648
  %v2263 = vmul.f32 %v2262, 1.442695
  %v2264 = vpow.pop %v2263
  %v2265 = vadd.f32 %v2264, 1.0
  %v2266 = vrcp.pop %v2265
  %v2267 = vmul.f32 1.0, %v2266
  %v2268 = vadd.f32 %v2259, %v2213
  %v2269 = vxor.u32 %v2268, 2147483648
  %v2270 = vmul.f32 %v2269, 1.442695
  %v2271 = vpow.pop %v2270
  %v2272 = vadd.f32 %v2271, 1.0
  %v2273 = vrcp.pop %v2272
  %v2274 = vmul.f32 1.0, %v2273
  %v2275 = vadd.f32 %v2252, %v394
  %v2276 = vmul.f32 %v2267, %v2275
  %v2277 = vadd.f32 %v2260, %v2276
  %v2278 = vtanh.pop %v2277
  %v2279 = vsub.f32 1.0, %v2274
  %v2280 = vmul.f32 %v2279, %v2278
  %v2281 = vmul.f32 %v2274, %v2012
  %v2282 = vadd.f32 %v2280, %v2281
  %s2283 = scalar_lea.vmem [#allocation3], 48
  %2284 = vst [vmem:[%s2283] sm:$0xff] %v2282
  %v2285 = vpack.c.bf16 %v2282, %v2282
  %v2286 = vld [vmem:[%s3] sm:$0xff]
  %v2287 = vld [vmem:[%s3 + $0x8] sm:$0xf]
  %v2288 = vld [vmem:[%s3 + $0xc] sm:$0xff]
  %v2289 = vld [vmem:[%s3 + $0x14] sm:$0xf]
  %v2290 = vld [vmem:[%s3 + $0x18] sm:$0xff]
  %v2291 = vld [vmem:[%s3 + $0x20] sm:$0xf]
  %v2292 = vld [vmem:[%s3 + $0x24] sm:$0xff]
  %v2293 = vld [vmem:[%s3 + $0x2c] sm:$0xf]
  %v2294 = vld [vmem:[%s3 + $0x30] sm:$0xff]
  %v2295 = vld [vmem:[%s3 + $0x38] sm:$0xf]
  %v2296 = vld [vmem:[%s3 + $0x3c] sm:$0xff]
  %v2297 = vld [vmem:[%s3 + $0x44] sm:$0xf]
  %v2298 = vld [vmem:[%s3 + $0x48] sm:$0xff]
  %v2299 = vld [vmem:[%s3 + $0x50] sm:$0xf]
  %v2300 = vld [vmem:[%s3 + $0x54] sm:$0xff]
  %v2301 = vld [vmem:[%s3 + $0x5c] sm:$0xf]
  %v2302 = vld [vmem:[%s3 + $0x60] sm:$0xff]
  %v2303 = vld [vmem:[%s3 + $0x68] sm:$0xf]
  %v2304 = vld [vmem:[%s3 + $0x6c] sm:$0xff]
  %v2305 = vld [vmem:[%s3 + $0x74] sm:$0xf]
  %v2306 = vld [vmem:[%s3 + $0x78] sm:$0xff]
  %v2307 = vld [vmem:[%s3 + $0x80] sm:$0xf]
  %v2308 = vld [vmem:[%s3 + $0x84] sm:$0xff]
  %v2309 = vld [vmem:[%s3 + $0x8c] sm:$0xf]
  %v2310 = vld [vmem:[%s3 + $0x90] sm:$0xff]
  %v2311 = vld [vmem:[%s3 + $0x98] sm:$0xf]
  %v2312 = vld [vmem:[%s3 + $0x9c] sm:$0xff]
  %v2313 = vld [vmem:[%s3 + $0xa4] sm:$0xf]
  %v2314 = vld [vmem:[%s3 + $0xa8] sm:$0xff]
  %v2315 = vld [vmem:[%s3 + $0xb0] sm:$0xf]
  %v2316 = vld [vmem:[%s3 + $0xb4] sm:$0xff]
  %v2317 = vld [vmem:[%s3 + $0xbc] sm:$0xf]
  %v2350 = vunpack.c.l.b16 %v2286
  %v2351 = vunpack.c.h.b16 %v2286
  %v2352 = vunpack.c.l.b16 %v2287
  %v2353 = vunpack.c.l.b16 %v2288
  %v2354 = vunpack.c.h.b16 %v2288
  %v2355 = vunpack.c.l.b16 %v2289
  %v2356 = vunpack.c.l.b16 %v2290
  %v2357 = vunpack.c.h.b16 %v2290
  %v2358 = vunpack.c.l.b16 %v2291
  %v2359 = vunpack.c.l.b16 %v2292
  %v2360 = vunpack.c.h.b16 %v2292
  %v2361 = vunpack.c.l.b16 %v2293
  %v2362 = vunpack.c.l.b16 %v2294
  %v2363 = vunpack.c.h.b16 %v2294
  %v2364 = vunpack.c.l.b16 %v2295
  %v2365 = vunpack.c.l.b16 %v2296
  %v2366 = vunpack.c.h.b16 %v2296
  %v2367 = vunpack.c.l.b16 %v2297
  %v2368 = vunpack.c.l.b16 %v2298
  %v2369 = vunpack.c.h.b16 %v2298
  %v2370 = vunpack.c.l.b16 %v2299
  %v2371 = vunpack.c.l.b16 %v2300
  %v2372 = vunpack.c.h.b16 %v2300
  %v2373 = vunpack.c.l.b16 %v2301
  %v2374 = vunpack.c.l.b16 %v2302
  %v2375 = vunpack.c.h.b16 %v2302
  %v2376 = vunpack.c.l.b16 %v2303
  %v2377 = vunpack.c.l.b16 %v2304
  %v2378 = vunpack.c.h.b16 %v2304
  %v2379 = vunpack.c.l.b16 %v2305
  %v2380 = vunpack.c.l.b16 %v2306
  %v2381 = vunpack.c.h.b16 %v2306
  %v2382 = vunpack.c.l.b16 %v2307
  %v2383 = vunpack.c.l.b16 %v2308
  %v2384 = vunpack.c.h.b16 %v2308
  %v2385 = vunpack.c.l.b16 %v2309
  %v2386 = vunpack.c.l.b16 %v2310
  %v2387 = vunpack.c.h.b16 %v2310
  %v2388 = vunpack.c.l.b16 %v2311
  %v2389 = vunpack.c.l.b16 %v2312
  %v2390 = vunpack.c.h.b16 %v2312
  %v2391 = vunpack.c.l.b16 %v2313
  %v2392 = vunpack.c.l.b16 %v2314
  %v2393 = vunpack.c.h.b16 %v2314
  %v2394 = vunpack.c.l.b16 %v2315
  %v2395 = vunpack.c.l.b16 %v2316
  %v2396 = vunpack.c.h.b16 %v2316
  %v2397 = vunpack.c.l.b16 %v2317
  %v2398 = vpack.c.b16 %v2353, %v2350
  %v2399 = vpack.c.b16 %v2354, %v2351
  %v2400 = vpack.c.b16 %v2355, %v2352
  %v2401 = vpack.c.b16 %v2359, %v2356
  %v2402 = vpack.c.b16 %v2360, %v2357
  %v2403 = vpack.c.b16 %v2361, %v2358
  %v2404 = vpack.c.b16 %v2365, %v2362
  %v2405 = vpack.c.b16 %v2366, %v2363
  %v2406 = vpack.c.b16 %v2367, %v2364
  %v2407 = vpack.c.b16 %v2371, %v2368
  %v2408 = vpack.c.b16 %v2372, %v2369
  %v2409 = vpack.c.b16 %v2373, %v2370
  %v2410 = vpack.c.b16 %v2377, %v2374
  %v2411 = vpack.c.b16 %v2378, %v2375
  %v2412 = vpack.c.b16 %v2379, %v2376
  %v2413 = vpack.c.b16 %v2383, %v2380
  %v2414 = vpack.c.b16 %v2384, %v2381
  %v2415 = vpack.c.b16 %v2385, %v2382
  %v2416 = vpack.c.b16 %v2389, %v2386
  %v2417 = vpack.c.b16 %v2390, %v2387
  %v2418 = vpack.c.b16 %v2391, %v2388
  %v2419 = vpack.c.b16 %v2395, %v2392
  %v2420 = vpack.c.b16 %v2396, %v2393
  %v2421 = vpack.c.b16 %v2397, %v2394
  %2446 = vmatprep.subr.bf16.mxu0 %v2399
  %2447 = vmatpush1.bf16.msra.mxu0 %v2398
  %2448 = vmatprep.subr.bf16.mxu0 %v2402
  %2449 = vmatpush1.bf16.msra.mxu0 %v2401
  %2450 = vmatprep.subr.bf16.mxu0 %v2405
  %2451 = vmatpush1.bf16.msra.mxu0 %v2404
  %2452 = vmatprep.subr.bf16.mxu0 %v2408
  %2453 = vmatpush1.bf16.msra.mxu0 %v2407
  %2454 = vmatprep.subr.bf16.mxu0 %v2411
  %2455 = vmatpush1.bf16.msra.mxu0 %v2410
  %2456 = vmatprep.subr.bf16.mxu0 %v2414
  %2457 = vmatpush1.bf16.msra.mxu0 %v2413
  %2458 = vmatprep.subr.bf16.mxu0 %v2417
  %2459 = vmatpush1.bf16.msra.mxu0 %v2416
  %2460 = vmatprep.subr.bf16.mxu0 %v2420
  %2461 = vmatpush1.bf16.msra.mxu0 %v2419
  %2462 = vmatprep.subr.bf16.mxu0 0
  %2463 = vmatpush1.bf16.msra.mxu0 0
  %2464 = vmatprep.subr.bf16.mxu0 0
  %2465 = vmatpush1.bf16.msra.mxu0 0
  %2466 = vmatprep.subr.bf16.mxu0 0
  %2467 = vmatpush1.bf16.msra.mxu0 0
  %2468 = vmatprep.subr.bf16.mxu0 0
  %2469 = vmatpush1.bf16.msra.mxu0 0
  %2470 = vmatprep.subr.bf16.mxu0 0
  %2471 = vmatpush1.bf16.msra.mxu0 0
  %2472 = vmatprep.subr.bf16.mxu0 0
  %2473 = vmatpush1.bf16.msra.mxu0 0
  %2474 = vmatprep.subr.bf16.mxu0 0
  %2475 = vmatpush1.bf16.msra.mxu0 0
  %2476 = vmatprep.subr.bf16.mxu0 0
  %2477 = vmatpush1.bf16.msra.mxu0 0
  %2478 = vmatprep.mubr.bf16.mxu0 0
  %2479 = vmatmul.mubr.bf16.gmra.mrb[0].mxu0 %v2285
  %v2480 = vpop.f32.mrb[0].mxu0
  %v2481 = vadd.f32 0.0, %v2480
  %v2482 = vpop.f32.mrb[0].mxu0
  %v2483 = vadd.f32 0.0, %v2482
  %v2484 = vpop.f32.mrb[0].mxu0
  %v2485 = vpop.f32.mrb[0].mxu0
  %2486 = vdwg.mxu0
  %2487 = vmatprep.subr.bf16.mxu0 0
  %2488 = vmatpush1.bf16.msra.mxu0 %v2400
  %2489 = vmatprep.subr.bf16.mxu0 0
  %2490 = vmatpush1.bf16.msra.mxu0 %v2403
  %2491 = vmatprep.subr.bf16.mxu0 0
  %2492 = vmatpush1.bf16.msra.mxu0 %v2406
  %2493 = vmatprep.subr.bf16.mxu0 0
  %2494 = vmatpush1.bf16.msra.mxu0 %v2409
  %2495 = vmatprep.subr.bf16.mxu0 0
  %2496 = vmatpush1.bf16.msra.mxu0 %v2412
  %2497 = vmatprep.subr.bf16.mxu0 0
  %2498 = vmatpush1.bf16.msra.mxu0 %v2415
  %2499 = vmatprep.subr.bf16.mxu0 0
  %2500 = vmatpush1.bf16.msra.mxu0 %v2418
  %2501 = vmatprep.subr.bf16.mxu0 0
  %2502 = vmatpush1.bf16.msra.mxu0 %v2421
  %2503 = vmatprep.subr.bf16.mxu0 0
  %2504 = vmatpush1.bf16.msra.mxu0 0
  %2505 = vmatprep.subr.bf16.mxu0 0
  %2506 = vmatpush1.bf16.msra.mxu0 0
  %2507 = vmatprep.subr.bf16.mxu0 0
  %2508 = vmatpush1.bf16.msra.mxu0 0
  %2509 = vmatprep.subr.bf16.mxu0 0
  %2510 = vmatpush1.bf16.msra.mxu0 0
  %2511 = vmatprep.subr.bf16.mxu0 0
  %2512 = vmatpush1.bf16.msra.mxu0 0
  %2513 = vmatprep.subr.bf16.mxu0 0
  %2514 = vmatpush1.bf16.msra.mxu0 0
  %2515 = vmatprep.subr.bf16.mxu0 0
  %2516 = vmatpush1.bf16.msra.mxu0 0
  %2517 = vmatprep.subr.bf16.mxu0 0
  %2518 = vmatpush1.bf16.msra.mxu0 0
  %2519 = vmatprep.mubr.bf16.mxu0 0
  %2520 = vmatmul.mubr.bf16.gmra.mrb[0].mxu0 %v2285
  %v2521 = vpop.f32.mrb[0].mxu0
  %v2522 = vadd.f32 0.0, %v2521
  %v2523 = vpop.f32.mrb[0].mxu0
  %v2524 = vpop.f32.mrb[0].mxu0
  %v2525 = vpop.f32.mrb[0].mxu0
  %2526 = vdwg.mxu0
  %s2527 = scalar_lea.vmem [#allocation4], 168
  %v2528 = vld [vmem:[%s2527] sm:$0xff]
  %v2529 = vld [vmem:[%s2527 + $0x8] sm:$0xff]
  %v2530 = vld [vmem:[%s2527 + $0x10] sm:$0xff]
  %v2531 = vadd.f32 %v2528, %v2481
  %v2532 = vxor.u32 %v2531, 2147483648
  %v2533 = vmul.f32 %v2532, 1.442695
  %v2534 = vpow.pop %v2533
  %v2535 = vadd.f32 %v2534, 1.0
  %v2536 = vrcp.pop %v2535
  %v2537 = vmul.f32 1.0, %v2536
  %v2538 = vadd.f32 %v2529, %v2483
  %v2539 = vxor.u32 %v2538, 2147483648
  %v2540 = vmul.f32 %v2539, 1.442695
  %v2541 = vpow.pop %v2540
  %v2542 = vadd.f32 %v2541, 1.0
  %v2543 = vrcp.pop %v2542
  %v2544 = vmul.f32 1.0, %v2543
  %v2545 = vadd.f32 %v2522, %v394
  %v2546 = vmul.f32 %v2537, %v2545
  %v2547 = vadd.f32 %v2530, %v2546
  %v2548 = vtanh.pop %v2547
  %v2549 = vsub.f32 1.0, %v2544
  %v2550 = vmul.f32 %v2549, %v2548
  %v2551 = vmul.f32 %v2544, %v2282
  %v2552 = vadd.f32 %v2550, %v2551
  %s2553 = scalar_lea.vmem [#allocation3], 56
  %2554 = vst [vmem:[%s2553] sm:$0xff] %v2552
  %2555 = vst [vmem:[#allocation2] sm:$0xff] %v2552
  %v2556 = vld [vmem:[#allocation3] sm:$0xff]
  %v2557 = vld [vmem:[#allocation3 + $0x8] sm:$0xff]
  %v2558 = vld [vmem:[#allocation3 + $0x10] sm:$0xff]
  %v2559 = vld [vmem:[#allocation3 + $0x18] sm:$0xff]
  %v2560 = vld [vmem:[#allocation3 + $0x20] sm:$0xff]
  %v2561 = vld [vmem:[#allocation3 + $0x28] sm:$0xff]
  %v2562 = vld [vmem:[#allocation3 + $0x30] sm:$0xff]
  %v2563 = vld [vmem:[#allocation3 + $0x38] sm:$0xff]
  %v2564 = vpack.c.bf16 %v2557, %v2556
  %v2565 = vpack.c.bf16 %v2559, %v2558
  %v2566 = vpack.c.bf16 %v2561, %v2560
  %v2567 = vpack.c.bf16 %v2563, %v2562
  %v2568 = vld [vmem:[%s2] sm:$0xff]
  %v2569 = vld [vmem:[%s2 + $0x8] sm:$0xf]
  %v2570 = vld [vmem:[%s2 + $0xc] sm:$0xff]
  %v2571 = vld [vmem:[%s2 + $0x14] sm:$0xf]
  %v2572 = vld [vmem:[%s2 + $0x18] sm:$0xff]
  %v2573 = vld [vmem:[%s2 + $0x20] sm:$0xf]
  %v2574 = vld [vmem:[%s2 + $0x24] sm:$0xff]
  %v2575 = vld [vmem:[%s2 + $0x2c] sm:$0xf]
  %v2576 = vld [vmem:[%s2 + $0x30] sm:$0xff]
  %v2577 = vld [vmem:[%s2 + $0x38] sm:$0xf]
  %v2578 = vld [vmem:[%s2 + $0x3c] sm:$0xff]
  %v2579 = vld [vmem:[%s2 + $0x44] sm:$0xf]
  %v2580 = vld [vmem:[%s2 + $0x48] sm:$0xff]
  %v2581 = vld [vmem:[%s2 + $0x50] sm:$0xf]
  %v2582 = vld [vmem:[%s2 + $0x54] sm:$0xff]
  %v2583 = vld [vmem:[%s2 + $0x5c] sm:$0xf]
  %v2584 = vld [vmem:[%s2 + $0x60] sm:$0xff]
  %v2585 = vld [vmem:[%s2 + $0x68] sm:$0xf]
  %v2586 = vld [vmem:[%s2 + $0x6c] sm:$0xff]
  %v2587 = vld [vmem:[%s2 + $0x74] sm:$0xf]
  %v2588 = vld [vmem:[%s2 + $0x78] sm:$0xff]
  %v2589 = vld [vmem:[%s2 + $0x80] sm:$0xf]
  %v2590 = vld [vmem:[%s2 + $0x84] sm:$0xff]
  %v2591 = vld [vmem:[%s2 + $0x8c] sm:$0xf]
  %v2592 = vld [vmem:[%s2 + $0x90] sm:$0xff]
  %v2593 = vld [vmem:[%s2 + $0x98] sm:$0xf]
  %v2594 = vld [vmem:[%s2 + $0x9c] sm:$0xff]
  %v2595 = vld [vmem:[%s2 + $0xa4] sm:$0xf]
  %v2596 = vld [vmem:[%s2 + $0xa8] sm:$0xff]
  %v2597 = vld [vmem:[%s2 + $0xb0] sm:$0xf]
  %v2598 = vld [vmem:[%s2 + $0xb4] sm:$0xff]
  %v2599 = vld [vmem:[%s2 + $0xbc] sm:$0xf]
  %s2600 = scalar_lea.vmem %s4, 3
  %v2601 = vld [vmem:[%s2600] sm:$0x7]
  %v2603 = vlaneseq
  %v2604 = vshrl.u32 %v2603, 7
  %v2605 = vsub.s32 0, %v2604
  %v2606 = vrot.slane %v2601, %v2605
  %v2607 = vlaneseq
  %v2608 = vshrl.u32 %v2607, 7
  %v2609 = vsub.s32 1, %v2608
  %v2610 = vrot.slane %v2601, %v2609
  %v2611 = vlaneseq
  %v2612 = vshrl.u32 %v2611, 7
  %v2613 = vsub.s32 2, %v2612
  %v2614 = vrot.slane %v2601, %v2613
  %v2650 = vunpack.c.l.b16 %v2568
  %v2651 = vunpack.c.h.b16 %v2568
  %v2652 = vunpack.c.l.b16 %v2569
  %v2653 = vunpack.c.l.b16 %v2570
  %v2654 = vunpack.c.h.b16 %v2570
  %v2655 = vunpack.c.l.b16 %v2571
  %v2656 = vunpack.c.l.b16 %v2572
  %v2657 = vunpack.c.h.b16 %v2572
  %v2658 = vunpack.c.l.b16 %v2573
  %v2659 = vunpack.c.l.b16 %v2574
  %v2660 = vunpack.c.h.b16 %v2574
  %v2661 = vunpack.c.l.b16 %v2575
  %v2662 = vunpack.c.l.b16 %v2576
  %v2663 = vunpack.c.h.b16 %v2576
  %v2664 = vunpack.c.l.b16 %v2577
  %v2665 = vunpack.c.l.b16 %v2578
  %v2666 = vunpack.c.h.b16 %v2578
  %v2667 = vunpack.c.l.b16 %v2579
  %v2668 = vunpack.c.l.b16 %v2580
  %v2669 = vunpack.c.h.b16 %v2580
  %v2670 = vunpack.c.l.b16 %v2581
  %v2671 = vunpack.c.l.b16 %v2582
  %v2672 = vunpack.c.h.b16 %v2582
  %v2673 = vunpack.c.l.b16 %v2583
  %v2674 = vunpack.c.l.b16 %v2584
  %v2675 = vunpack.c.h.b16 %v2584
  %v2676 = vunpack.c.l.b16 %v2585
  %v2677 = vunpack.c.l.b16 %v2586
  %v2678 = vunpack.c.h.b16 %v2586
  %v2679 = vunpack.c.l.b16 %v2587
  %v2680 = vunpack.c.l.b16 %v2588
  %v2681 = vunpack.c.h.b16 %v2588
  %v2682 = vunpack.c.l.b16 %v2589
  %v2683 = vunpack.c.l.b16 %v2590
  %v2684 = vunpack.c.h.b16 %v2590
  %v2685 = vunpack.c.l.b16 %v2591
  %v2686 = vunpack.c.l.b16 %v2592
  %v2687 = vunpack.c.h.b16 %v2592
  %v2688 = vunpack.c.l.b16 %v2593
  %v2689 = vunpack.c.l.b16 %v2594
  %v2690 = vunpack.c.h.b16 %v2594
  %v2691 = vunpack.c.l.b16 %v2595
  %v2692 = vunpack.c.l.b16 %v2596
  %v2693 = vunpack.c.h.b16 %v2596
  %v2694 = vunpack.c.l.b16 %v2597
  %v2695 = vunpack.c.l.b16 %v2598
  %v2696 = vunpack.c.h.b16 %v2598
  %v2697 = vunpack.c.l.b16 %v2599
  %v2698 = vpack.c.b16 %v2653, %v2650
  %v2699 = vpack.c.b16 %v2654, %v2651
  %v2700 = vpack.c.b16 %v2655, %v2652
  %v2701 = vpack.c.b16 %v2659, %v2656
  %v2702 = vpack.c.b16 %v2660, %v2657
  %v2703 = vpack.c.b16 %v2661, %v2658
  %v2704 = vpack.c.b16 %v2665, %v2662
  %v2705 = vpack.c.b16 %v2666, %v2663
  %v2706 = vpack.c.b16 %v2667, %v2664
  %v2707 = vpack.c.b16 %v2671, %v2668
  %v2708 = vpack.c.b16 %v2672, %v2669
  %v2709 = vpack.c.b16 %v2673, %v2670
  %v2710 = vpack.c.b16 %v2677, %v2674
  %v2711 = vpack.c.b16 %v2678, %v2675
  %v2712 = vpack.c.b16 %v2679, %v2676
  %v2713 = vpack.c.b16 %v2683, %v2680
  %v2714 = vpack.c.b16 %v2684, %v2681
  %v2715 = vpack.c.b16 %v2685, %v2682
  %v2716 = vpack.c.b16 %v2689, %v2686
  %v2717 = vpack.c.b16 %v2690, %v2687
  %v2718 = vpack.c.b16 %v2691, %v2688
  %v2719 = vpack.c.b16 %v2695, %v2692
  %v2720 = vpack.c.b16 %v2696, %v2693
  %v2721 = vpack.c.b16 %v2697, %v2694
  %2746 = vmatprep.subr.bf16.mxu0 %v2699
  %2747 = vmatpush1.bf16.msra.mxu0 %v2698
  %2748 = vmatprep.subr.bf16.mxu0 %v2702
  %2749 = vmatpush1.bf16.msra.mxu0 %v2701
  %2750 = vmatprep.subr.bf16.mxu0 %v2705
  %2751 = vmatpush1.bf16.msra.mxu0 %v2704
  %2752 = vmatprep.subr.bf16.mxu0 %v2708
  %2753 = vmatpush1.bf16.msra.mxu0 %v2707
  %2754 = vmatprep.subr.bf16.mxu0 %v2711
  %2755 = vmatpush1.bf16.msra.mxu0 %v2710
  %2756 = vmatprep.subr.bf16.mxu0 %v2714
  %2757 = vmatpush1.bf16.msra.mxu0 %v2713
  %2758 = vmatprep.subr.bf16.mxu0 %v2717
  %2759 = vmatpush1.bf16.msra.mxu0 %v2716
  %2760 = vmatprep.subr.bf16.mxu0 %v2720
  %2761 = vmatpush1.bf16.msra.mxu0 %v2719
  %2762 = vmatprep.subr.bf16.mxu0 0
  %2763 = vmatpush1.bf16.msra.mxu0 0
  %2764 = vmatprep.subr.bf16.mxu0 0
  %2765 = vmatpush1.bf16.msra.mxu0 0
  %2766 = vmatprep.subr.bf16.mxu0 0
  %2767 = vmatpush1.bf16.msra.mxu0 0
  %2768 = vmatprep.subr.bf16.mxu0 0
  %2769 = vmatpush1.bf16.msra.mxu0 0
  %2770 = vmatprep.subr.bf16.mxu0 0
  %2771 = vmatpush1.bf16.msra.mxu0 0
  %2772 = vmatprep.subr.bf16.mxu0 0
  %2773 = vmatpush1.bf16.msra.mxu0 0
  %2774 = vmatprep.subr.bf16.mxu0 0
  %2775 = vmatpush1.bf16.msra.mxu0 0
  %2776 = vmatprep.subr.bf16.mxu0 0
  %2777 = vmatpush1.bf16.msra.mxu0 0
  %2778 = vmatprep.mubr.bf16.mxu0 0
  %2779 = vmatmul.mubr.bf16.gmra.mrb[0].mxu0 %v2564
  %v2780 = vpop.f32.mrb[0].mxu0
  %v2781 = vadd.f32 %v2606, %v2780
  %v2782 = vpop.f32.mrb[0].mxu0
  %v2783 = vadd.f32 %v2610, %v2782
  %v2784 = vpop.f32.mrb[0].mxu0
  %v2785 = vadd.f32 %v2606, %v2784
  %v2786 = vpop.f32.mrb[0].mxu0
  %v2787 = vadd.f32 %v2610, %v2786
  %2788 = vmatprep.mubr.bf16.mxu0 0
  %2789 = vmatmul.mubr.bf16.gmra.mrb[0].mxu0 %v2565
  %v2790 = vpop.f32.mrb[0].mxu0
  %v2791 = vadd.f32 %v2606, %v2790
  %v2792 = vpop.f32.mrb[0].mxu0
  %v2793 = vadd.f32 %v2610, %v2792
  %v2794 = vpop.f32.mrb[0].mxu0
  %v2795 = vadd.f32 %v2606, %v2794
  %v2796 = vpop.f32.mrb[0].mxu0
  %v2797 = vadd.f32 %v2610, %v2796
  %2798 = vmatprep.mubr.bf16.mxu0 0
  %2799 = vmatmul.mubr.bf16.gmra.mrb[0].mxu0 %v2566
  %v2800 = vpop.f32.mrb[0].mxu0
  %v2801 = vadd.f32 %v2606, %v2800
  %v2802 = vpop.f32.mrb[0].mxu0
  %v2803 = vadd.f32 %v2610, %v2802
  %v2804 = vpop.f32.mrb[0].mxu0
  %v2805 = vadd.f32 %v2606, %v2804
  %v2806 = vpop.f32.mrb[0].mxu0
  %v2807 = vadd.f32 %v2610, %v2806
  %2808 = vmatprep.mubr.bf16.mxu0 0
  %2809 = vmatmul.mubr.bf16.gmra.mrb[0].mxu0 %v2567
  %v2810 = vpop.f32.mrb[0].mxu0
  %v2811 = vadd.f32 %v2606, %v2810
  %v2812 = vpop.f32.mrb[0].mxu0
  %v2813 = vadd.f32 %v2610, %v2812
  %v2814 = vpop.f32.mrb[0].mxu0
  %v2815 = vadd.f32 %v2606, %v2814
  %v2816 = vpop.f32.mrb[0].mxu0
  %v2817 = vadd.f32 %v2610, %v2816
  %2818 = vdwg.mxu0
  %2819 = vmatprep.subr.bf16.mxu0 0
  %2820 = vmatpush1.bf16.msra.mxu0 %v2700
  %2821 = vmatprep.subr.bf16.mxu0 0
  %2822 = vmatpush1.bf16.msra.mxu0 %v2703
  %2823 = vmatprep.subr.bf16.mxu0 0
  %2824 = vmatpush1.bf16.msra.mxu0 %v2706
  %2825 = vmatprep.subr.bf16.mxu0 0
  %2826 = vmatpush1.bf16.msra.mxu0 %v2709
  %2827 = vmatprep.subr.bf16.mxu0 0
  %2828 = vmatpush1.bf16.msra.mxu0 %v2712
  %2829 = vmatprep.subr.bf16.mxu0 0
  %2830 = vmatpush1.bf16.msra.mxu0 %v2715
  %2831 = vmatprep.subr.bf16.mxu0 0
  %2832 = vmatpush1.bf16.msra.mxu0 %v2718
  %2833 = vmatprep.subr.bf16.mxu0 0
  %2834 = vmatpush1.bf16.msra.mxu0 %v2721
  %2835 = vmatprep.subr.bf16.mxu0 0
  %2836 = vmatpush1.bf16.msra.mxu0 0
  %2837 = vmatprep.subr.bf16.mxu0 0
  %2838 = vmatpush1.bf16.msra.mxu0 0
  %2839 = vmatprep.subr.bf16.mxu0 0
  %2840 = vmatpush1.bf16.msra.mxu0 0
  %2841 = vmatprep.subr.bf16.mxu0 0
  %2842 = vmatpush1.bf16.msra.mxu0 0
  %2843 = vmatprep.subr.bf16.mxu0 0
  %2844 = vmatpush1.bf16.msra.mxu0 0
  %2845 = vmatprep.subr.bf16.mxu0 0
  %2846 = vmatpush1.bf16.msra.mxu0 0
  %2847 = vmatprep.subr.bf16.mxu0 0
  %2848 = vmatpush1.bf16.msra.mxu0 0
  %2849 = vmatprep.subr.bf16.mxu0 0
  %2850 = vmatpush1.bf16.msra.mxu0 0
  %2851 = vmatprep.mubr.bf16.mxu0 0
  %2852 = vmatmul.mubr.bf16.gmra.mrb[0].mxu0 %v2564
  %v2853 = vpop.f32.mrb[0].mxu0
  %v2854 = vadd.f32 %v2614, %v2853
  %v2855 = vpop.f32.mrb[0].mxu0
  %v2856 = vpop.f32.mrb[0].mxu0
  %v2857 = vadd.f32 %v2614, %v2856
  %v2858 = vpop.f32.mrb[0].mxu0
  %2859 = vmatprep.mubr.bf16.mxu0 0
  %2860 = vmatmul.mubr.bf16.gmra.mrb[0].mxu0 %v2565
  %v2861 = vpop.f32.mrb[0].mxu0
  %v2862 = vadd.f32 %v2614, %v2861
  %v2863 = vpop.f32.mrb[0].mxu0
  %v2864 = vpop.f32.mrb[0].mxu0
  %v2865 = vadd.f32 %v2614, %v2864
  %v2866 = vpop.f32.mrb[0].mxu0
  %2867 = vmatprep.mubr.bf16.mxu0 0
  %2868 = vmatmul.mubr.bf16.gmra.mrb[0].mxu0 %v2566
  %v2869 = vpop.f32.mrb[0].mxu0
  %v2870 = vadd.f32 %v2614, %v2869
  %v2871 = vpop.f32.mrb[0].mxu0
  %v2872 = vpop.f32.mrb[0].mxu0
  %v2873 = vadd.f32 %v2614, %v2872
  %v2874 = vpop.f32.mrb[0].mxu0
  %2875 = vmatprep.mubr.bf16.mxu0 0
  %2876 = vmatmul.mubr.bf16.gmra.mrb[0].mxu0 %v2567
  %v2877 = vpop.f32.mrb[0].mxu0
  %v2878 = vadd.f32 %v2614, %v2877
  %v2879 = vpop.f32.mrb[0].mxu0
  %v2880 = vpop.f32.mrb[0].mxu0
  %v2881 = vadd.f32 %v2614, %v2880
  %v2882 = vpop.f32.mrb[0].mxu0
  %2883 = vdwg.mxu0
  %2884 = vst [vmem:[#allocation4] sm:$0xff] %v2781
  %2885 = vst [vmem:[#allocation4 + $0x8] sm:$0xff] %v2783
  %2886 = vst [vmem:[#allocation4 + $0x10] sm:$0xff] %v2854
  %2887 = vst [vmem:[#allocation4 + $0x18] sm:$0xff] %v2785
  %2888 = vst [vmem:[#allocation4 + $0x20] sm:$0xff] %v2787
  %2889 = vst [vmem:[#allocation4 + $0x28] sm:$0xff] %v2857
  %2890 = vst [vmem:[#allocation4 + $0x30] sm:$0xff] %v2791
  %2891 = vst [vmem:[#allocation4 + $0x38] sm:$0xff] %v2793
  %2892 = vst [vmem:[#allocation4 + $0x40] sm:$0xff] %v2862
  %2893 = vst [vmem:[#allocation4 + $0x48] sm:$0xff] %v2795
  %2894 = vst [vmem:[#allocation4 + $0x50] sm:$0xff] %v2797
  %2895 = vst [vmem:[#allocation4 + $0x58] sm:$0xff] %v2865
  %2896 = vst [vmem:[#allocation4 + $0x60] sm:$0xff] %v2801
  %2897 = vst [vmem:[#allocation4 + $0x68] sm:$0xff] %v2803
  %2898 = vst [vmem:[#allocation4 + $0x70] sm:$0xff] %v2870
  %2899 = vst [vmem:[#allocation4 + $0x78] sm:$0xff] %v2805
  %2900 = vst [vmem:[#allocation4 + $0x80] sm:$0xff] %v2807
  %2901 = vst [vmem:[#allocation4 + $0x88] sm:$0xff] %v2873
  %2902 = vst [vmem:[#allocation4 + $0x90] sm:$0xff] %v2811
  %2903 = vst [vmem:[#allocation4 + $0x98] sm:$0xff] %v2813
  %2904 = vst [vmem:[#allocation4 + $0xa0] sm:$0xff] %v2878
  %2905 = vst [vmem:[#allocation4 + $0xa8] sm:$0xff] %v2815
  %2906 = vst [vmem:[#allocation4 + $0xb0] sm:$0xff] %v2817
  %2907 = vst [vmem:[#allocation4 + $0xb8] sm:$0xff] %v2881
  %s2908 = scalar_lea.vmem %s5, 1
  %v2909 = vld [vmem:[%s2908] sm:$0x1]
  %v2911 = vlaneseq
  %v2912 = vshrl.u32 %v2911, 7
  %v2913 = vsub.s32 0, %v2912
  %v2914 = vrot.slane %v2909, %v2913
  %s2916 = scalar_lea.vmem [#allocation2], 8
  %v2917 = vld [vmem:[%s2916] sm:$0xff]
  %v2918 = vpack.c.bf16 %v2917, %v2917
  %s2919 = scalar_lea.vmem %s3, 192
  %v2920 = vld [vmem:[%s2919] sm:$0xff]
  %v2921 = vld [vmem:[%s2919 + $0x8] sm:$0xf]
  %v2922 = vld [vmem:[%s2919 + $0xc] sm:$0xff]
  %v2923 = vld [vmem:[%s2919 + $0x14] sm:$0xf]
  %v2924 = vld [vmem:[%s2919 + $0x18] sm:$0xff]
  %v2925 = vld [vmem:[%s2919 + $0x20] sm:$0xf]
  %v2926 = vld [vmem:[%s2919 + $0x24] sm:$0xff]
  %v2927 = vld [vmem:[%s2919 + $0x2c] sm:$0xf]
  %v2928 = vld [vmem:[%s2919 + $0x30] sm:$0xff]
  %v2929 = vld [vmem:[%s2919 + $0x38] sm:$0xf]
  %v2930 = vld [vmem:[%s2919 + $0x3c] sm:$0xff]
  %v2931 = vld [vmem:[%s2919 + $0x44] sm:$0xf]
  %v2932 = vld [vmem:[%s2919 + $0x48] sm:$0xff]
  %v2933 = vld [vmem:[%s2919 + $0x50] sm:$0xf]
  %v2934 = vld [vmem:[%s2919 + $0x54] sm:$0xff]
  %v2935 = vld [vmem:[%s2919 + $0x5c] sm:$0xf]
  %v2936 = vld [vmem:[%s2919 + $0x60] sm:$0xff]
  %v2937 = vld [vmem:[%s2919 + $0x68] sm:$0xf]
  %v2938 = vld [vmem:[%s2919 + $0x6c] sm:$0xff]
  %v2939 = vld [vmem:[%s2919 + $0x74] sm:$0xf]
  %v2940 = vld [vmem:[%s2919 + $0x78] sm:$0xff]
  %v2941 = vld [vmem:[%s2919 + $0x80] sm:$0xf]
  %v2942 = vld [vmem:[%s2919 + $0x84] sm:$0xff]
  %v2943 = vld [vmem:[%s2919 + $0x8c] sm:$0xf]
  %v2944 = vld [vmem:[%s2919 + $0x90] sm:$0xff]
  %v2945 = vld [vmem:[%s2919 + $0x98] sm:$0xf]
  %v2946 = vld [vmem:[%s2919 + $0x9c] sm:$0xff]
  %v2947 = vld [vmem:[%s2919 + $0xa4] sm:$0xf]
  %v2948 = vld [vmem:[%s2919 + $0xa8] sm:$0xff]
  %v2949 = vld [vmem:[%s2919 + $0xb0] sm:$0xf]
  %v2950 = vld [vmem:[%s2919 + $0xb4] sm:$0xff]
  %v2951 = vld [vmem:[%s2919 + $0xbc] sm:$0xf]
  %v2984 = vunpack.c.l.b16 %v2920
  %v2985 = vunpack.c.h.b16 %v2920
  %v2986 = vunpack.c.l.b16 %v2921
  %v2987 = vunpack.c.l.b16 %v2922
  %v2988 = vunpack.c.h.b16 %v2922
  %v2989 = vunpack.c.l.b16 %v2923
  %v2990 = vunpack.c.l.b16 %v2924
  %v2991 = vunpack.c.h.b16 %v2924
  %v2992 = vunpack.c.l.b16 %v2925
  %v2993 = vunpack.c.l.b16 %v2926
  %v2994 = vunpack.c.h.b16 %v2926
  %v2995 = vunpack.c.l.b16 %v2927
  %v2996 = vunpack.c.l.b16 %v2928
  %v2997 = vunpack.c.h.b16 %v2928
  %v2998 = vunpack.c.l.b16 %v2929
  %v2999 = vunpack.c.l.b16 %v2930
  %v3000 = vunpack.c.h.b16 %v2930
  %v3001 = vunpack.c.l.b16 %v2931
  %v3002 = vunpack.c.l.b16 %v2932
  %v3003 = vunpack.c.h.b16 %v2932
  %v3004 = vunpack.c.l.b16 %v2933
  %v3005 = vunpack.c.l.b16 %v2934
  %v3006 = vunpack.c.h.b16 %v2934
  %v3007 = vunpack.c.l.b16 %v2935
  %v3008 = vunpack.c.l.b16 %v2936
  %v3009 = vunpack.c.h.b16 %v2936
  %v3010 = vunpack.c.l.b16 %v2937
  %v3011 = vunpack.c.l.b16 %v2938
  %v3012 = vunpack.c.h.b16 %v2938
  %v3013 = vunpack.c.l.b16 %v2939
  %v3014 = vunpack.c.l.b16 %v2940
  %v3015 = vunpack.c.h.b16 %v2940
  %v3016 = vunpack.c.l.b16 %v2941
  %v3017 = vunpack.c.l.b16 %v2942
  %v3018 = vunpack.c.h.b16 %v2942
  %v3019 = vunpack.c.l.b16 %v2943
  %v3020 = vunpack.c.l.b16 %v2944
  %v3021 = vunpack.c.h.b16 %v2944
  %v3022 = vunpack.c.l.b16 %v2945
  %v3023 = vunpack.c.l.b16 %v2946
  %v3024 = vunpack.c.h.b16 %v2946
  %v3025 = vunpack.c.l.b16 %v2947
  %v3026 = vunpack.c.l.b16 %v2948
  %v3027 = vunpack.c.h.b16 %v2948
  %v3028 = vunpack.c.l.b16 %v2949
  %v3029 = vunpack.c.l.b16 %v2950
  %v3030 = vunpack.c.h.b16 %v2950
  %v3031 = vunpack.c.l.b16 %v2951
  %v3032 = vpack.c.b16 %v2987, %v2984
  %v3033 = vpack.c.b16 %v2988, %v2985
  %v3034 = vpack.c.b16 %v2989, %v2986
  %v3035 = vpack.c.b16 %v2993, %v2990
  %v3036 = vpack.c.b16 %v2994, %v2991
  %v3037 = vpack.c.b16 %v2995, %v2992
  %v3038 = vpack.c.b16 %v2999, %v2996
  %v3039 = vpack.c.b16 %v3000, %v2997
  %v3040 = vpack.c.b16 %v3001, %v2998
  %v3041 = vpack.c.b16 %v3005, %v3002
  %v3042 = vpack.c.b16 %v3006, %v3003
  %v3043 = vpack.c.b16 %v3007, %v3004
  %v3044 = vpack.c.b16 %v3011, %v3008
  %v3045 = vpack.c.b16 %v3012, %v3009
  %v3046 = vpack.c.b16 %v3013, %v3010
  %v3047 = vpack.c.b16 %v3017, %v3014
  %v3048 = vpack.c.b16 %v3018, %v3015
  %v3049 = vpack.c.b16 %v3019, %v3016
  %v3050 = vpack.c.b16 %v3023, %v3020
  %v3051 = vpack.c.b16 %v3024, %v3021
  %v3052 = vpack.c.b16 %v3025, %v3022
  %v3053 = vpack.c.b16 %v3029, %v3026
  %v3054 = vpack.c.b16 %v3030, %v3027
  %v3055 = vpack.c.b16 %v3031, %v3028
  %3080 = vmatprep.subr.bf16.mxu0 %v3033
  %3081 = vmatpush1.bf16.msra.mxu0 %v3032
  %3082 = vmatprep.subr.bf16.mxu0 %v3036
  %3083 = vmatpush1.bf16.msra.mxu0 %v3035
  %3084 = vmatprep.subr.bf16.mxu0 %v3039
  %3085 = vmatpush1.bf16.msra.mxu0 %v3038
  %3086 = vmatprep.subr.bf16.mxu0 %v3042
  %3087 = vmatpush1.bf16.msra.mxu0 %v3041
  %3088 = vmatprep.subr.bf16.mxu0 %v3045
  %3089 = vmatpush1.bf16.msra.mxu0 %v3044
  %3090 = vmatprep.subr.bf16.mxu0 %v3048
  %3091 = vmatpush1.bf16.msra.mxu0 %v3047
  %3092 = vmatprep.subr.bf16.mxu0 %v3051
  %3093 = vmatpush1.bf16.msra.mxu0 %v3050
  %3094 = vmatprep.subr.bf16.mxu0 %v3054
  %3095 = vmatpush1.bf16.msra.mxu0 %v3053
  %3096 = vmatprep.subr.bf16.mxu0 0
  %3097 = vmatpush1.bf16.msra.mxu0 0
  %3098 = vmatprep.subr.bf16.mxu0 0
  %3099 = vmatpush1.bf16.msra.mxu0 0
  %3100 = vmatprep.subr.bf16.mxu0 0
  %3101 = vmatpush1.bf16.msra.mxu0 0
  %3102 = vmatprep.subr.bf16.mxu0 0
  %3103 = vmatpush1.bf16.msra.mxu0 0
  %3104 = vmatprep.subr.bf16.mxu0 0
  %3105 = vmatpush1.bf16.msra.mxu0 0
  %3106 = vmatprep.subr.bf16.mxu0 0
  %3107 = vmatpush1.bf16.msra.mxu0 0
  %3108 = vmatprep.subr.bf16.mxu0 0
  %3109 = vmatpush1.bf16.msra.mxu0 0
  %3110 = vmatprep.subr.bf16.mxu0 0
  %3111 = vmatpush1.bf16.msra.mxu0 0
  %3112 = vmatprep.mubr.bf16.mxu0 0
  %3113 = vmatmul.mubr.bf16.gmra.mrb[0].mxu0 %v2918
  %v3114 = vpop.f32.mrb[0].mxu0
  %v3115 = vadd.f32 0.0, %v3114
  %v3116 = vpop.f32.mrb[0].mxu0
  %v3117 = vadd.f32 0.0, %v3116
  %v3118 = vpop.f32.mrb[0].mxu0
  %v3119 = vpop.f32.mrb[0].mxu0
  %3120 = vdwg.mxu0
  %3121 = vmatprep.subr.bf16.mxu0 0
  %3122 = vmatpush1.bf16.msra.mxu0 %v3034
  %3123 = vmatprep.subr.bf16.mxu0 0
  %3124 = vmatpush1.bf16.msra.mxu0 %v3037
  %3125 = vmatprep.subr.bf16.mxu0 0
  %3126 = vmatpush1.bf16.msra.mxu0 %v3040
  %3127 = vmatprep.subr.bf16.mxu0 0
  %3128 = vmatpush1.bf16.msra.mxu0 %v3043
  %3129 = vmatprep.subr.bf16.mxu0 0
  %3130 = vmatpush1.bf16.msra.mxu0 %v3046
  %3131 = vmatprep.subr.bf16.mxu0 0
  %3132 = vmatpush1.bf16.msra.mxu0 %v3049
  %3133 = vmatprep.subr.bf16.mxu0 0
  %3134 = vmatpush1.bf16.msra.mxu0 %v3052
  %3135 = vmatprep.subr.bf16.mxu0 0
  %3136 = vmatpush1.bf16.msra.mxu0 %v3055
  %3137 = vmatprep.subr.bf16.mxu0 0
  %3138 = vmatpush1.bf16.msra.mxu0 0
  %3139 = vmatprep.subr.bf16.mxu0 0
  %3140 = vmatpush1.bf16.msra.mxu0 0
  %3141 = vmatprep.subr.bf16.mxu0 0
  %3142 = vmatpush1.bf16.msra.mxu0 0
  %3143 = vmatprep.subr.bf16.mxu0 0
  %3144 = vmatpush1.bf16.msra.mxu0 0
  %3145 = vmatprep.subr.bf16.mxu0 0
  %3146 = vmatpush1.bf16.msra.mxu0 0
  %3147 = vmatprep.subr.bf16.mxu0 0
  %3148 = vmatpush1.bf16.msra.mxu0 0
  %3149 = vmatprep.subr.bf16.mxu0 0
  %3150 = vmatpush1.bf16.msra.mxu0 0
  %3151 = vmatprep.subr.bf16.mxu0 0
  %3152 = vmatpush1.bf16.msra.mxu0 0
  %3153 = vmatprep.mubr.bf16.mxu0 0
  %3154 = vmatmul.mubr.bf16.gmra.mrb[0].mxu0 %v2918
  %v3155 = vpop.f32.mrb[0].mxu0
  %v3156 = vadd.f32 0.0, %v3155
  %v3157 = vpop.f32.mrb[0].mxu0
  %v3158 = vpop.f32.mrb[0].mxu0
  %v3159 = vpop.f32.mrb[0].mxu0
  %3160 = vdwg.mxu0
  %v3161 = vld [vmem:[#allocation4] sm:$0xff]
  %v3162 = vld [vmem:[#allocation4 + $0x8] sm:$0xff]
  %v3163 = vld [vmem:[#allocation4 + $0x10] sm:$0xff]
  %v3164 = vadd.f32 %v3161, %v3115
  %v3165 = vxor.u32 %v3164, 2147483648
  %v3166 = vmul.f32 %v3165, 1.442695
  %v3167 = vpow.pop %v3166
  %v3168 = vadd.f32 %v3167, 1.0
  %v3169 = vrcp.pop %v3168
  %v3170 = vmul.f32 1.0, %v3169
  %v3171 = vadd.f32 %v3162, %v3117
  %v3172 = vxor.u32 %v3171, 2147483648
  %v3173 = vmul.f32 %v3172, 1.442695
  %v3174 = vpow.pop %v3173
  %v3175 = vadd.f32 %v3174, 1.0
  %v3176 = vrcp.pop %v3175
  %v3177 = vmul.f32 1.0, %v3176
  %v3178 = vadd.f32 %v3156, %v2914
  %v3179 = vmul.f32 %v3170, %v3178
  %v3180 = vadd.f32 %v3163, %v3179
  %v3181 = vtanh.pop %v3180
  %v3182 = vsub.f32 1.0, %v3177
  %v3183 = vmul.f32 %v3182, %v3181
  %v3184 = vmul.f32 %v3177, %v2917
  %v3185 = vadd.f32 %v3183, %v3184
  %v3186 = vpack.c.bf16 %v3185, %v3185
  %3187 = vmatprep.subr.bf16.mxu0 %v3033
  %3188 = vmatpush1.bf16.msra.mxu0 %v3032
  %3189 = vmatprep.subr.bf16.mxu0 %v3036
  %3190 = vmatpush1.bf16.msra.mxu0 %v3035
  %3191 = vmatprep.subr.bf16.mxu0 %v3039
  %3192 = vmatpush1.bf16.msra.mxu0 %v3038
  %3193 = vmatprep.subr.bf16.mxu0 %v3042
  %3194 = vmatpush1.bf16.msra.mxu0 %v3041
  %3195 = vmatprep.subr.bf16.mxu0 %v3045
  %3196 = vmatpush1.bf16.msra.mxu0 %v3044
  %3197 = vmatprep.subr.bf16.mxu0 %v3048
  %3198 = vmatpush1.bf16.msra.mxu0 %v3047
  %3199 = vmatprep.subr.bf16.mxu0 %v3051
  %3200 = vmatpush1.bf16.msra.mxu0 %v3050
  %3201 = vmatprep.subr.bf16.mxu0 %v3054
  %3202 = vmatpush1.bf16.msra.mxu0 %v3053
  %3203 = vmatprep.subr.bf16.mxu0 0
  %3204 = vmatpush1.bf16.msra.mxu0 0
  %3205 = vmatprep.subr.bf16.mxu0 0
  %3206 = vmatpush1.bf16.msra.mxu0 0
  %3207 = vmatprep.subr.bf16.mxu0 0
  %3208 = vmatpush1.bf16.msra.mxu0 0
  %3209 = vmatprep.subr.bf16.mxu0 0
  %3210 = vmatpush1.bf16.msra.mxu0 0
  %3211 = vmatprep.subr.bf16.mxu0 0
  %3212 = vmatpush1.bf16.msra.mxu0 0
  %3213 = vmatprep.subr.bf16.mxu0 0
  %3214 = vmatpush1.bf16.msra.mxu0 0
  %3215 = vmatprep.subr.bf16.mxu0 0
  %3216 = vmatpush1.bf16.msra.mxu0 0
  %3217 = vmatprep.subr.bf16.mxu0 0
  %3218 = vmatpush1.bf16.msra.mxu0 0
  %3219 = vmatprep.mubr.bf16.mxu0 0
  %3220 = vmatmul.mubr.bf16.gmra.mrb[0].mxu0 %v3186
  %v3221 = vpop.f32.mrb[0].mxu0
  %v3222 = vadd.f32 0.0, %v3221
  %v3223 = vpop.f32.mrb[0].mxu0
  %v3224 = vadd.f32 0.0, %v3223
  %v3225 = vpop.f32.mrb[0].mxu0
  %v3226 = vpop.f32.mrb[0].mxu0
  %3227 = vdwg.mxu0
  %3228 = vmatprep.subr.bf16.mxu0 0
  %3229 = vmatpush1.bf16.msra.mxu0 %v3034
  %3230 = vmatprep.subr.bf16.mxu0 0
  %3231 = vmatpush1.bf16.msra.mxu0 %v3037
  %3232 = vmatprep.subr.bf16.mxu0 0
  %3233 = vmatpush1.bf16.msra.mxu0 %v3040
  %3234 = vmatprep.subr.bf16.mxu0 0
  %3235 = vmatpush1.bf16.msra.mxu0 %v3043
  %3236 = vmatprep.subr.bf16.mxu0 0
  %3237 = vmatpush1.bf16.msra.mxu0 %v3046
  %3238 = vmatprep.subr.bf16.mxu0 0
  %3239 = vmatpush1.bf16.msra.mxu0 %v3049
  %3240 = vmatprep.subr.bf16.mxu0 0
  %3241 = vmatpush1.bf16.msra.mxu0 %v3052
  %3242 = vmatprep.subr.bf16.mxu0 0
  %3243 = vmatpush1.bf16.msra.mxu0 %v3055
  %3244 = vmatprep.subr.bf16.mxu0 0
  %3245 = vmatpush1.bf16.msra.mxu0 0
  %3246 = vmatprep.subr.bf16.mxu0 0
  %3247 = vmatpush1.bf16.msra.mxu0 0
  %3248 = vmatprep.subr.bf16.mxu0 0
  %3249 = vmatpush1.bf16.msra.mxu0 0
  %3250 = vmatprep.subr.bf16.mxu0 0
  %3251 = vmatpush1.bf16.msra.mxu0 0
  %3252 = vmatprep.subr.bf16.mxu0 0
  %3253 = vmatpush1.bf16.msra.mxu0 0
  %3254 = vmatprep.subr.bf16.mxu0 0
  %3255 = vmatpush1.bf16.msra.mxu0 0
  %3256 = vmatprep.subr.bf16.mxu0 0
  %3257 = vmatpush1.bf16.msra.mxu0 0
  %3258 = vmatprep.subr.bf16.mxu0 0
  %3259 = vmatpush1.bf16.msra.mxu0 0
  %3260 = vmatprep.mubr.bf16.mxu0 0
  %3261 = vmatmul.mubr.bf16.gmra.mrb[0].mxu0 %v3186
  %v3262 = vpop.f32.mrb[0].mxu0
  %v3263 = vadd.f32 0.0, %v3262
  %v3264 = vpop.f32.mrb[0].mxu0
  %v3265 = vpop.f32.mrb[0].mxu0
  %v3266 = vpop.f32.mrb[0].mxu0
  %3267 = vdwg.mxu0
  %v3268 = vld [vmem:[%s907] sm:$0xff]
  %v3269 = vld [vmem:[%s907 + $0x8] sm:$0xff]
  %v3270 = vld [vmem:[%s907 + $0x10] sm:$0xff]
  %v3271 = vadd.f32 %v3268, %v3222
  %v3272 = vxor.u32 %v3271, 2147483648
  %v3273 = vmul.f32 %v3272, 1.442695
  %v3274 = vpow.pop %v3273
  %v3275 = vadd.f32 %v3274, 1.0
  %v3276 = vrcp.pop %v3275
  %v3277 = vmul.f32 1.0, %v3276
  %v3278 = vadd.f32 %v3269, %v3224
  %v3279 = vxor.u32 %v3278, 2147483648
  %v3280 = vmul.f32 %v3279, 1.442695
  %v3281 = vpow.pop %v3280
  %v3282 = vadd.f32 %v3281, 1.0
  %v3283 = vrcp.pop %v3282
  %v3284 = vmul.f32 1.0, %v3283
  %v3285 = vadd.f32 %v3263, %v2914
  %v3286 = vmul.f32 %v3277, %v3285
  %v3287 = vadd.f32 %v3270, %v3286
  %v3288 = vtanh.pop %v3287
  %v3289 = vsub.f32 1.0, %v3284
  %v3290 = vmul.f32 %v3289, %v3288
  %v3291 = vmul.f32 %v3284, %v3185
  %v3292 = vadd.f32 %v3290, %v3291
  %v3293 = vpack.c.bf16 %v3292, %v3292
  %3294 = vmatprep.subr.bf16.mxu0 %v3033
  %3295 = vmatpush1.bf16.msra.mxu0 %v3032
  %3296 = vmatprep.subr.bf16.mxu0 %v3036
  %3297 = vmatpush1.bf16.msra.mxu0 %v3035
  %3298 = vmatprep.subr.bf16.mxu0 %v3039
  %3299 = vmatpush1.bf16.msra.mxu0 %v3038
  %3300 = vmatprep.subr.bf16.mxu0 %v3042
  %3301 = vmatpush1.bf16.msra.mxu0 %v3041
  %3302 = vmatprep.subr.bf16.mxu0 %v3045
  %3303 = vmatpush1.bf16.msra.mxu0 %v3044
  %3304 = vmatprep.subr.bf16.mxu0 %v3048
  %3305 = vmatpush1.bf16.msra.mxu0 %v3047
  %3306 = vmatprep.subr.bf16.mxu0 %v3051
  %3307 = vmatpush1.bf16.msra.mxu0 %v3050
  %3308 = vmatprep.subr.bf16.mxu0 %v3054
  %3309 = vmatpush1.bf16.msra.mxu0 %v3053
  %3310 = vmatprep.subr.bf16.mxu0 0
  %3311 = vmatpush1.bf16.msra.mxu0 0
  %3312 = vmatprep.subr.bf16.mxu0 0
  %3313 = vmatpush1.bf16.msra.mxu0 0
  %3314 = vmatprep.subr.bf16.mxu0 0
  %3315 = vmatpush1.bf16.msra.mxu0 0
  %3316 = vmatprep.subr.bf16.mxu0 0
  %3317 = vmatpush1.bf16.msra.mxu0 0
  %3318 = vmatprep.subr.bf16.mxu0 0
  %3319 = vmatpush1.bf16.msra.mxu0 0
  %3320 = vmatprep.subr.bf16.mxu0 0
  %3321 = vmatpush1.bf16.msra.mxu0 0
  %3322 = vmatprep.subr.bf16.mxu0 0
  %3323 = vmatpush1.bf16.msra.mxu0 0
  %3324 = vmatprep.subr.bf16.mxu0 0
  %3325 = vmatpush1.bf16.msra.mxu0 0
  %3326 = vmatprep.mubr.bf16.mxu0 0
  %3327 = vmatmul.mubr.bf16.gmra.mrb[0].mxu0 %v3293
  %v3328 = vpop.f32.mrb[0].mxu0
  %v3329 = vadd.f32 0.0, %v3328
  %v3330 = vpop.f32.mrb[0].mxu0
  %v3331 = vadd.f32 0.0, %v3330
  %v3332 = vpop.f32.mrb[0].mxu0
  %v3333 = vpop.f32.mrb[0].mxu0
  %3334 = vdwg.mxu0
  %3335 = vmatprep.subr.bf16.mxu0 0
  %3336 = vmatpush1.bf16.msra.mxu0 %v3034
  %3337 = vmatprep.subr.bf16.mxu0 0
  %3338 = vmatpush1.bf16.msra.mxu0 %v3037
  %3339 = vmatprep.subr.bf16.mxu0 0
  %3340 = vmatpush1.bf16.msra.mxu0 %v3040
  %3341 = vmatprep.subr.bf16.mxu0 0
  %3342 = vmatpush1.bf16.msra.mxu0 %v3043
  %3343 = vmatprep.subr.bf16.mxu0 0
  %3344 = vmatpush1.bf16.msra.mxu0 %v3046
  %3345 = vmatprep.subr.bf16.mxu0 0
  %3346 = vmatpush1.bf16.msra.mxu0 %v3049
  %3347 = vmatprep.subr.bf16.mxu0 0
  %3348 = vmatpush1.bf16.msra.mxu0 %v3052
  %3349 = vmatprep.subr.bf16.mxu0 0
  %3350 = vmatpush1.bf16.msra.mxu0 %v3055
  %3351 = vmatprep.subr.bf16.mxu0 0
  %3352 = vmatpush1.bf16.msra.mxu0 0
  %3353 = vmatprep.subr.bf16.mxu0 0
  %3354 = vmatpush1.bf16.msra.mxu0 0
  %3355 = vmatprep.subr.bf16.mxu0 0
  %3356 = vmatpush1.bf16.msra.mxu0 0
  %3357 = vmatprep.subr.bf16.mxu0 0
  %3358 = vmatpush1.bf16.msra.mxu0 0
  %3359 = vmatprep.subr.bf16.mxu0 0
  %3360 = vmatpush1.bf16.msra.mxu0 0
  %3361 = vmatprep.subr.bf16.mxu0 0
  %3362 = vmatpush1.bf16.msra.mxu0 0
  %3363 = vmatprep.subr.bf16.mxu0 0
  %3364 = vmatpush1.bf16.msra.mxu0 0
  %3365 = vmatprep.subr.bf16.mxu0 0
  %3366 = vmatpush1.bf16.msra.mxu0 0
  %3367 = vmatprep.mubr.bf16.mxu0 0
  %3368 = vmatmul.mubr.bf16.gmra.mrb[0].mxu0 %v3293
  %v3369 = vpop.f32.mrb[0].mxu0
  %v3370 = vadd.f32 0.0, %v3369
  %v3371 = vpop.f32.mrb[0].mxu0
  %v3372 = vpop.f32.mrb[0].mxu0
  %v3373 = vpop.f32.mrb[0].mxu0
  %3374 = vdwg.mxu0
  %v3375 = vld [vmem:[%s1177] sm:$0xff]
  %v3376 = vld [vmem:[%s1177 + $0x8] sm:$0xff]
  %v3377 = vld [vmem:[%s1177 + $0x10] sm:$0xff]
  %v3378 = vadd.f32 %v3375, %v3329
  %v3379 = vxor.u32 %v3378, 2147483648
  %v3380 = vmul.f32 %v3379, 1.442695
  %v3381 = vpow.pop %v3380
  %v3382 = vadd.f32 %v3381, 1.0
  %v3383 = vrcp.pop %v3382
  %v3384 = vmul.f32 1.0, %v3383
  %v3385 = vadd.f32 %v3376, %v3331
  %v3386 = vxor.u32 %v3385, 2147483648
  %v3387 = vmul.f32 %v3386, 1.442695
  %v3388 = vpow.pop %v3387
  %v3389 = vadd.f32 %v3388, 1.0
  %v3390 = vrcp.pop %v3389
  %v3391 = vmul.f32 1.0, %v3390
  %v3392 = vadd.f32 %v3370, %v2914
  %v3393 = vmul.f32 %v3384, %v3392
  %v3394 = vadd.f32 %v3377, %v3393
  %v3395 = vtanh.pop %v3394
  %v3396 = vsub.f32 1.0, %v3391
  %v3397 = vmul.f32 %v3396, %v3395
  %v3398 = vmul.f32 %v3391, %v3292
  %v3399 = vadd.f32 %v3397, %v3398
  %v3400 = vpack.c.bf16 %v3399, %v3399
  %3401 = vmatprep.subr.bf16.mxu0 %v3033
  %3402 = vmatpush1.bf16.msra.mxu0 %v3032
  %3403 = vmatprep.subr.bf16.mxu0 %v3036
  %3404 = vmatpush1.bf16.msra.mxu0 %v3035
  %3405 = vmatprep.subr.bf16.mxu0 %v3039
  %3406 = vmatpush1.bf16.msra.mxu0 %v3038
  %3407 = vmatprep.subr.bf16.mxu0 %v3042
  %3408 = vmatpush1.bf16.msra.mxu0 %v3041
  %3409 = vmatprep.subr.bf16.mxu0 %v3045
  %3410 = vmatpush1.bf16.msra.mxu0 %v3044
  %3411 = vmatprep.subr.bf16.mxu0 %v3048
  %3412 = vmatpush1.bf16.msra.mxu0 %v3047
  %3413 = vmatprep.subr.bf16.mxu0 %v3051
  %3414 = vmatpush1.bf16.msra.mxu0 %v3050
  %3415 = vmatprep.subr.bf16.mxu0 %v3054
  %3416 = vmatpush1.bf16.msra.mxu0 %v3053
  %3417 = vmatprep.subr.bf16.mxu0 0
  %3418 = vmatpush1.bf16.msra.mxu0 0
  %3419 = vmatprep.subr.bf16.mxu0 0
  %3420 = vmatpush1.bf16.msra.mxu0 0
  %3421 = vmatprep.subr.bf16.mxu0 0
  %3422 = vmatpush1.bf16.msra.mxu0 0
  %3423 = vmatprep.subr.bf16.mxu0 0
  %3424 = vmatpush1.bf16.msra.mxu0 0
  %3425 = vmatprep.subr.bf16.mxu0 0
  %3426 = vmatpush1.bf16.msra.mxu0 0
  %3427 = vmatprep.subr.bf16.mxu0 0
  %3428 = vmatpush1.bf16.msra.mxu0 0
  %3429 = vmatprep.subr.bf16.mxu0 0
  %3430 = vmatpush1.bf16.msra.mxu0 0
  %3431 = vmatprep.subr.bf16.mxu0 0
  %3432 = vmatpush1.bf16.msra.mxu0 0
  %3433 = vmatprep.mubr.bf16.mxu0 0
  %3434 = vmatmul.mubr.bf16.gmra.mrb[0].mxu0 %v3400
  %v3435 = vpop.f32.mrb[0].mxu0
  %v3436 = vadd.f32 0.0, %v3435
  %v3437 = vpop.f32.mrb[0].mxu0
  %v3438 = vadd.f32 0.0, %v3437
  %v3439 = vpop.f32.mrb[0].mxu0
  %v3440 = vpop.f32.mrb[0].mxu0
  %3441 = vdwg.mxu0
  %3442 = vmatprep.subr.bf16.mxu0 0
  %3443 = vmatpush1.bf16.msra.mxu0 %v3034
  %3444 = vmatprep.subr.bf16.mxu0 0
  %3445 = vmatpush1.bf16.msra.mxu0 %v3037
  %3446 = vmatprep.subr.bf16.mxu0 0
  %3447 = vmatpush1.bf16.msra.mxu0 %v3040
  %3448 = vmatprep.subr.bf16.mxu0 0
  %3449 = vmatpush1.bf16.msra.mxu0 %v3043
  %3450 = vmatprep.subr.bf16.mxu0 0
  %3451 = vmatpush1.bf16.msra.mxu0 %v3046
  %3452 = vmatprep.subr.bf16.mxu0 0
  %3453 = vmatpush1.bf16.msra.mxu0 %v3049
  %3454 = vmatprep.subr.bf16.mxu0 0
  %3455 = vmatpush1.bf16.msra.mxu0 %v3052
  %3456 = vmatprep.subr.bf16.mxu0 0
  %3457 = vmatpush1.bf16.msra.mxu0 %v3055
  %3458 = vmatprep.subr.bf16.mxu0 0
  %3459 = vmatpush1.bf16.msra.mxu0 0
  %3460 = vmatprep.subr.bf16.mxu0 0
  %3461 = vmatpush1.bf16.msra.mxu0 0
  %3462 = vmatprep.subr.bf16.mxu0 0
  %3463 = vmatpush1.bf16.msra.mxu0 0
  %3464 = vmatprep.subr.bf16.mxu0 0
  %3465 = vmatpush1.bf16.msra.mxu0 0
  %3466 = vmatprep.subr.bf16.mxu0 0
  %3467 = vmatpush1.bf16.msra.mxu0 0
  %3468 = vmatprep.subr.bf16.mxu0 0
  %3469 = vmatpush1.bf16.msra.mxu0 0
  %3470 = vmatprep.subr.bf16.mxu0 0
  %3471 = vmatpush1.bf16.msra.mxu0 0
  %3472 = vmatprep.subr.bf16.mxu0 0
  %3473 = vmatpush1.bf16.msra.mxu0 0
  %3474 = vmatprep.mubr.bf16.mxu0 0
  %3475 = vmatmul.mubr.bf16.gmra.mrb[0].mxu0 %v3400
  %v3476 = vpop.f32.mrb[0].mxu0
  %v3477 = vadd.f32 0.0, %v3476
  %v3478 = vpop.f32.mrb[0].mxu0
  %v3479 = vpop.f32.mrb[0].mxu0
  %v3480 = vpop.f32.mrb[0].mxu0
  %3481 = vdwg.mxu0
  %v3482 = vld [vmem:[%s1447] sm:$0xff]
  %v3483 = vld [vmem:[%s1447 + $0x8] sm:$0xff]
  %v3484 = vld [vmem:[%s1447 + $0x10] sm:$0xff]
  %v3485 = vadd.f32 %v3482, %v3436
  %v3486 = vxor.u32 %v3485, 2147483648
  %v3487 = vmul.f32 %v3486, 1.442695
  %v3488 = vpow.pop %v3487
  %v3489 = vadd.f32 %v3488, 1.0
  %v3490 = vrcp.pop %v3489
  %v3491 = vmul.f32 1.0, %v3490
  %v3492 = vadd.f32 %v3483, %v3438
  %v3493 = vxor.u32 %v3492, 2147483648
  %v3494 = vmul.f32 %v3493, 1.442695
  %v3495 = vpow.pop %v3494
  %v3496 = vadd.f32 %v3495, 1.0
  %v3497 = vrcp.pop %v3496
  %v3498 = vmul.f32 1.0, %v3497
  %v3499 = vadd.f32 %v3477, %v2914
  %v3500 = vmul.f32 %v3491, %v3499
  %v3501 = vadd.f32 %v3484, %v3500
  %v3502 = vtanh.pop %v3501
  %v3503 = vsub.f32 1.0, %v3498
  %v3504 = vmul.f32 %v3503, %v3502
  %v3505 = vmul.f32 %v3498, %v3399
  %v3506 = vadd.f32 %v3504, %v3505
  %v3507 = vpack.c.bf16 %v3506, %v3506
  %3508 = vmatprep.subr.bf16.mxu0 %v3033
  %3509 = vmatpush1.bf16.msra.mxu0 %v3032
  %3510 = vmatprep.subr.bf16.mxu0 %v3036
  %3511 = vmatpush1.bf16.msra.mxu0 %v3035
  %3512 = vmatprep.subr.bf16.mxu0 %v3039
  %3513 = vmatpush1.bf16.msra.mxu0 %v3038
  %3514 = vmatprep.subr.bf16.mxu0 %v3042
  %3515 = vmatpush1.bf16.msra.mxu0 %v3041
  %3516 = vmatprep.subr.bf16.mxu0 %v3045
  %3517 = vmatpush1.bf16.msra.mxu0 %v3044
  %3518 = vmatprep.subr.bf16.mxu0 %v3048
  %3519 = vmatpush1.bf16.msra.mxu0 %v3047
  %3520 = vmatprep.subr.bf16.mxu0 %v3051
  %3521 = vmatpush1.bf16.msra.mxu0 %v3050
  %3522 = vmatprep.subr.bf16.mxu0 %v3054
  %3523 = vmatpush1.bf16.msra.mxu0 %v3053
  %3524 = vmatprep.subr.bf16.mxu0 0
  %3525 = vmatpush1.bf16.msra.mxu0 0
  %3526 = vmatprep.subr.bf16.mxu0 0
  %3527 = vmatpush1.bf16.msra.mxu0 0
  %3528 = vmatprep.subr.bf16.mxu0 0
  %3529 = vmatpush1.bf16.msra.mxu0 0
  %3530 = vmatprep.subr.bf16.mxu0 0
  %3531 = vmatpush1.bf16.msra.mxu0 0
  %3532 = vmatprep.subr.bf16.mxu0 0
  %3533 = vmatpush1.bf16.msra.mxu0 0
  %3534 = vmatprep.subr.bf16.mxu0 0
  %3535 = vmatpush1.bf16.msra.mxu0 0
  %3536 = vmatprep.subr.bf16.mxu0 0
  %3537 = vmatpush1.bf16.msra.mxu0 0
  %3538 = vmatprep.subr.bf16.mxu0 0
  %3539 = vmatpush1.bf16.msra.mxu0 0
  %3540 = vmatprep.mubr.bf16.mxu0 0
  %3541 = vmatmul.mubr.bf16.gmra.mrb[0].mxu0 %v3507
  %v3542 = vpop.f32.mrb[0].mxu0
  %v3543 = vadd.f32 0.0, %v3542
  %v3544 = vpop.f32.mrb[0].mxu0
  %v3545 = vadd.f32 0.0, %v3544
  %v3546 = vpop.f32.mrb[0].mxu0
  %v3547 = vpop.f32.mrb[0].mxu0
  %3548 = vdwg.mxu0
  %3549 = vmatprep.subr.bf16.mxu0 0
  %3550 = vmatpush1.bf16.msra.mxu0 %v3034
  %3551 = vmatprep.subr.bf16.mxu0 0
  %3552 = vmatpush1.bf16.msra.mxu0 %v3037
  %3553 = vmatprep.subr.bf16.mxu0 0
  %3554 = vmatpush1.bf16.msra.mxu0 %v3040
  %3555 = vmatprep.subr.bf16.mxu0 0
  %3556 = vmatpush1.bf16.msra.mxu0 %v3043
  %3557 = vmatprep.subr.bf16.mxu0 0
  %3558 = vmatpush1.bf16.msra.mxu0 %v3046
  %3559 = vmatprep.subr.bf16.mxu0 0
  %3560 = vmatpush1.bf16.msra.mxu0 %v3049
  %3561 = vmatprep.subr.bf16.mxu0 0
  %3562 = vmatpush1.bf16.msra.mxu0 %v3052
  %3563 = vmatprep.subr.bf16.mxu0 0
  %3564 = vmatpush1.bf16.msra.mxu0 %v3055
  %3565 = vmatprep.subr.bf16.mxu0 0
  %3566 = vmatpush1.bf16.msra.mxu0 0
  %3567 = vmatprep.subr.bf16.mxu0 0
  %3568 = vmatpush1.bf16.msra.mxu0 0
  %3569 = vmatprep.subr.bf16.mxu0 0
  %3570 = vmatpush1.bf16.msra.mxu0 0
  %3571 = vmatprep.subr.bf16.mxu0 0
  %3572 = vmatpush1.bf16.msra.mxu0 0
  %3573 = vmatprep.subr.bf16.mxu0 0
  %3574 = vmatpush1.bf16.msra.mxu0 0
  %3575 = vmatprep.subr.bf16.mxu0 0
  %3576 = vmatpush1.bf16.msra.mxu0 0
  %3577 = vmatprep.subr.bf16.mxu0 0
  %3578 = vmatpush1.bf16.msra.mxu0 0
  %3579 = vmatprep.subr.bf16.mxu0 0
  %3580 = vmatpush1.bf16.msra.mxu0 0
  %3581 = vmatprep.mubr.bf16.mxu0 0
  %3582 = vmatmul.mubr.bf16.gmra.mrb[0].mxu0 %v3507
  %v3583 = vpop.f32.mrb[0].mxu0
  %v3584 = vadd.f32 0.0, %v3583
  %v3585 = vpop.f32.mrb[0].mxu0
  %v3586 = vpop.f32.mrb[0].mxu0
  %v3587 = vpop.f32.mrb[0].mxu0
  %3588 = vdwg.mxu0
  %v3589 = vld [vmem:[%s1717] sm:$0xff]
  %v3590 = vld [vmem:[%s1717 + $0x8] sm:$0xff]
  %v3591 = vld [vmem:[%s1717 + $0x10] sm:$0xff]
  %v3592 = vadd.f32 %v3589, %v3543
  %v3593 = vxor.u32 %v3592, 2147483648
  %v3594 = vmul.f32 %v3593, 1.442695
  %v3595 = vpow.pop %v3594
  %v3596 = vadd.f32 %v3595, 1.0
  %v3597 = vrcp.pop %v3596
  %v3598 = vmul.f32 1.0, %v3597
  %v3599 = vadd.f32 %v3590, %v3545
  %v3600 = vxor.u32 %v3599, 2147483648
  %v3601 = vmul.f32 %v3600, 1.442695
  %v3602 = vpow.pop %v3601
  %v3603 = vadd.f32 %v3602, 1.0
  %v3604 = vrcp.pop %v3603
  %v3605 = vmul.f32 1.0, %v3604
  %v3606 = vadd.f32 %v3584, %v2914
  %v3607 = vmul.f32 %v3598, %v3606
  %v3608 = vadd.f32 %v3591, %v3607
  %v3609 = vtanh.pop %v3608
  %v3610 = vsub.f32 1.0, %v3605
  %v3611 = vmul.f32 %v3610, %v3609
  %v3612 = vmul.f32 %v3605, %v3506
  %v3613 = vadd.f32 %v3611, %v3612
  %v3614 = vpack.c.bf16 %v3613, %v3613
  %3615 = vmatprep.subr.bf16.mxu0 %v3033
  %3616 = vmatpush1.bf16.msra.mxu0 %v3032
  %3617 = vmatprep.subr.bf16.mxu0 %v3036
  %3618 = vmatpush1.bf16.msra.mxu0 %v3035
  %3619 = vmatprep.subr.bf16.mxu0 %v3039
  %3620 = vmatpush1.bf16.msra.mxu0 %v3038
  %3621 = vmatprep.subr.bf16.mxu0 %v3042
  %3622 = vmatpush1.bf16.msra.mxu0 %v3041
  %3623 = vmatprep.subr.bf16.mxu0 %v3045
  %3624 = vmatpush1.bf16.msra.mxu0 %v3044
  %3625 = vmatprep.subr.bf16.mxu0 %v3048
  %3626 = vmatpush1.bf16.msra.mxu0 %v3047
  %3627 = vmatprep.subr.bf16.mxu0 %v3051
  %3628 = vmatpush1.bf16.msra.mxu0 %v3050
  %3629 = vmatprep.subr.bf16.mxu0 %v3054
  %3630 = vmatpush1.bf16.msra.mxu0 %v3053
  %3631 = vmatprep.subr.bf16.mxu0 0
  %3632 = vmatpush1.bf16.msra.mxu0 0
  %3633 = vmatprep.subr.bf16.mxu0 0
  %3634 = vmatpush1.bf16.msra.mxu0 0
  %3635 = vmatprep.subr.bf16.mxu0 0
  %3636 = vmatpush1.bf16.msra.mxu0 0
  %3637 = vmatprep.subr.bf16.mxu0 0
  %3638 = vmatpush1.bf16.msra.mxu0 0
  %3639 = vmatprep.subr.bf16.mxu0 0
  %3640 = vmatpush1.bf16.msra.mxu0 0
  %3641 = vmatprep.subr.bf16.mxu0 0
  %3642 = vmatpush1.bf16.msra.mxu0 0
  %3643 = vmatprep.subr.bf16.mxu0 0
  %3644 = vmatpush1.bf16.msra.mxu0 0
  %3645 = vmatprep.subr.bf16.mxu0 0
  %3646 = vmatpush1.bf16.msra.mxu0 0
  %3647 = vmatprep.mubr.bf16.mxu0 0
  %3648 = vmatmul.mubr.bf16.gmra.mrb[0].mxu0 %v3614
  %v3649 = vpop.f32.mrb[0].mxu0
  %v3650 = vadd.f32 0.0, %v3649
  %v3651 = vpop.f32.mrb[0].mxu0
  %v3652 = vadd.f32 0.0, %v3651
  %v3653 = vpop.f32.mrb[0].mxu0
  %v3654 = vpop.f32.mrb[0].mxu0
  %3655 = vdwg.mxu0
  %3656 = vmatprep.subr.bf16.mxu0 0
  %3657 = vmatpush1.bf16.msra.mxu0 %v3034
  %3658 = vmatprep.subr.bf16.mxu0 0
  %3659 = vmatpush1.bf16.msra.mxu0 %v3037
  %3660 = vmatprep.subr.bf16.mxu0 0
  %3661 = vmatpush1.bf16.msra.mxu0 %v3040
  %3662 = vmatprep.subr.bf16.mxu0 0
  %3663 = vmatpush1.bf16.msra.mxu0 %v3043
  %3664 = vmatprep.subr.bf16.mxu0 0
  %3665 = vmatpush1.bf16.msra.mxu0 %v3046
  %3666 = vmatprep.subr.bf16.mxu0 0
  %3667 = vmatpush1.bf16.msra.mxu0 %v3049
  %3668 = vmatprep.subr.bf16.mxu0 0
  %3669 = vmatpush1.bf16.msra.mxu0 %v3052
  %3670 = vmatprep.subr.bf16.mxu0 0
  %3671 = vmatpush1.bf16.msra.mxu0 %v3055
  %3672 = vmatprep.subr.bf16.mxu0 0
  %3673 = vmatpush1.bf16.msra.mxu0 0
  %3674 = vmatprep.subr.bf16.mxu0 0
  %3675 = vmatpush1.bf16.msra.mxu0 0
  %3676 = vmatprep.subr.bf16.mxu0 0
  %3677 = vmatpush1.bf16.msra.mxu0 0
  %3678 = vmatprep.subr.bf16.mxu0 0
  %3679 = vmatpush1.bf16.msra.mxu0 0
  %3680 = vmatprep.subr.bf16.mxu0 0
  %3681 = vmatpush1.bf16.msra.mxu0 0
  %3682 = vmatprep.subr.bf16.mxu0 0
  %3683 = vmatpush1.bf16.msra.mxu0 0
  %3684 = vmatprep.subr.bf16.mxu0 0
  %3685 = vmatpush1.bf16.msra.mxu0 0
  %3686 = vmatprep.subr.bf16.mxu0 0
  %3687 = vmatpush1.bf16.msra.mxu0 0
  %3688 = vmatprep.mubr.bf16.mxu0 0
  %3689 = vmatmul.mubr.bf16.gmra.mrb[0].mxu0 %v3614
  %v3690 = vpop.f32.mrb[0].mxu0
  %v3691 = vadd.f32 0.0, %v3690
  %v3692 = vpop.f32.mrb[0].mxu0
  %v3693 = vpop.f32.mrb[0].mxu0
  %v3694 = vpop.f32.mrb[0].mxu0
  %3695 = vdwg.mxu0
  %v3696 = vld [vmem:[%s1987] sm:$0xff]
  %v3697 = vld [vmem:[%s1987 + $0x8] sm:$0xff]
  %v3698 = vld [vmem:[%s1987 + $0x10] sm:$0xff]
  %v3699 = vadd.f32 %v3696, %v3650
  %v3700 = vxor.u32 %v3699, 2147483648
  %v3701 = vmul.f32 %v3700, 1.442695
  %v3702 = vpow.pop %v3701
  %v3703 = vadd.f32 %v3702, 1.0
  %v3704 = vrcp.pop %v3703
  %v3705 = vmul.f32 1.0, %v3704
  %v3706 = vadd.f32 %v3697, %v3652
  %v3707 = vxor.u32 %v3706, 2147483648
  %v3708 = vmul.f32 %v3707, 1.442695
  %v3709 = vpow.pop %v3708
  %v3710 = vadd.f32 %v3709, 1.0
  %v3711 = vrcp.pop %v3710
  %v3712 = vmul.f32 1.0, %v3711
  %v3713 = vadd.f32 %v3691, %v2914
  %v3714 = vmul.f32 %v3705, %v3713
  %v3715 = vadd.f32 %v3698, %v3714
  %v3716 = vtanh.pop %v3715
  %v3717 = vsub.f32 1.0, %v3712
  %v3718 = vmul.f32 %v3717, %v3716
  %v3719 = vmul.f32 %v3712, %v3613
  %v3720 = vadd.f32 %v3718, %v3719
  %v3721 = vpack.c.bf16 %v3720, %v3720
  %3722 = vmatprep.subr.bf16.mxu0 %v3033
  %3723 = vmatpush1.bf16.msra.mxu0 %v3032
  %3724 = vmatprep.subr.bf16.mxu0 %v3036
  %3725 = vmatpush1.bf16.msra.mxu0 %v3035
  %3726 = vmatprep.subr.bf16.mxu0 %v3039
  %3727 = vmatpush1.bf16.msra.mxu0 %v3038
  %3728 = vmatprep.subr.bf16.mxu0 %v3042
  %3729 = vmatpush1.bf16.msra.mxu0 %v3041
  %3730 = vmatprep.subr.bf16.mxu0 %v3045
  %3731 = vmatpush1.bf16.msra.mxu0 %v3044
  %3732 = vmatprep.subr.bf16.mxu0 %v3048
  %3733 = vmatpush1.bf16.msra.mxu0 %v3047
  %3734 = vmatprep.subr.bf16.mxu0 %v3051
  %3735 = vmatpush1.bf16.msra.mxu0 %v3050
  %3736 = vmatprep.subr.bf16.mxu0 %v3054
  %3737 = vmatpush1.bf16.msra.mxu0 %v3053
  %3738 = vmatprep.subr.bf16.mxu0 0
  %3739 = vmatpush1.bf16.msra.mxu0 0
  %3740 = vmatprep.subr.bf16.mxu0 0
  %3741 = vmatpush1.bf16.msra.mxu0 0
  %3742 = vmatprep.subr.bf16.mxu0 0
  %3743 = vmatpush1.bf16.msra.mxu0 0
  %3744 = vmatprep.subr.bf16.mxu0 0
  %3745 = vmatpush1.bf16.msra.mxu0 0
  %3746 = vmatprep.subr.bf16.mxu0 0
  %3747 = vmatpush1.bf16.msra.mxu0 0
  %3748 = vmatprep.subr.bf16.mxu0 0
  %3749 = vmatpush1.bf16.msra.mxu0 0
  %3750 = vmatprep.subr.bf16.mxu0 0
  %3751 = vmatpush1.bf16.msra.mxu0 0
  %3752 = vmatprep.subr.bf16.mxu0 0
  %3753 = vmatpush1.bf16.msra.mxu0 0
  %3754 = vmatprep.mubr.bf16.mxu0 0
  %3755 = vmatmul.mubr.bf16.gmra.mrb[0].mxu0 %v3721
  %v3756 = vpop.f32.mrb[0].mxu0
  %v3757 = vadd.f32 0.0, %v3756
  %v3758 = vpop.f32.mrb[0].mxu0
  %v3759 = vadd.f32 0.0, %v3758
  %v3760 = vpop.f32.mrb[0].mxu0
  %v3761 = vpop.f32.mrb[0].mxu0
  %3762 = vdwg.mxu0
  %3763 = vmatprep.subr.bf16.mxu0 0
  %3764 = vmatpush1.bf16.msra.mxu0 %v3034
  %3765 = vmatprep.subr.bf16.mxu0 0
  %3766 = vmatpush1.bf16.msra.mxu0 %v3037
  %3767 = vmatprep.subr.bf16.mxu0 0
  %3768 = vmatpush1.bf16.msra.mxu0 %v3040
  %3769 = vmatprep.subr.bf16.mxu0 0
  %3770 = vmatpush1.bf16.msra.mxu0 %v3043
  %3771 = vmatprep.subr.bf16.mxu0 0
  %3772 = vmatpush1.bf16.msra.mxu0 %v3046
  %3773 = vmatprep.subr.bf16.mxu0 0
  %3774 = vmatpush1.bf16.msra.mxu0 %v3049
  %3775 = vmatprep.subr.bf16.mxu0 0
  %3776 = vmatpush1.bf16.msra.mxu0 %v3052
  %3777 = vmatprep.subr.bf16.mxu0 0
  %3778 = vmatpush1.bf16.msra.mxu0 %v3055
  %3779 = vmatprep.subr.bf16.mxu0 0
  %3780 = vmatpush1.bf16.msra.mxu0 0
  %3781 = vmatprep.subr.bf16.mxu0 0
  %3782 = vmatpush1.bf16.msra.mxu0 0
  %3783 = vmatprep.subr.bf16.mxu0 0
  %3784 = vmatpush1.bf16.msra.mxu0 0
  %3785 = vmatprep.subr.bf16.mxu0 0
  %3786 = vmatpush1.bf16.msra.mxu0 0
  %3787 = vmatprep.subr.bf16.mxu0 0
  %3788 = vmatpush1.bf16.msra.mxu0 0
  %3789 = vmatprep.subr.bf16.mxu0 0
  %3790 = vmatpush1.bf16.msra.mxu0 0
  %3791 = vmatprep.subr.bf16.mxu0 0
  %3792 = vmatpush1.bf16.msra.mxu0 0
  %3793 = vmatprep.subr.bf16.mxu0 0
  %3794 = vmatpush1.bf16.msra.mxu0 0
  %3795 = vmatprep.mubr.bf16.mxu0 0
  %3796 = vmatmul.mubr.bf16.gmra.mrb[0].mxu0 %v3721
  %v3797 = vpop.f32.mrb[0].mxu0
  %v3798 = vadd.f32 0.0, %v3797
  %v3799 = vpop.f32.mrb[0].mxu0
  %v3800 = vpop.f32.mrb[0].mxu0
  %v3801 = vpop.f32.mrb[0].mxu0
  %3802 = vdwg.mxu0
  %v3803 = vld [vmem:[%s2257] sm:$0xff]
  %v3804 = vld [vmem:[%s2257 + $0x8] sm:$0xff]
  %v3805 = vld [vmem:[%s2257 + $0x10] sm:$0xff]
  %v3806 = vadd.f32 %v3803, %v3757
  %v3807 = vxor.u32 %v3806, 2147483648
  %v3808 = vmul.f32 %v3807, 1.442695
  %v3809 = vpow.pop %v3808
  %v3810 = vadd.f32 %v3809, 1.0
  %v3811 = vrcp.pop %v3810
  %v3812 = vmul.f32 1.0, %v3811
  %v3813 = vadd.f32 %v3804, %v3759
  %v3814 = vxor.u32 %v3813, 2147483648
  %v3815 = vmul.f32 %v3814, 1.442695
  %v3816 = vpow.pop %v3815
  %v3817 = vadd.f32 %v3816, 1.0
  %v3818 = vrcp.pop %v3817
  %v3819 = vmul.f32 1.0, %v3818
  %v3820 = vadd.f32 %v3798, %v2914
  %v3821 = vmul.f32 %v3812, %v3820
  %v3822 = vadd.f32 %v3805, %v3821
  %v3823 = vtanh.pop %v3822
  %v3824 = vsub.f32 1.0, %v3819
  %v3825 = vmul.f32 %v3824, %v3823
  %v3826 = vmul.f32 %v3819, %v3720
  %v3827 = vadd.f32 %v3825, %v3826
  %v3828 = vpack.c.bf16 %v3827, %v3827
  %3829 = vmatprep.subr.bf16.mxu0 %v3033
  %3830 = vmatpush1.bf16.msra.mxu0 %v3032
  %3831 = vmatprep.subr.bf16.mxu0 %v3036
  %3832 = vmatpush1.bf16.msra.mxu0 %v3035
  %3833 = vmatprep.subr.bf16.mxu0 %v3039
  %3834 = vmatpush1.bf16.msra.mxu0 %v3038
  %3835 = vmatprep.subr.bf16.mxu0 %v3042
  %3836 = vmatpush1.bf16.msra.mxu0 %v3041
  %3837 = vmatprep.subr.bf16.mxu0 %v3045
  %3838 = vmatpush1.bf16.msra.mxu0 %v3044
  %3839 = vmatprep.subr.bf16.mxu0 %v3048
  %3840 = vmatpush1.bf16.msra.mxu0 %v3047
  %3841 = vmatprep.subr.bf16.mxu0 %v3051
  %3842 = vmatpush1.bf16.msra.mxu0 %v3050
  %3843 = vmatprep.subr.bf16.mxu0 %v3054
  %3844 = vmatpush1.bf16.msra.mxu0 %v3053
  %3845 = vmatprep.subr.bf16.mxu0 0
  %3846 = vmatpush1.bf16.msra.mxu0 0
  %3847 = vmatprep.subr.bf16.mxu0 0
  %3848 = vmatpush1.bf16.msra.mxu0 0
  %3849 = vmatprep.subr.bf16.mxu0 0
  %3850 = vmatpush1.bf16.msra.mxu0 0
  %3851 = vmatprep.subr.bf16.mxu0 0
  %3852 = vmatpush1.bf16.msra.mxu0 0
  %3853 = vmatprep.subr.bf16.mxu0 0
  %3854 = vmatpush1.bf16.msra.mxu0 0
  %3855 = vmatprep.subr.bf16.mxu0 0
  %3856 = vmatpush1.bf16.msra.mxu0 0
  %3857 = vmatprep.subr.bf16.mxu0 0
  %3858 = vmatpush1.bf16.msra.mxu0 0
  %3859 = vmatprep.subr.bf16.mxu0 0
  %3860 = vmatpush1.bf16.msra.mxu0 0
  %3861 = vmatprep.mubr.bf16.mxu0 0
  %3862 = vmatmul.mubr.bf16.gmra.mrb[0].mxu0 %v3828
  %v3863 = vpop.f32.mrb[0].mxu0
  %v3864 = vadd.f32 0.0, %v3863
  %v3865 = vpop.f32.mrb[0].mxu0
  %v3866 = vadd.f32 0.0, %v3865
  %v3867 = vpop.f32.mrb[0].mxu0
  %v3868 = vpop.f32.mrb[0].mxu0
  %3869 = vdwg.mxu0
  %3870 = vmatprep.subr.bf16.mxu0 0
  %3871 = vmatpush1.bf16.msra.mxu0 %v3034
  %3872 = vmatprep.subr.bf16.mxu0 0
  %3873 = vmatpush1.bf16.msra.mxu0 %v3037
  %3874 = vmatprep.subr.bf16.mxu0 0
  %3875 = vmatpush1.bf16.msra.mxu0 %v3040
  %3876 = vmatprep.subr.bf16.mxu0 0
  %3877 = vmatpush1.bf16.msra.mxu0 %v3043
  %3878 = vmatprep.subr.bf16.mxu0 0
  %3879 = vmatpush1.bf16.msra.mxu0 %v3046
  %3880 = vmatprep.subr.bf16.mxu0 0
  %3881 = vmatpush1.bf16.msra.mxu0 %v3049
  %3882 = vmatprep.subr.bf16.mxu0 0
  %3883 = vmatpush1.bf16.msra.mxu0 %v3052
  %3884 = vmatprep.subr.bf16.mxu0 0
  %3885 = vmatpush1.bf16.msra.mxu0 %v3055
  %3886 = vmatprep.subr.bf16.mxu0 0
  %3887 = vmatpush1.bf16.msra.mxu0 0
  %3888 = vmatprep.subr.bf16.mxu0 0
  %3889 = vmatpush1.bf16.msra.mxu0 0
  %3890 = vmatprep.subr.bf16.mxu0 0
  %3891 = vmatpush1.bf16.msra.mxu0 0
  %3892 = vmatprep.subr.bf16.mxu0 0
  %3893 = vmatpush1.bf16.msra.mxu0 0
  %3894 = vmatprep.subr.bf16.mxu0 0
  %3895 = vmatpush1.bf16.msra.mxu0 0
  %3896 = vmatprep.subr.bf16.mxu0 0
  %3897 = vmatpush1.bf16.msra.mxu0 0
  %3898 = vmatprep.subr.bf16.mxu0 0
  %3899 = vmatpush1.bf16.msra.mxu0 0
  %3900 = vmatprep.subr.bf16.mxu0 0
  %3901 = vmatpush1.bf16.msra.mxu0 0
  %3902 = vmatprep.mubr.bf16.mxu0 0
  %3903 = vmatmul.mubr.bf16.gmra.mrb[0].mxu0 %v3828
  %v3904 = vpop.f32.mrb[0].mxu0
  %v3905 = vadd.f32 0.0, %v3904
  %v3906 = vpop.f32.mrb[0].mxu0
  %v3907 = vpop.f32.mrb[0].mxu0
  %v3908 = vpop.f32.mrb[0].mxu0
  %3909 = vdwg.mxu0
  %v3910 = vld [vmem:[%s2527] sm:$0xff]
  %v3911 = vld [vmem:[%s2527 + $0x8] sm:$0xff]
  %v3912 = vld [vmem:[%s2527 + $0x10] sm:$0xff]
  %v3913 = vadd.f32 %v3910, %v3864
  %v3914 = vxor.u32 %v3913, 2147483648
  %v3915 = vmul.f32 %v3914, 1.442695
  %v3916 = vpow.pop %v3915
  %v3917 = vadd.f32 %v3916, 1.0
  %v3918 = vrcp.pop %v3917
  %v3919 = vmul.f32 1.0, %v3918
  %v3920 = vadd.f32 %v3911, %v3866
  %v3921 = vxor.u32 %v3920, 2147483648
  %v3922 = vmul.f32 %v3921, 1.442695
  %v3923 = vpow.pop %v3922
  %v3924 = vadd.f32 %v3923, 1.0
  %v3925 = vrcp.pop %v3924
  %v3926 = vmul.f32 1.0, %v3925
  %v3927 = vadd.f32 %v3905, %v2914
  %v3928 = vmul.f32 %v3919, %v3927
  %v3929 = vadd.f32 %v3912, %v3928
  %v3930 = vtanh.pop %v3929
  %v3931 = vsub.f32 1.0, %v3926
  %v3932 = vmul.f32 %v3931, %v3930
  %v3933 = vmul.f32 %v3926, %v3827
  %v3934 = vadd.f32 %v3932, %v3933
  %3935 = vst [vmem:[%s2916] sm:$0xff] %v3934
  // Predicated region
  $region38: #{gru_model_forward.1} parent=0 // pred_check
    %p3936 = pneg %p32
  $region39: #{gru_model_forward.1} parent=0 // pred_check_branch
    %3938 = sbr.rel (%p3936) target = $region41
  $region40: #{gru_model_forward.1} parent=0 // pred_region
    %v3939 = vld [vmem:[%s2916] sm:$0xff]
    %v3940 = vld [vmem:[%s6] sm:$0x1]
    %v3942 = vlaneseq
    %v3943 = vshrl.u32 %v3942, 7
    %v3944 = vsub.s32 0, %v3943
    %v3945 = vrot.slane %v3940, %v3944
    %v3947 = vmul.f32 %v3939, %v3945
    %3948 = vadd.xlane.f32.xlu0 %v3947
    %v3949 = vpop.xlane.xlu0 %3948
    %v3950 = vld [vmem:[#allocation5] sm:$0x1]
    %v3952 = vlaneseq
    %v3953 = vshrl.u32 %v3952, 7
    %v3954 = vsub.s32 0, %v3953
    %v3955 = vrot.slane %v3950, %v3954
    %v3957 = vadd.f32 %v3949, %v3955
    %vm3958 = vcmask 7168
    %3959 = vst.msk [vmem:[%s8] sm:$0xff] %vm3958, %v3957
  $region41: #{gru_model_forward.1} parent=0 // pred_fallthru
    _
  // Predicated region
  $region42: #{gru_model_forward.1} parent=0 // pred_check
    _
  $region43: #{gru_model_forward.1} parent=0 // pred_check_branch
    %3961 = sbr.rel (0) target = $region45
  $region44: #{gru_model_forward.1} parent=0 // pred_region
    _
  $region45: #{gru_model_forward.1} parent=0 // pred_fallthru
    _
  // Predicated region
  $region46: #{gru_model_forward.1} parent=0 // pred_check
    _
  $region47: #{gru_model_forward.1} parent=0 // pred_check_branch
    %3963 = sbr.rel (0) target = $region49
  $region48: #{gru_model_forward.1} parent=0 // pred_region
    _
  $region49: #{gru_model_forward.1} parent=0 // pred_fallthru
    _

</llo_original>
